<compile_context>
chip_gen: v7x
topology: tpu7x:2x2x1
jax: 0.10.0
libtpu: 0.0.40
codegen_flags: <defaults>
</compile_context>

<pallas_src>
import jax
import jax.numpy as jnp
from jax.experimental import pallas as pl
from jax.experimental.pallas import tpu as pltpu

BN_EPS = 1e-5
LEAKY_SLOPE = 0.2


def gatnet_kernel(x_ref, maskb_ref, pool_ref, wcat_ref, scale_ref, shift_ref,
                  wfc_ref, bfc_ref, out_ref):
    num_layers = wcat_ref.shape[0]
    hp = x_ref.shape[1]                       # padded feature width (128 lanes)

    cur = x_ref[...]                          # (N, Hp) f32, lane-padded

    for l in range(num_layers):               # static unroll: all layers fused
        cur_bf = cur.astype(jnp.bfloat16)

        # ONE fused 128x128x256 MXU pass per layer:
        #   cols [0, Hp)  -> h = cur @ W
        #   col   Hp      -> a_dst . h_i   (dst scores)
        #   col   Hp + 1  -> a_src . h_j   (src scores)
        hs = jnp.dot(cur_bf, wcat_ref[l],
                     preferred_element_type=jnp.float32)             # (N, Hp+128)
        h_bf = hs[:, :hp].astype(jnp.bfloat16)        # cast once, reused below

        e = hs[:, hp:hp + 1] + jnp.transpose(hs[:, hp + 1:hp + 2])   # (N, N)
        e = jnp.where(e > 0, e, LEAKY_SLOPE * e)                     # LeakyReLU(0.2)
        e = e + maskb_ref[...]                # bf16 mask bias, promotes to f32

        # softmax over source axis (f32 VPU/EUP)
        e = e - jnp.max(e, axis=-1, keepdims=True)
        p = jnp.exp(e)
        attn = p * pl.reciprocal(jnp.sum(p, axis=-1, keepdims=True), approx=True)

        # message aggregation (bf16 MXU, f32 accumulate)
        agg = jnp.dot(attn.astype(jnp.bfloat16), h_bf,
                      preferred_element_type=jnp.float32)            # (N, Hp)

        # folded conv-bias + eval BatchNorm, then ReLU (dropout = identity)
        cur = jnp.maximum(agg * scale_ref[l] + shift_ref[l], 0.0)

    # global mean pool (row-normalized membership, bf16-exact) + final Linear
    pooled = jnp.dot(pool_ref[...], cur.astype(jnp.bfloat16),
                     preferred_element_type=jnp.float32)             # (G, Hp)
    out_ref[...] = jnp.dot(pooled.astype(jnp.bfloat16), wfc_ref[...],
                           preferred_element_type=jnp.float32) + bfc_ref[...]


def gatnet_forward(x, mask_bias, pool, wcat_stack, scale_stack, shift_stack,
                   fc_w, fc_b):
    b, n, hp = x.shape
    g = pool.shape[1]
    nl = wcat_stack.shape[0]
    wcat_w = wcat_stack.shape[2]

    resident3 = lambda shape: pl.BlockSpec(shape, lambda i: (0, 0, 0))
    resident2 = lambda shape: pl.BlockSpec(shape, lambda i: (0, 0))

    return pl.pallas_call(
        gatnet_kernel,
        out_shape=jax.ShapeDtypeStruct((b, g, hp), jnp.float32),
        grid_spec=pltpu.PrefetchScalarGridSpec(
            num_scalar_prefetch=0,
            grid=(b,),
            in_specs=[
                pl.BlockSpec((None, n, hp), lambda i: (i, 0, 0)),    # x
                pl.BlockSpec((None, n, n), lambda i: (i, 0, 0)),     # mask bias
                pl.BlockSpec((None, g, n), lambda i: (i, 0, 0)),     # pool
                resident3((nl, hp, wcat_w)),                         # W_cat
                resident3((nl, 1, hp)),                              # scale
                resident3((nl, 1, hp)),                              # shift
                resident2((hp, hp)),                                 # fc_w
                resident2((1, hp)),                                  # fc_b
            ],
            out_specs=pl.BlockSpec((None, g, hp), lambda i: (i, 0, 0)),
        ),
        compiler_params=pltpu.CompilerParams(
            dimension_semantics=("parallel",),
            vmem_limit_bytes=32 * 1024 * 1024),
    )(x, mask_bias, pool, wcat_stack, scale_stack, shift_stack, fc_w, fc_b)


if __name__ == "__main__":
    key = jax.random.PRNGKey(0)

    # model config (matches the module)
    input_dim, hidden_dim, output_dim = 8, 32, 4
    num_layers, heads = 3, 1
    LANE = 128                     # pad all feature dims to the 128-lane axis

    # 2 graph-batches (parallel grid axis -> both v7x TensorCores), each of
    # 8 graphs x 16 nodes block-diagonally batched -> N = 128 (lane-dense attn)
    B = 2
    G, nodes_per_graph = 8, 16
    N = G * nodes_per_graph
    batch_ids = jnp.repeat(jnp.arange(G, dtype=jnp.int32), nodes_per_graph)
    srcs, dsts = [], []
    for g in range(G):
        base = g * nodes_per_graph
        for i in range(nodes_per_graph):
            a, c = base + i, base + (i + 1) % nodes_per_graph
            srcs += [a, c]
            dsts += [c, a]
    edge_index = jnp.array([srcs, dsts], dtype=jnp.int32)            # (2, 256)

    # node features per graph-batch, zero-padded on the lane axis
    key, kx = jax.random.split(key)
    x = jax.random.normal(kx, (B, N, input_dim), dtype=jnp.float32)
    x_pad = jnp.zeros((B, N, LANE), jnp.float32).at[:, :, :input_dim].set(x)

    # dense adjacency adj[dst, src] = 1 plus self-loops (PyG default), converted
    # once to an additive mask bias (0 / -1e30) stored bf16, one per batch
    adj = jnp.zeros((N, N), jnp.float32).at[edge_index[1], edge_index[0]].set(1.0)
    adj = adj + jnp.eye(N, dtype=jnp.float32)
    mask_bias = jnp.where(adj > 0, 0.0, -1e30).astype(jnp.bfloat16)
    mask_bias = jnp.tile(mask_bias[None], (B, 1, 1))                 # (B, N, N)

    # row-normalized pooling matrix for global_mean_pool (entries 1/16: bf16-exact)
    onehot = (batch_ids[None, :] == jnp.arange(G, dtype=jnp.int32)[:, None]
              ).astype(jnp.float32)
    pool = onehot / jnp.sum(onehot, axis=1, keepdims=True)
    pool = jnp.tile(pool[None], (B, 1, 1)).astype(jnp.bfloat16)      # (B, G, N)

    # deterministic synthetic parameters (PyTorch-default BN stats), pre-folded
    wcat_l, scale_l, shift_l = [], [], []
    for i in range(num_layers):
        in_dim = input_dim if i == 0 else hidden_dim * heads
        h_i = heads if i < num_layers - 1 else 1
        out_dim = hidden_dim * h_i
        key, kw, ka, kb, kbias = jax.random.split(key, 5)
        w = jax.random.normal(kw, (in_dim, out_dim), dtype=jnp.float32) * 0.1
        asrc = jax.random.normal(ka, (out_dim,), dtype=jnp.float32) * 0.1
        adst = jax.random.normal(kb, (out_dim,), dtype=jnp.float32) * 0.1
        bias = jax.random.normal(kbias, (out_dim,), dtype=jnp.float32) * 0.01
        gamma = jnp.ones((out_dim,), jnp.float32)
        beta = jnp.zeros((out_dim,), jnp.float32)
        mean = jnp.zeros((out_dim,), jnp.float32)
        var = jnp.ones((out_dim,), jnp.float32)

        # fold eval BatchNorm + conv bias: out = agg * scale + shift
        scale = gamma * jax.lax.rsqrt(var + BN_EPS)
        shift = beta + (bias - mean) * scale

        # fused projection: [ W | W @ a_dst | W @ a_src ], padded to (128, 256)
        wcat = jnp.zeros((LANE, 2 * LANE), jnp.float32)
        wcat = wcat.at[:in_dim, :out_dim].set(w)
        wcat = wcat.at[:in_dim, LANE].set(w @ adst)
        wcat = wcat.at[:in_dim, LANE + 1].set(w @ asrc)
        wcat_l.append(wcat)

        scale_l.append(jnp.zeros((1, LANE), jnp.float32).at[0, :out_dim].set(scale))
        shift_l.append(jnp.zeros((1, LANE), jnp.float32).at[0, :out_dim].set(shift))

    wcat_stack = jnp.stack(wcat_l).astype(jnp.bfloat16)    # (L, 128, 256)
    scale_stack = jnp.stack(scale_l)                       # (L, 1, 128) f32
    shift_stack = jnp.stack(shift_l)                       # (L, 1, 128) f32

    key, kfw, kfb = jax.random.split(key, 3)
    fc_w = jax.random.normal(kfw, (hidden_dim, output_dim), dtype=jnp.float32) * 0.1
    fc_b = jax.random.normal(kfb, (output_dim,), dtype=jnp.float32) * 0.01
    fc_w_pad = (jnp.zeros((LANE, LANE), jnp.float32)
                .at[:hidden_dim, :output_dim].set(fc_w).astype(jnp.bfloat16))
    fc_b_pad = jnp.zeros((1, LANE), jnp.float32).at[0, :output_dim].set(fc_b)

    out_pad = gatnet_forward(x_pad, mask_bias, pool, wcat_stack, scale_stack,
                             shift_stack, fc_w_pad, fc_b_pad)
    jax.block_until_ready(out_pad)
    out = out_pad.reshape(B * G, LANE)[:, :output_dim]
    assert out.shape == (B * G, output_dim)
    assert jnp.all(jnp.isfinite(out))
    print("KERNEL_OK")
</pallas_src>

<mosaic_0001>
module attributes {stable_mosaic.version = 11 : i64} {
  func.func @gatnet_kernel(%arg0: i32, %arg1: memref<1x128x128xf32, #tpu.memory_space<vmem>>, %arg2: memref<1x128x128xbf16, #tpu.memory_space<vmem>>, %arg3: memref<1x8x128xbf16, #tpu.memory_space<vmem>>, %arg4: memref<3x128x256xbf16, #tpu.memory_space<vmem>>, %arg5: memref<3x1x128xf32, #tpu.memory_space<vmem>>, %arg6: memref<3x1x128xf32, #tpu.memory_space<vmem>>, %arg7: memref<128x128xbf16, #tpu.memory_space<vmem>>, %arg8: memref<1x128xf32, #tpu.memory_space<vmem>>, %arg9: memref<1x8x128xf32, #tpu.memory_space<vmem>>) attributes {dimension_semantics = [#tpu.dimension_semantics<parallel>], iteration_bounds = array<i64: 2>, scalar_prefetch = 0 : i64, scratch_operands = 0 : i64, tpu.core_type = #tpu.core_type<tc>, window_params = [{transform_indices = @transform_0, window_bounds = array<i64: 1, 128, 128>}, {transform_indices = @transform_1, window_bounds = array<i64: 1, 128, 128>}, {transform_indices = @transform_2, window_bounds = array<i64: 1, 8, 128>}, {pipeline_mode = #tpu.pipeline_mode<synchronous>, transform_indices = @transform_3, window_bounds = array<i64: 3, 128, 256>}, {pipeline_mode = #tpu.pipeline_mode<synchronous>, transform_indices = @transform_4, window_bounds = array<i64: 3, 1, 128>}, {pipeline_mode = #tpu.pipeline_mode<synchronous>, transform_indices = @transform_5, window_bounds = array<i64: 3, 1, 128>}, {pipeline_mode = #tpu.pipeline_mode<synchronous>, transform_indices = @transform_6, window_bounds = array<i64: 128, 128>}, {pipeline_mode = #tpu.pipeline_mode<synchronous>, transform_indices = @transform_7, window_bounds = array<i64: 1, 128>}, {transform_indices = @transform_8, window_bounds = array<i64: 1, 8, 128>}]} {
    %c0 = arith.constant 0 : index
    %c0_0 = arith.constant 0 : index
    %c0_1 = arith.constant 0 : index
    %0 = vector.load %arg1[%c0, %c0_0, %c0_1] : memref<1x128x128xf32, #tpu.memory_space<vmem>>, vector<1x128x128xf32>
    %1 = vector.shape_cast %0 : vector<1x128x128xf32> to vector<128x128xf32>
    %2 = arith.truncf %1 : vector<128x128xf32> to vector<128x128xbf16>
    %c0_2 = arith.constant 0 : index
    %c0_3 = arith.constant 0 : index
    %c0_4 = arith.constant 0 : index
    %3 = vector.load %arg4[%c0_2, %c0_3, %c0_4] : memref<3x128x256xbf16, #tpu.memory_space<vmem>>, vector<1x128x256xbf16>
    %4 = vector.shape_cast %3 : vector<1x128x256xbf16> to vector<128x256xbf16>
    %cst = arith.constant dense<0.000000e+00> : vector<128x256xf32>
    %5 = tpu.matmul %2, %4, %cst {dimension_numbers = #tpu.dot_dimension_numbers<[1], [0], [0], [1], [0, 0, 1, 1], [], []>} : vector<128x128xbf16>, vector<128x256xbf16>, vector<128x256xf32> -> vector<128x256xf32>
    %6 = vector.extract_strided_slice %5 {offsets = [0, 0], sizes = [128, 128], strides = [1, 1]} : vector<128x256xf32> to vector<128x128xf32>
    %7 = arith.truncf %6 : vector<128x128xf32> to vector<128x128xbf16>
    %8 = vector.extract_strided_slice %5 {offsets = [0, 128], sizes = [128, 1], strides = [1, 1]} : vector<128x256xf32> to vector<128x1xf32>
    %9 = vector.extract_strided_slice %5 {offsets = [0, 129], sizes = [128, 1], strides = [1, 1]} : vector<128x256xf32> to vector<128x1xf32>
    %10 = tpu.transpose %9, [1, 0] : vector<128x1xf32> -> vector<1x128xf32>
    %11 = vector.broadcast %8 : vector<128x1xf32> to vector<128x128xf32>
    %12 = vector.broadcast %10 : vector<1x128xf32> to vector<128x128xf32>
    %13 = arith.addf %11, %12 : vector<128x128xf32>
    %cst_5 = arith.constant 0.000000e+00 : f32
    %14 = vector.broadcast %cst_5 : f32 to vector<128x128xf32>
    %15 = arith.cmpf ogt, %13, %14 : vector<128x128xf32>
    %cst_6 = arith.constant 2.000000e-01 : f32
    %16 = vector.broadcast %cst_6 : f32 to vector<128x128xf32>
    %17 = arith.mulf %16, %13 : vector<128x128xf32>
    %18 = arith.select %15, %13, %17 : vector<128x128xi1>, vector<128x128xf32>
    %c0_7 = arith.constant 0 : index
    %c0_8 = arith.constant 0 : index
    %c0_9 = arith.constant 0 : index
    %19 = vector.load %arg2[%c0_7, %c0_8, %c0_9] : memref<1x128x128xbf16, #tpu.memory_space<vmem>>, vector<1x128x128xbf16>
    %20 = vector.shape_cast %19 : vector<1x128x128xbf16> to vector<128x128xbf16>
    %21 = arith.extf %20 : vector<128x128xbf16> to vector<128x128xf32>
    %22 = arith.addf %18, %21 : vector<128x128xf32>
    %cst_10 = arith.constant dense<0xFF800000> : vector<128xf32>
    %23 = vector.multi_reduction <maximumf>, %22, %cst_10 [1] : vector<128x128xf32> to vector<128xf32>
    %24 = vector.shape_cast %23 : vector<128xf32> to vector<128x1xf32>
    %25 = vector.broadcast %24 : vector<128x1xf32> to vector<128x128xf32>
    %26 = arith.subf %22, %25 : vector<128x128xf32>
    %27 = math.exp %26 : vector<128x128xf32>
    %cst_11 = arith.constant dense<0.000000e+00> : vector<128xf32>
    %28 = vector.multi_reduction <add>, %27, %cst_11 [1] : vector<128x128xf32> to vector<128xf32>
    %29 = vector.shape_cast %28 : vector<128xf32> to vector<128x1xf32>
    %30 = tpu.reciprocal %29 {approx = true} : vector<128x1xf32> -> vector<128x1xf32>
    %31 = vector.broadcast %30 : vector<128x1xf32> to vector<128x128xf32>
    %32 = arith.mulf %27, %31 : vector<128x128xf32>
    %33 = arith.truncf %32 : vector<128x128xf32> to vector<128x128xbf16>
    %cst_12 = arith.constant dense<0.000000e+00> : vector<128x128xf32>
    %34 = tpu.matmul %33, %7, %cst_12 {dimension_numbers = #tpu.dot_dimension_numbers<[1], [0], [0], [1], [0, 0, 1, 1], [], []>} : vector<128x128xbf16>, vector<128x128xbf16>, vector<128x128xf32> -> vector<128x128xf32>
    %c0_13 = arith.constant 0 : index
    %c0_14 = arith.constant 0 : index
    %c0_15 = arith.constant 0 : index
    %35 = vector.load %arg5[%c0_13, %c0_14, %c0_15] : memref<3x1x128xf32, #tpu.memory_space<vmem>>, vector<1x1x128xf32>
    %36 = vector.shape_cast %35 : vector<1x1x128xf32> to vector<1x128xf32>
    %37 = vector.broadcast %36 : vector<1x128xf32> to vector<128x128xf32>
    %38 = arith.mulf %34, %37 : vector<128x128xf32>
    %c0_16 = arith.constant 0 : index
    %c0_17 = arith.constant 0 : index
    %c0_18 = arith.constant 0 : index
    %39 = vector.load %arg6[%c0_16, %c0_17, %c0_18] : memref<3x1x128xf32, #tpu.memory_space<vmem>>, vector<1x1x128xf32>
    %40 = vector.shape_cast %39 : vector<1x1x128xf32> to vector<1x128xf32>
    %41 = vector.broadcast %40 : vector<1x128xf32> to vector<128x128xf32>
    %42 = arith.addf %38, %41 : vector<128x128xf32>
    %cst_19 = arith.constant 0.000000e+00 : f32
    %43 = vector.broadcast %cst_19 : f32 to vector<128x128xf32>
    %44 = arith.maximumf %42, %43 : vector<128x128xf32>
    %45 = arith.truncf %44 : vector<128x128xf32> to vector<128x128xbf16>
    %c1 = arith.constant 1 : index
    %c0_20 = arith.constant 0 : index
    %c0_21 = arith.constant 0 : index
    %46 = vector.load %arg4[%c1, %c0_20, %c0_21] : memref<3x128x256xbf16, #tpu.memory_space<vmem>>, vector<1x128x256xbf16>
    %47 = vector.shape_cast %46 : vector<1x128x256xbf16> to vector<128x256xbf16>
    %cst_22 = arith.constant dense<0.000000e+00> : vector<128x256xf32>
    %48 = tpu.matmul %45, %47, %cst_22 {dimension_numbers = #tpu.dot_dimension_numbers<[1], [0], [0], [1], [0, 0, 1, 1], [], []>} : vector<128x128xbf16>, vector<128x256xbf16>, vector<128x256xf32> -> vector<128x256xf32>
    %49 = vector.extract_strided_slice %48 {offsets = [0, 0], sizes = [128, 128], strides = [1, 1]} : vector<128x256xf32> to vector<128x128xf32>
    %50 = arith.truncf %49 : vector<128x128xf32> to vector<128x128xbf16>
    %51 = vector.extract_strided_slice %48 {offsets = [0, 128], sizes = [128, 1], strides = [1, 1]} : vector<128x256xf32> to vector<128x1xf32>
    %52 = vector.extract_strided_slice %48 {offsets = [0, 129], sizes = [128, 1], strides = [1, 1]} : vector<128x256xf32> to vector<128x1xf32>
    %53 = tpu.transpose %52, [1, 0] : vector<128x1xf32> -> vector<1x128xf32>
    %54 = vector.broadcast %51 : vector<128x1xf32> to vector<128x128xf32>
    %55 = vector.broadcast %53 : vector<1x128xf32> to vector<128x128xf32>
    %56 = arith.addf %54, %55 : vector<128x128xf32>
    %cst_23 = arith.constant 0.000000e+00 : f32
    %57 = vector.broadcast %cst_23 : f32 to vector<128x128xf32>
    %58 = arith.cmpf ogt, %56, %57 : vector<128x128xf32>
    %cst_24 = arith.constant 2.000000e-01 : f32
    %59 = vector.broadcast %cst_24 : f32 to vector<128x128xf32>
    %60 = arith.mulf %59, %56 : vector<128x128xf32>
    %61 = arith.select %58, %56, %60 : vector<128x128xi1>, vector<128x128xf32>
    %c0_25 = arith.constant 0 : index
    %c0_26 = arith.constant 0 : index
    %c0_27 = arith.constant 0 : index
    %62 = vector.load %arg2[%c0_25, %c0_26, %c0_27] : memref<1x128x128xbf16, #tpu.memory_space<vmem>>, vector<1x128x128xbf16>
    %63 = vector.shape_cast %62 : vector<1x128x128xbf16> to vector<128x128xbf16>
    %64 = arith.extf %63 : vector<128x128xbf16> to vector<128x128xf32>
    %65 = arith.addf %61, %64 : vector<128x128xf32>
    %cst_28 = arith.constant dense<0xFF800000> : vector<128xf32>
    %66 = vector.multi_reduction <maximumf>, %65, %cst_28 [1] : vector<128x128xf32> to vector<128xf32>
    %67 = vector.shape_cast %66 : vector<128xf32> to vector<128x1xf32>
    %68 = vector.broadcast %67 : vector<128x1xf32> to vector<128x128xf32>
    %69 = arith.subf %65, %68 : vector<128x128xf32>
    %70 = math.exp %69 : vector<128x128xf32>
    %cst_29 = arith.constant dense<0.000000e+00> : vector<128xf32>
    %71 = vector.multi_reduction <add>, %70, %cst_29 [1] : vector<128x128xf32> to vector<128xf32>
    %72 = vector.shape_cast %71 : vector<128xf32> to vector<128x1xf32>
    %73 = tpu.reciprocal %72 {approx = true} : vector<128x1xf32> -> vector<128x1xf32>
    %74 = vector.broadcast %73 : vector<128x1xf32> to vector<128x128xf32>
    %75 = arith.mulf %70, %74 : vector<128x128xf32>
    %76 = arith.truncf %75 : vector<128x128xf32> to vector<128x128xbf16>
    %cst_30 = arith.constant dense<0.000000e+00> : vector<128x128xf32>
    %77 = tpu.matmul %76, %50, %cst_30 {dimension_numbers = #tpu.dot_dimension_numbers<[1], [0], [0], [1], [0, 0, 1, 1], [], []>} : vector<128x128xbf16>, vector<128x128xbf16>, vector<128x128xf32> -> vector<128x128xf32>
    %c1_31 = arith.constant 1 : index
    %c0_32 = arith.constant 0 : index
    %c0_33 = arith.constant 0 : index
    %78 = vector.load %arg5[%c1_31, %c0_32, %c0_33] : memref<3x1x128xf32, #tpu.memory_space<vmem>>, vector<1x1x128xf32>
    %79 = vector.shape_cast %78 : vector<1x1x128xf32> to vector<1x128xf32>
    %80 = vector.broadcast %79 : vector<1x128xf32> to vector<128x128xf32>
    %81 = arith.mulf %77, %80 : vector<128x128xf32>
    %c1_34 = arith.constant 1 : index
    %c0_35 = arith.constant 0 : index
    %c0_36 = arith.constant 0 : index
    %82 = vector.load %arg6[%c1_34, %c0_35, %c0_36] : memref<3x1x128xf32, #tpu.memory_space<vmem>>, vector<1x1x128xf32>
    %83 = vector.shape_cast %82 : vector<1x1x128xf32> to vector<1x128xf32>
    %84 = vector.broadcast %83 : vector<1x128xf32> to vector<128x128xf32>
    %85 = arith.addf %81, %84 : vector<128x128xf32>
    %cst_37 = arith.constant 0.000000e+00 : f32
    %86 = vector.broadcast %cst_37 : f32 to vector<128x128xf32>
    %87 = arith.maximumf %85, %86 : vector<128x128xf32>
    %88 = arith.truncf %87 : vector<128x128xf32> to vector<128x128xbf16>
    %c2 = arith.constant 2 : index
    %c0_38 = arith.constant 0 : index
    %c0_39 = arith.constant 0 : index
    %89 = vector.load %arg4[%c2, %c0_38, %c0_39] : memref<3x128x256xbf16, #tpu.memory_space<vmem>>, vector<1x128x256xbf16>
    %90 = vector.shape_cast %89 : vector<1x128x256xbf16> to vector<128x256xbf16>
    %cst_40 = arith.constant dense<0.000000e+00> : vector<128x256xf32>
    %91 = tpu.matmul %88, %90, %cst_40 {dimension_numbers = #tpu.dot_dimension_numbers<[1], [0], [0], [1], [0, 0, 1, 1], [], []>} : vector<128x128xbf16>, vector<128x256xbf16>, vector<128x256xf32> -> vector<128x256xf32>
    %92 = vector.extract_strided_slice %91 {offsets = [0, 0], sizes = [128, 128], strides = [1, 1]} : vector<128x256xf32> to vector<128x128xf32>
    %93 = arith.truncf %92 : vector<128x128xf32> to vector<128x128xbf16>
    %94 = vector.extract_strided_slice %91 {offsets = [0, 128], sizes = [128, 1], strides = [1, 1]} : vector<128x256xf32> to vector<128x1xf32>
    %95 = vector.extract_strided_slice %91 {offsets = [0, 129], sizes = [128, 1], strides = [1, 1]} : vector<128x256xf32> to vector<128x1xf32>
    %96 = tpu.transpose %95, [1, 0] : vector<128x1xf32> -> vector<1x128xf32>
    %97 = vector.broadcast %94 : vector<128x1xf32> to vector<128x128xf32>
    %98 = vector.broadcast %96 : vector<1x128xf32> to vector<128x128xf32>
    %99 = arith.addf %97, %98 : vector<128x128xf32>
    %cst_41 = arith.constant 0.000000e+00 : f32
    %100 = vector.broadcast %cst_41 : f32 to vector<128x128xf32>
    %101 = arith.cmpf ogt, %99, %100 : vector<128x128xf32>
    %cst_42 = arith.constant 2.000000e-01 : f32
    %102 = vector.broadcast %cst_42 : f32 to vector<128x128xf32>
    %103 = arith.mulf %102, %99 : vector<128x128xf32>
    %104 = arith.select %101, %99, %103 : vector<128x128xi1>, vector<128x128xf32>
    %c0_43 = arith.constant 0 : index
    %c0_44 = arith.constant 0 : index
    %c0_45 = arith.constant 0 : index
    %105 = vector.load %arg2[%c0_43, %c0_44, %c0_45] : memref<1x128x128xbf16, #tpu.memory_space<vmem>>, vector<1x128x128xbf16>
    %106 = vector.shape_cast %105 : vector<1x128x128xbf16> to vector<128x128xbf16>
    %107 = arith.extf %106 : vector<128x128xbf16> to vector<128x128xf32>
    %108 = arith.addf %104, %107 : vector<128x128xf32>
    %cst_46 = arith.constant dense<0xFF800000> : vector<128xf32>
    %109 = vector.multi_reduction <maximumf>, %108, %cst_46 [1] : vector<128x128xf32> to vector<128xf32>
    %110 = vector.shape_cast %109 : vector<128xf32> to vector<128x1xf32>
    %111 = vector.broadcast %110 : vector<128x1xf32> to vector<128x128xf32>
    %112 = arith.subf %108, %111 : vector<128x128xf32>
    %113 = math.exp %112 : vector<128x128xf32>
    %cst_47 = arith.constant dense<0.000000e+00> : vector<128xf32>
    %114 = vector.multi_reduction <add>, %113, %cst_47 [1] : vector<128x128xf32> to vector<128xf32>
    %115 = vector.shape_cast %114 : vector<128xf32> to vector<128x1xf32>
    %116 = tpu.reciprocal %115 {approx = true} : vector<128x1xf32> -> vector<128x1xf32>
    %117 = vector.broadcast %116 : vector<128x1xf32> to vector<128x128xf32>
    %118 = arith.mulf %113, %117 : vector<128x128xf32>
    %119 = arith.truncf %118 : vector<128x128xf32> to vector<128x128xbf16>
    %cst_48 = arith.constant dense<0.000000e+00> : vector<128x128xf32>
    %120 = tpu.matmul %119, %93, %cst_48 {dimension_numbers = #tpu.dot_dimension_numbers<[1], [0], [0], [1], [0, 0, 1, 1], [], []>} : vector<128x128xbf16>, vector<128x128xbf16>, vector<128x128xf32> -> vector<128x128xf32>
    %c2_49 = arith.constant 2 : index
    %c0_50 = arith.constant 0 : index
    %c0_51 = arith.constant 0 : index
    %121 = vector.load %arg5[%c2_49, %c0_50, %c0_51] : memref<3x1x128xf32, #tpu.memory_space<vmem>>, vector<1x1x128xf32>
    %122 = vector.shape_cast %121 : vector<1x1x128xf32> to vector<1x128xf32>
    %123 = vector.broadcast %122 : vector<1x128xf32> to vector<128x128xf32>
    %124 = arith.mulf %120, %123 : vector<128x128xf32>
    %c2_52 = arith.constant 2 : index
    %c0_53 = arith.constant 0 : index
    %c0_54 = arith.constant 0 : index
    %125 = vector.load %arg6[%c2_52, %c0_53, %c0_54] : memref<3x1x128xf32, #tpu.memory_space<vmem>>, vector<1x1x128xf32>
    %126 = vector.shape_cast %125 : vector<1x1x128xf32> to vector<1x128xf32>
    %127 = vector.broadcast %126 : vector<1x128xf32> to vector<128x128xf32>
    %128 = arith.addf %124, %127 : vector<128x128xf32>
    %cst_55 = arith.constant 0.000000e+00 : f32
    %129 = vector.broadcast %cst_55 : f32 to vector<128x128xf32>
    %130 = arith.maximumf %128, %129 : vector<128x128xf32>
    %c0_56 = arith.constant 0 : index
    %c0_57 = arith.constant 0 : index
    %c0_58 = arith.constant 0 : index
    %131 = vector.load %arg3[%c0_56, %c0_57, %c0_58] : memref<1x8x128xbf16, #tpu.memory_space<vmem>>, vector<1x8x128xbf16>
    %132 = vector.shape_cast %131 : vector<1x8x128xbf16> to vector<8x128xbf16>
    %133 = arith.truncf %130 : vector<128x128xf32> to vector<128x128xbf16>
    %cst_59 = arith.constant dense<0.000000e+00> : vector<8x128xf32>
    %134 = tpu.matmul %132, %133, %cst_59 {dimension_numbers = #tpu.dot_dimension_numbers<[1], [0], [0], [1], [0, 0, 1, 1], [], []>} : vector<8x128xbf16>, vector<128x128xbf16>, vector<8x128xf32> -> vector<8x128xf32>
    %135 = arith.truncf %134 : vector<8x128xf32> to vector<8x128xbf16>
    %c0_60 = arith.constant 0 : index
    %c0_61 = arith.constant 0 : index
    %136 = vector.load %arg7[%c0_60, %c0_61] : memref<128x128xbf16, #tpu.memory_space<vmem>>, vector<128x128xbf16>
    %cst_62 = arith.constant dense<0.000000e+00> : vector<8x128xf32>
    %137 = tpu.matmul %135, %136, %cst_62 {dimension_numbers = #tpu.dot_dimension_numbers<[1], [0], [0], [1], [0, 0, 1, 1], [], []>} : vector<8x128xbf16>, vector<128x128xbf16>, vector<8x128xf32> -> vector<8x128xf32>
    %c0_63 = arith.constant 0 : index
    %c0_64 = arith.constant 0 : index
    %138 = vector.load %arg8[%c0_63, %c0_64] : memref<1x128xf32, #tpu.memory_space<vmem>>, vector<1x128xf32>
    %139 = vector.broadcast %138 : vector<1x128xf32> to vector<8x128xf32>
    %140 = arith.addf %137, %139 : vector<8x128xf32>
    %c0_65 = arith.constant 0 : index
    %c0_66 = arith.constant 0 : index
    %c0_67 = arith.constant 0 : index
    %141 = vector.load %arg9[%c0_65, %c0_66, %c0_67] : memref<1x8x128xf32, #tpu.memory_space<vmem>>, vector<1x8x128xf32>
    %142 = vector.shape_cast %141 : vector<1x8x128xf32> to vector<8x128xf32>
    %143 = vector.shape_cast %140 : vector<8x128xf32> to vector<1x8x128xf32>
    tpu.vector_store %arg9[%c0_65, %c0_66, %c0_67], %143 {strides = array<i32>} : memref<1x8x128xf32, #tpu.memory_space<vmem>>, vector<1x8x128xf32>,
    return
  }
  func.func @transform_0(%arg0: i32) -> (i32, i32, i32) {
    %c0_i32 = arith.constant 0 : i32
    %c0_i32_0 = arith.constant 0 : i32
    %c0_i32_1 = arith.constant 0 : i32
    return %arg0, %c0_i32, %c0_i32_0 : i32, i32, i32
  }
  func.func @transform_1(%arg0: i32) -> (i32, i32, i32) {
    %c0_i32 = arith.constant 0 : i32
    %c0_i32_0 = arith.constant 0 : i32
    %c0_i32_1 = arith.constant 0 : i32
    return %arg0, %c0_i32, %c0_i32_0 : i32, i32, i32
  }
  func.func @transform_2(%arg0: i32) -> (i32, i32, i32) {
    %c0_i32 = arith.constant 0 : i32
    %c0_i32_0 = arith.constant 0 : i32
    %c0_i32_1 = arith.constant 0 : i32
    return %arg0, %c0_i32, %c0_i32_0 : i32, i32, i32
  }
  func.func @transform_3(%arg0: i32) -> (i32, i32, i32) {
    %c0_i32 = arith.constant 0 : i32
    %c0_i32_0 = arith.constant 0 : i32
    %c0_i32_1 = arith.constant 0 : i32
    %c0_i32_2 = arith.constant 0 : i32
    return %c0_i32, %c0_i32_0, %c0_i32_1 : i32, i32, i32
  }
  func.func @transform_4(%arg0: i32) -> (i32, i32, i32) {
    %c0_i32 = arith.constant 0 : i32
    %c0_i32_0 = arith.constant 0 : i32
    %c0_i32_1 = arith.constant 0 : i32
    %c0_i32_2 = arith.constant 0 : i32
    return %c0_i32, %c0_i32_0, %c0_i32_1 : i32, i32, i32
  }
  func.func @transform_5(%arg0: i32) -> (i32, i32, i32) {
    %c0_i32 = arith.constant 0 : i32
    %c0_i32_0 = arith.constant 0 : i32
    %c0_i32_1 = arith.constant 0 : i32
    %c0_i32_2 = arith.constant 0 : i32
    return %c0_i32, %c0_i32_0, %c0_i32_1 : i32, i32, i32
  }
  func.func @transform_6(%arg0: i32) -> (i32, i32) {
    %c0_i32 = arith.constant 0 : i32
    %c0_i32_0 = arith.constant 0 : i32
    %c0_i32_1 = arith.constant 0 : i32
    return %c0_i32, %c0_i32_0 : i32, i32
  }
  func.func @transform_7(%arg0: i32) -> (i32, i32) {
    %c0_i32 = arith.constant 0 : i32
    %c0_i32_0 = arith.constant 0 : i32
    %c0_i32_1 = arith.constant 0 : i32
    return %c0_i32, %c0_i32_0 : i32, i32
  }
  func.func @transform_8(%arg0: i32) -> (i32, i32, i32) {
    %c0_i32 = arith.constant 0 : i32
    %c0_i32_0 = arith.constant 0 : i32
    %c0_i32_1 = arith.constant 0 : i32
    return %arg0, %c0_i32, %c0_i32_0 : i32, i32, i32
  }
}

</mosaic_0001>

<llo_original>
// kernel: tpu_custom_call.1
$region0: #{tpu_custom_call.1}
  #allocation0 [shape = 'u32[]', space=smem, size = 0x4, offset = 0x4, fixed_abs, tag = 'smem constant byte address 0x4 - core index']
  #allocation1 [shape = 'u32[144,128]{1,0:T(1,128)}', space=vmem, size = 0x12000, scoped, tag = 'internal scratch']
  %s0 = inlined_call_operand.hbm [shape: f32[2,128,128], index: 0, kind: input, shape index: {}]
  %s1 = inlined_call_operand.hbm [shape: bf16[2,128,128], index: 1, kind: input, shape index: {}]
  %s2 = inlined_call_operand.hbm [shape: bf16[2,8,128], index: 2, kind: input, shape index: {}]
  %s3 = inlined_call_operand.hbm [shape: bf16[3,128,256], index: 3, kind: input, shape index: {}]
  %s4 = inlined_call_operand.vmem [shape: f32[3,1,128], index: 4, kind: input, shape index: {}]
  %s5 = inlined_call_operand.vmem [shape: f32[3,1,128], index: 5, kind: input, shape index: {}]
  %s6 = inlined_call_operand.hbm [shape: bf16[128,128], index: 6, kind: input, shape index: {}]
  %s7 = inlined_call_operand.vmem [shape: f32[1,128], index: 7, kind: input, shape index: {}]
  %s8 = inlined_call_operand.hbm [shape: f32[2,8,128], index: 8, kind: output, shape index: {}]
  %s9 = sld [smem:[#allocation0]]
  $region85: #{tpu_custom_call.1} parent=0
    _
  %s11 = ssub.s32 1, %s9
  %s12 = scalar_select 0, %s11, %s9
  $region1: #{tpu_custom_call.1} parent=0
    #allocation2 [shape = 'u8[131072]{0}', space=vmem, size = 0x20000, scoped, tag = 'input window, operand 0']
    #allocation3 [shape = 's32[2]{0}', space=sflag, size = 0x8, scoped, tag = 'scoped memory for tpu_custom_call.1']
    #allocation4 [shape = 's32[2]{0}', space=sflag, size = 0x8, scoped, tag = 'scoped memory for tpu_custom_call.1']
    #allocation5 [shape = 'u8[65536]{0}', space=vmem, size = 0x10000, scoped, tag = 'input window, operand 1']
    #allocation6 [shape = 's32[2]{0}', space=sflag, size = 0x8, scoped, tag = 'scoped memory for tpu_custom_call.1']
    #allocation7 [shape = 'u8[4096]{0}', space=vmem, size = 0x1000, scoped, tag = 'input window, operand 2']
    #allocation8 [shape = 'u8[196608]{0}', space=vmem, size = 0x30000, scoped, tag = 'input window, operand 3, single buffered']
    #allocation9 [shape = 's32[1]{0}', space=sflag, size = 0x4, scoped, tag = 'scoped memory for tpu_custom_call.1']
    #allocation10 [shape = 'u8[32768]{0}', space=vmem, size = 0x8000, scoped, tag = 'input window, operand 6, single buffered']
    #allocation11 [shape = 'u8[8192]{0}', space=vmem, size = 0x2000, scoped, tag = 'output window, operand 0']
    %13 = vsyncpa [#allocation3], 0
    %s14 = scalar_lea.sflag [#allocation3], 1
    %15 = vsyncpa %s14, 0
    %16 = vsyncpa [#allocation6], 0
    %s17 = scalar_lea.sflag [#allocation6], 1
    %18 = vsyncpa %s17, 0
    %19 = vsyncpa [#allocation9], 0
    %20 = vsyncpa [#allocation4], 0
    %s21 = scalar_lea.sflag [#allocation4], 1
    %22 = vsyncpa %s21, 0
    loop: start=0, step=1, limit=4
    $region2: #{tpu_custom_call.1} parent=1 // loop_pre_header
      _
    $region3: #{tpu_custom_call.1} parent=1 // loop_header
      %s24 = sphi 0, %s28
      %p25 = scmp.ge.s32.totalorder %s24, 4
      %s34 = sphi 0, %s36
      %s37 = sphi 0, %s34
      %s38 = sphi 0, %s37
      %s54 = sphi 0, %s38
      %s60 = sphi 0, %s62
      %s63 = sphi 0, %s60
      %s64 = sphi 0, %s63
      %s80 = sphi 0, %s64
      %s86 = sphi 0, %s88
      %s89 = sphi 0, %s86
      %s90 = sphi 0, %s89
      %s106 = sphi 0, %s90
      %s110 = sphi 0, %s110
      %s112 = sphi 0, %s110
      %s113 = sphi 0, %s112
      %s127 = sphi 0, %s113
      %s131 = sphi 0, %s131
      %s133 = sphi 0, %s131
      %s134 = sphi 0, %s133
      %s148 = sphi 0, %s134
      %s152 = sphi 0, %s152
      %s154 = sphi 0, %s152
      %s155 = sphi 0, %s154
      %s169 = sphi 0, %s155
      %s173 = sphi 0, %s173
      %s175 = sphi 0, %s173
      %s176 = sphi 0, %s175
      %s190 = sphi 0, %s176
      %s194 = sphi 0, %s194
      %s196 = sphi 0, %s194
      %s197 = sphi 0, %s196
      %s211 = sphi 0, %s197
      %s217 = sphi 0, %s219
      %s220 = sphi 0, %s217
      %s221 = sphi 0, %s220
      %s237 = sphi 0, %s221
    $region4: #{tpu_custom_call.1} parent=1 // loop_header_branch
      %27 = sbr.rel (%p25) target = $region8
    $region5: #{tpu_custom_call.1} parent=1 // loop_body
      %s29 = ssub.s32 %s24, 1
      %s30 = ssub.s32 %s24, 2
      %s31 = sadd.s32 %s24, 1
      %s32 = ssub.s32 %s24, %s31
      %p33 = scmp.eq.s32.totalorder %s32, 0
      %s35 = sadd.s32 %s34, 1
      %s36 = scalar_select %p33, %s34, %s35
      %p39 = pneg %p33
      %p40 = scmp.eq.s32.totalorder %s24, 1
      %p41 = por %p39, %p40
      %p42 = scmp.ne.s32.totalorder %s34, %s37
      %p43 = scmp.eq.s32.totalorder %s24, 0
      %p44 = por %p42, %p43
      %p45 = scmp.ne.s32.totalorder %s34, %s37
      %p46 = scmp.eq.s32.totalorder %s29, 1
      %p47 = por %p45, %p46
      %p48 = scmp.ne.s32.totalorder %s37, %s38
      %p49 = scmp.eq.s32.totalorder %s29, 0
      %p50 = por %p48, %p49
      %p51 = scmp.ne.s32.totalorder %s37, %s38
      %p52 = scmp.eq.s32.totalorder %s30, 1
      %p53 = por %p51, %p52
      %p55 = scmp.ne.s32.totalorder %s38, %s54
      %p56 = scmp.eq.s32.totalorder %s30, 0
      %p57 = por %p55, %p56
      %s58 = ssub.s32 %s24, %s31
      %p59 = scmp.eq.s32.totalorder %s58, 0
      %s61 = sadd.s32 %s60, 1
      %s62 = scalar_select %p59, %s60, %s61
      %p65 = pneg %p59
      %p66 = scmp.eq.s32.totalorder %s24, 1
      %p67 = por %p65, %p66
      %p68 = scmp.ne.s32.totalorder %s60, %s63
      %p69 = scmp.eq.s32.totalorder %s24, 0
      %p70 = por %p68, %p69
      %p71 = scmp.ne.s32.totalorder %s60, %s63
      %p72 = scmp.eq.s32.totalorder %s29, 1
      %p73 = por %p71, %p72
      %p74 = scmp.ne.s32.totalorder %s63, %s64
      %p75 = scmp.eq.s32.totalorder %s29, 0
      %p76 = por %p74, %p75
      %p77 = scmp.ne.s32.totalorder %s63, %s64
      %p78 = scmp.eq.s32.totalorder %s30, 1
      %p79 = por %p77, %p78
      %p81 = scmp.ne.s32.totalorder %s64, %s80
      %p82 = scmp.eq.s32.totalorder %s30, 0
      %p83 = por %p81, %p82
      %s84 = ssub.s32 %s24, %s31
      %p85 = scmp.eq.s32.totalorder %s84, 0
      %s87 = sadd.s32 %s86, 1
      %s88 = scalar_select %p85, %s86, %s87
      %p91 = pneg %p85
      %p92 = scmp.eq.s32.totalorder %s24, 1
      %p93 = por %p91, %p92
      %p94 = scmp.ne.s32.totalorder %s86, %s89
      %p95 = scmp.eq.s32.totalorder %s24, 0
      %p96 = por %p94, %p95
      %p97 = scmp.ne.s32.totalorder %s86, %s89
      %p98 = scmp.eq.s32.totalorder %s29, 1
      %p99 = por %p97, %p98
      %p100 = scmp.ne.s32.totalorder %s89, %s90
      %p101 = scmp.eq.s32.totalorder %s29, 0
      %p102 = por %p100, %p101
      %p103 = scmp.ne.s32.totalorder %s89, %s90
      %p104 = scmp.eq.s32.totalorder %s30, 1
      %p105 = por %p103, %p104
      %p107 = scmp.ne.s32.totalorder %s90, %s106
      %p108 = scmp.eq.s32.totalorder %s30, 0
      %p109 = por %p107, %p108
      %s111 = sadd.s32 %s110, 1
      %p114 = scmp.eq.s32.totalorder %s24, 1
      %p115 = scmp.ne.s32.totalorder %s110, %s112
      %p116 = scmp.eq.s32.totalorder %s24, 0
      %p117 = por %p115, %p116
      %p118 = scmp.ne.s32.totalorder %s110, %s112
      %p119 = scmp.eq.s32.totalorder %s29, 1
      %p120 = por %p118, %p119
      %p121 = scmp.ne.s32.totalorder %s112, %s113
      %p122 = scmp.eq.s32.totalorder %s29, 0
      %p123 = por %p121, %p122
      %p124 = scmp.ne.s32.totalorder %s112, %s113
      %p125 = scmp.eq.s32.totalorder %s30, 1
      %p126 = por %p124, %p125
      %p128 = scmp.ne.s32.totalorder %s113, %s127
      %p129 = scmp.eq.s32.totalorder %s30, 0
      %p130 = por %p128, %p129
      %s132 = sadd.s32 %s131, 1
      %p135 = scmp.eq.s32.totalorder %s24, 1
      %p136 = scmp.ne.s32.totalorder %s131, %s133
      %p137 = scmp.eq.s32.totalorder %s24, 0
      %p138 = por %p136, %p137
      %p139 = scmp.ne.s32.totalorder %s131, %s133
      %p140 = scmp.eq.s32.totalorder %s29, 1
      %p141 = por %p139, %p140
      %p142 = scmp.ne.s32.totalorder %s133, %s134
      %p143 = scmp.eq.s32.totalorder %s29, 0
      %p144 = por %p142, %p143
      %p145 = scmp.ne.s32.totalorder %s133, %s134
      %p146 = scmp.eq.s32.totalorder %s30, 1
      %p147 = por %p145, %p146
      %p149 = scmp.ne.s32.totalorder %s134, %s148
      %p150 = scmp.eq.s32.totalorder %s30, 0
      %p151 = por %p149, %p150
      %s153 = sadd.s32 %s152, 1
      %p156 = scmp.eq.s32.totalorder %s24, 1
      %p157 = scmp.ne.s32.totalorder %s152, %s154
      %p158 = scmp.eq.s32.totalorder %s24, 0
      %p159 = por %p157, %p158
      %p160 = scmp.ne.s32.totalorder %s152, %s154
      %p161 = scmp.eq.s32.totalorder %s29, 1
      %p162 = por %p160, %p161
      %p163 = scmp.ne.s32.totalorder %s154, %s155
      %p164 = scmp.eq.s32.totalorder %s29, 0
      %p165 = por %p163, %p164
      %p166 = scmp.ne.s32.totalorder %s154, %s155
      %p167 = scmp.eq.s32.totalorder %s30, 1
      %p168 = por %p166, %p167
      %p170 = scmp.ne.s32.totalorder %s155, %s169
      %p171 = scmp.eq.s32.totalorder %s30, 0
      %p172 = por %p170, %p171
      %s174 = sadd.s32 %s173, 1
      %p177 = scmp.eq.s32.totalorder %s24, 1
      %p178 = scmp.ne.s32.totalorder %s173, %s175
      %p179 = scmp.eq.s32.totalorder %s24, 0
      %p180 = por %p178, %p179
      %p181 = scmp.ne.s32.totalorder %s173, %s175
      %p182 = scmp.eq.s32.totalorder %s29, 1
      %p183 = por %p181, %p182
      %p184 = scmp.ne.s32.totalorder %s175, %s176
      %p185 = scmp.eq.s32.totalorder %s29, 0
      %p186 = por %p184, %p185
      %p187 = scmp.ne.s32.totalorder %s175, %s176
      %p188 = scmp.eq.s32.totalorder %s30, 1
      %p189 = por %p187, %p188
      %p191 = scmp.ne.s32.totalorder %s176, %s190
      %p192 = scmp.eq.s32.totalorder %s30, 0
      %p193 = por %p191, %p192
      %s195 = sadd.s32 %s194, 1
      %p198 = scmp.eq.s32.totalorder %s24, 1
      %p199 = scmp.ne.s32.totalorder %s194, %s196
      %p200 = scmp.eq.s32.totalorder %s24, 0
      %p201 = por %p199, %p200
      %p202 = scmp.ne.s32.totalorder %s194, %s196
      %p203 = scmp.eq.s32.totalorder %s29, 1
      %p204 = por %p202, %p203
      %p205 = scmp.ne.s32.totalorder %s196, %s197
      %p206 = scmp.eq.s32.totalorder %s29, 0
      %p207 = por %p205, %p206
      %p208 = scmp.ne.s32.totalorder %s196, %s197
      %p209 = scmp.eq.s32.totalorder %s30, 1
      %p210 = por %p208, %p209
      %p212 = scmp.ne.s32.totalorder %s197, %s211
      %p213 = scmp.eq.s32.totalorder %s30, 0
      %p214 = por %p212, %p213
      %s215 = ssub.s32 %s24, %s31
      %p216 = scmp.eq.s32.totalorder %s215, 0
      %s218 = sadd.s32 %s217, 1
      %s219 = scalar_select %p216, %s217, %s218
      %p222 = pneg %p216
      %p223 = scmp.eq.s32.totalorder %s24, 1
      %p224 = por %p222, %p223
      %p225 = scmp.ne.s32.totalorder %s217, %s220
      %p226 = scmp.eq.s32.totalorder %s24, 0
      %p227 = por %p225, %p226
      %p228 = scmp.ne.s32.totalorder %s217, %s220
      %p229 = scmp.eq.s32.totalorder %s29, 1
      %p230 = por %p228, %p229
      %p231 = scmp.ne.s32.totalorder %s220, %s221
      %p232 = scmp.eq.s32.totalorder %s29, 0
      %p233 = por %p231, %p232
      %p234 = scmp.ne.s32.totalorder %s220, %s221
      %p235 = scmp.eq.s32.totalorder %s30, 1
      %p236 = por %p234, %p235
      %p238 = scmp.ne.s32.totalorder %s221, %s237
      %p239 = scmp.eq.s32.totalorder %s30, 0
      %p240 = por %p238, %p239
      %p241 = scmp.le.s32.totalorder 1, %s24
      %p242 = scmp.lt.s32.totalorder %s24, 3
      %p243 = pnand %p241, %p242
      %p244 = pneg %p243
      // Predicated region
      $region9: #{tpu_custom_call.1} parent=5 // pred_check
        _
      $region10: #{tpu_custom_call.1} parent=5 // pred_check_branch
        %246 = sbr.rel (%p243) target = $region12
      $region11: #{tpu_custom_call.1} parent=5 // pred_region
        %s247 = ssub.s32 %s24, 1
        // Predicated region
        $region13: #{tpu_custom_call.1} parent=11 // pred_check
          %p248 = pneg %p123
        $region14: #{tpu_custom_call.1} parent=11 // pred_check_branch
          %250 = sbr.rel (%p248) target = $region16
        $region15: #{tpu_custom_call.1} parent=11 // pred_region
          %s252 = ssub.s32 6144, 6144
          %253 = vsyncadd [#allocation9], %s252
          %s254 = sshll.u32 [#allocation8], 4
          %s255 = int_to_ptr.vmem [resolvable:$true] %s254
          %260 = dma.hbm_to_vmem [thread:$0]  %s3, 6144, %s255, [#allocation9], 128, 128, 8
        $region16: #{tpu_custom_call.1} parent=11 // pred_fallthru
          _
        // Predicated region
        $region17: #{tpu_custom_call.1} parent=11 // pred_check
          %p261 = pneg %p144
        $region18: #{tpu_custom_call.1} parent=11 // pred_check_branch
          %263 = sbr.rel (%p261) target = $region20
        $region19: #{tpu_custom_call.1} parent=11 // pred_region
          _
        $region20: #{tpu_custom_call.1} parent=11 // pred_fallthru
          _
        // Predicated region
        $region21: #{tpu_custom_call.1} parent=11 // pred_check
          %p264 = pneg %p165
        $region22: #{tpu_custom_call.1} parent=11 // pred_check_branch
          %266 = sbr.rel (%p264) target = $region24
        $region23: #{tpu_custom_call.1} parent=11 // pred_region
          _
        $region24: #{tpu_custom_call.1} parent=11 // pred_fallthru
          _
        // Predicated region
        $region25: #{tpu_custom_call.1} parent=11 // pred_check
          %p267 = pneg %p186
        $region26: #{tpu_custom_call.1} parent=11 // pred_check_branch
          %269 = sbr.rel (%p267) target = $region28
        $region27: #{tpu_custom_call.1} parent=11 // pred_region
          %s271 = ssub.s32 1024, 1024
          %272 = vsyncadd [#allocation9], %s271
          %s273 = sshll.u32 [#allocation10], 4
          %s274 = int_to_ptr.vmem [resolvable:$true] %s273
          %279 = dma.hbm_to_vmem [thread:$0]  %s6, 1024, %s274, [#allocation9], 64, 64, 4
        $region28: #{tpu_custom_call.1} parent=11 // pred_fallthru
          _
        // Predicated region
        $region29: #{tpu_custom_call.1} parent=11 // pred_check
          %p280 = pneg %p207
        $region30: #{tpu_custom_call.1} parent=11 // pred_check_branch
          %282 = sbr.rel (%p280) target = $region32
        $region31: #{tpu_custom_call.1} parent=11 // pred_region
          _
        $region32: #{tpu_custom_call.1} parent=11 // pred_fallthru
          _
      $region12: #{tpu_custom_call.1} parent=5 // pred_fallthru
        _
      %p283 = scmp.lt.s32.totalorder %s24, 2
      // Predicated region
      $region33: #{tpu_custom_call.1} parent=5 // pred_check
        %p284 = pneg %p283
      $region34: #{tpu_custom_call.1} parent=5 // pred_check_branch
        %286 = sbr.rel (%p284) target = $region36
      $region35: #{tpu_custom_call.1} parent=5 // pred_region
        // Predicated region
        $region37: #{tpu_custom_call.1} parent=35 // pred_check
          %p287 = pneg %p44
        $region38: #{tpu_custom_call.1} parent=35 // pred_check_branch
          %289 = sbr.rel (%p287) target = $region40
        $region39: #{tpu_custom_call.1} parent=35 // pred_region
          %s290 = sand.u32 %s34, 1
          %s291 = scalar_lea.sflag [#allocation3], %s290
          %s292 = sand.u32 %s34, 1
          %s293 = smul.addr %s292, 128
          %s294 = scalar_lea.vmem [#allocation2], %s293
          %s296 = ssub.s32 2048, 2048
          %297 = vsyncadd %s291, %s296
          %s298 = smul.addr %s24, 16
          %s299 = smul.addr %s298, 128
          %s300 = scalar_lea.hbm %s0, %s299
          %s301 = sshll.u32 %s294, 4
          %s302 = int_to_ptr.vmem [resolvable:$true] %s301
          %307 = dma.hbm_to_vmem [thread:$0]  %s300, 2048, %s302, %s291, 128, 128, 8
        $region40: #{tpu_custom_call.1} parent=35 // pred_fallthru
          _
        // Predicated region
        $region41: #{tpu_custom_call.1} parent=35 // pred_check
          %p308 = pneg %p70
        $region42: #{tpu_custom_call.1} parent=35 // pred_check_branch
          %310 = sbr.rel (%p308) target = $region44
        $region43: #{tpu_custom_call.1} parent=35 // pred_region
          %s311 = sand.u32 %s24, 1
          %s312 = scalar_lea.sflag [#allocation6], %s311
          %s313 = sand.u32 %s60, 1
          %s314 = smul.addr %s313, 64
          %s315 = scalar_lea.vmem [#allocation5], %s314
          %s317 = ssub.s32 1024, 1024
          %318 = vsyncadd %s312, %s317
          %s319 = smul.addr %s24, 16
          %s320 = smul.addr %s319, 64
          %s321 = scalar_lea.hbm %s1, %s320
          %s322 = sshll.u32 %s315, 4
          %s323 = int_to_ptr.vmem [resolvable:$true] %s322
          %328 = dma.hbm_to_vmem [thread:$0]  %s321, 1024, %s323, %s312, 64, 64, 4
        $region44: #{tpu_custom_call.1} parent=35 // pred_fallthru
          _
        // Predicated region
        $region45: #{tpu_custom_call.1} parent=35 // pred_check
          %p329 = pneg %p96
        $region46: #{tpu_custom_call.1} parent=35 // pred_check_branch
          %331 = sbr.rel (%p329) target = $region48
        $region47: #{tpu_custom_call.1} parent=35 // pred_region
          %s332 = sand.u32 %s24, 1
          %s333 = scalar_lea.sflag [#allocation6], %s332
          %s334 = sand.u32 %s86, 1
          %s335 = smul.addr %s334, 4
          %s336 = scalar_lea.vmem [#allocation7], %s335
          %s338 = ssub.s32 64, 64
          %339 = vsyncadd %s333, %s338
          %s340 = smul.addr %s24, 64
          %s341 = scalar_lea.hbm %s2, %s340
          %s343 = sshll.u32 %s336, 4
          %s344 = int_to_ptr.vmem [resolvable:$true] %s343
          %346 = dma.hbm_to_vmem [thread:$0]  %s341, 64, %s344, %s333
        $region48: #{tpu_custom_call.1} parent=35 // pred_fallthru
          _
      $region36: #{tpu_custom_call.1} parent=5 // pred_fallthru
        _
      %p347 = scmp.le.s32.totalorder 1, %s24
      %p348 = scmp.lt.s32.totalorder %s24, 3
      %p349 = pnand %p347, %p348
      %p350 = pneg %p349
      // Predicated region
      $region49: #{tpu_custom_call.1} parent=5 // pred_check
        _
      $region50: #{tpu_custom_call.1} parent=5 // pred_check_branch
        %352 = sbr.rel (%p349) target = $region52
      $region51: #{tpu_custom_call.1} parent=5 // pred_region
        %s353 = ssub.s32 %s24, 1
        %s354 = sand.u32 %s37, 1
        %s355 = scalar_lea.sflag [#allocation3], %s354
        %s356 = sand.u32 %s37, 1
        %s357 = smul.addr %s356, 128
        %s358 = scalar_lea.vmem [#allocation2], %s357
        // Predicated region
        $region53: #{tpu_custom_call.1} parent=51 // pred_check
          %p359 = pneg %p50
        $region54: #{tpu_custom_call.1} parent=51 // pred_check_branch
          %361 = sbr.rel (%p359) target = $region56
        $region55: #{tpu_custom_call.1} parent=51 // pred_region
          %362 = dma.done %s355, 2048
        $region56: #{tpu_custom_call.1} parent=51 // pred_fallthru
          _
        %s363 = sand.u32 %s29, 1
        %s364 = scalar_lea.sflag [#allocation6], %s363
        %s365 = sand.u32 %s63, 1
        %s366 = smul.addr %s365, 64
        %s367 = scalar_lea.vmem [#allocation5], %s366
        // Predicated region
        $region57: #{tpu_custom_call.1} parent=51 // pred_check
          %p368 = pneg %p76
        $region58: #{tpu_custom_call.1} parent=51 // pred_check_branch
          %370 = sbr.rel (%p368) target = $region60
        $region59: #{tpu_custom_call.1} parent=51 // pred_region
          %371 = dma.done %s364, 1024
        $region60: #{tpu_custom_call.1} parent=51 // pred_fallthru
          _
        %s372 = sand.u32 %s29, 1
        %s373 = scalar_lea.sflag [#allocation6], %s372
        %s374 = sand.u32 %s89, 1
        %s375 = smul.addr %s374, 4
        %s376 = scalar_lea.vmem [#allocation7], %s375
        // Predicated region
        $region61: #{tpu_custom_call.1} parent=51 // pred_check
          %p377 = pneg %p102
        $region62: #{tpu_custom_call.1} parent=51 // pred_check_branch
          %379 = sbr.rel (%p377) target = $region64
        $region63: #{tpu_custom_call.1} parent=51 // pred_region
          %380 = dma.done %s373, 64
        $region64: #{tpu_custom_call.1} parent=51 // pred_fallthru
          _
        // Predicated region
        $region65: #{tpu_custom_call.1} parent=51 // pred_check
          %p381 = pneg %p123
        $region66: #{tpu_custom_call.1} parent=51 // pred_check_branch
          %383 = sbr.rel (%p381) target = $region68
        $region67: #{tpu_custom_call.1} parent=51 // pred_region
          %384 = dma.done [#allocation9], 6144
        $region68: #{tpu_custom_call.1} parent=51 // pred_fallthru
          _
        // Predicated region
        $region69: #{tpu_custom_call.1} parent=51 // pred_check
          %p385 = pneg %p186
        $region70: #{tpu_custom_call.1} parent=51 // pred_check_branch
          %387 = sbr.rel (%p385) target = $region72
        $region71: #{tpu_custom_call.1} parent=51 // pred_region
          %388 = dma.done [#allocation9], 1024
        $region72: #{tpu_custom_call.1} parent=51 // pred_fallthru
          _
        %s389 = sand.u32 %s37, 1
        %s390 = scalar_lea.sflag [#allocation3], %s389
        %s391 = sand.u32 %s37, 1
        %s392 = smul.addr %s391, 128
        %s393 = scalar_lea.vmem [#allocation2], %s392
        %p394 = pneg %p50
        %p395 = pneg %p47
        %s396 = sand.u32 %s29, 1
        %s397 = scalar_lea.sflag [#allocation6], %s396
        %s398 = sand.u32 %s63, 1
        %s399 = smul.addr %s398, 64
        %s400 = scalar_lea.vmem [#allocation5], %s399
        %p401 = pneg %p76
        %p402 = pneg %p73
        %s403 = sand.u32 %s29, 1
        %s404 = scalar_lea.sflag [#allocation6], %s403
        %s405 = sand.u32 %s89, 1
        %s406 = smul.addr %s405, 4
        %s407 = scalar_lea.vmem [#allocation7], %s406
        %p408 = pneg %p102
        %p409 = pneg %p99
        %p410 = pneg %p123
        %p411 = pneg %p120
        %p412 = pneg %p144
        %p413 = pneg %p141
        %p414 = pneg %p165
        %p415 = pneg %p162
        %p416 = pneg %p186
        %p417 = pneg %p183
        %p418 = pneg %p207
        %p419 = pneg %p204
        %p420 = pneg %p233
        %p421 = pneg %p230
        %s422 = sand.u32 %s220, 1
        %s423 = scalar_lea.sflag [#allocation4], %s422
        %s424 = sand.u32 %s220, 1
        %s425 = smul.addr %s424, 8
        %s426 = scalar_lea.vmem [#allocation11], %s425
        %v428 = vld [vmem:[%s358] sm:$0xff]
        %v429 = vld [vmem:[%s358 + $0x8] sm:$0xff]
        %v430 = vld [vmem:[%s358 + $0x10] sm:$0xff]
        %v431 = vld [vmem:[%s358 + $0x18] sm:$0xff]
        %v432 = vld [vmem:[%s358 + $0x20] sm:$0xff]
        %v433 = vld [vmem:[%s358 + $0x28] sm:$0xff]
        %v434 = vld [vmem:[%s358 + $0x30] sm:$0xff]
        %v435 = vld [vmem:[%s358 + $0x38] sm:$0xff]
        %v436 = vld [vmem:[%s358 + $0x40] sm:$0xff]
        %v437 = vld [vmem:[%s358 + $0x48] sm:$0xff]
        %v438 = vld [vmem:[%s358 + $0x50] sm:$0xff]
        %v439 = vld [vmem:[%s358 + $0x58] sm:$0xff]
        %v440 = vld [vmem:[%s358 + $0x60] sm:$0xff]
        %v441 = vld [vmem:[%s358 + $0x68] sm:$0xff]
        %v442 = vld [vmem:[%s358 + $0x70] sm:$0xff]
        %v443 = vld [vmem:[%s358 + $0x78] sm:$0xff]
        %v444 = vpack.c.bf16 %v429, %v428
        %v445 = vpack.c.bf16 %v431, %v430
        %v446 = vpack.c.bf16 %v433, %v432
        %v447 = vpack.c.bf16 %v435, %v434
        %v448 = vpack.c.bf16 %v437, %v436
        %v449 = vpack.c.bf16 %v439, %v438
        %v450 = vpack.c.bf16 %v441, %v440
        %v451 = vpack.c.bf16 %v443, %v442
        %v452 = vld [vmem:[#allocation8] sm:$0xff]
        %v453 = vld [vmem:[#allocation8 + $0x8] sm:$0xff]
        %v454 = vld [vmem:[#allocation8 + $0x10] sm:$0xff]
        %v455 = vld [vmem:[#allocation8 + $0x18] sm:$0xff]
        %v456 = vld [vmem:[#allocation8 + $0x20] sm:$0xff]
        %v457 = vld [vmem:[#allocation8 + $0x28] sm:$0xff]
        %v458 = vld [vmem:[#allocation8 + $0x30] sm:$0xff]
        %v459 = vld [vmem:[#allocation8 + $0x38] sm:$0xff]
        %v460 = vld [vmem:[#allocation8 + $0x40] sm:$0xff]
        %v461 = vld [vmem:[#allocation8 + $0x48] sm:$0xff]
        %v462 = vld [vmem:[#allocation8 + $0x50] sm:$0xff]
        %v463 = vld [vmem:[#allocation8 + $0x58] sm:$0xff]
        %v464 = vld [vmem:[#allocation8 + $0x60] sm:$0xff]
        %v465 = vld [vmem:[#allocation8 + $0x68] sm:$0xff]
        %v466 = vld [vmem:[#allocation8 + $0x70] sm:$0xff]
        %v467 = vld [vmem:[#allocation8 + $0x78] sm:$0xff]
        %v484 = vunpack.c.l.b16 %v452
        %v485 = vunpack.c.h.b16 %v452
        %v486 = vunpack.c.l.b16 %v453
        %v487 = vunpack.c.h.b16 %v453
        %v488 = vunpack.c.l.b16 %v454
        %v489 = vunpack.c.h.b16 %v454
        %v490 = vunpack.c.l.b16 %v455
        %v491 = vunpack.c.h.b16 %v455
        %v492 = vunpack.c.l.b16 %v456
        %v493 = vunpack.c.h.b16 %v456
        %v494 = vunpack.c.l.b16 %v457
        %v495 = vunpack.c.h.b16 %v457
        %v496 = vunpack.c.l.b16 %v458
        %v497 = vunpack.c.h.b16 %v458
        %v498 = vunpack.c.l.b16 %v459
        %v499 = vunpack.c.h.b16 %v459
        %v500 = vunpack.c.l.b16 %v460
        %v501 = vunpack.c.h.b16 %v460
        %v502 = vunpack.c.l.b16 %v461
        %v503 = vunpack.c.h.b16 %v461
        %v504 = vunpack.c.l.b16 %v462
        %v505 = vunpack.c.h.b16 %v462
        %v506 = vunpack.c.l.b16 %v463
        %v507 = vunpack.c.h.b16 %v463
        %v508 = vunpack.c.l.b16 %v464
        %v509 = vunpack.c.h.b16 %v464
        %v510 = vunpack.c.l.b16 %v465
        %v511 = vunpack.c.h.b16 %v465
        %v512 = vunpack.c.l.b16 %v466
        %v513 = vunpack.c.h.b16 %v466
        %v514 = vunpack.c.l.b16 %v467
        %v515 = vunpack.c.h.b16 %v467
        %v516 = vpack.c.b16 %v486, %v484
        %v517 = vpack.c.b16 %v487, %v485
        %v518 = vpack.c.b16 %v490, %v488
        %v519 = vpack.c.b16 %v491, %v489
        %v520 = vpack.c.b16 %v494, %v492
        %v521 = vpack.c.b16 %v495, %v493
        %v522 = vpack.c.b16 %v498, %v496
        %v523 = vpack.c.b16 %v499, %v497
        %v524 = vpack.c.b16 %v502, %v500
        %v525 = vpack.c.b16 %v503, %v501
        %v526 = vpack.c.b16 %v506, %v504
        %v527 = vpack.c.b16 %v507, %v505
        %v528 = vpack.c.b16 %v510, %v508
        %v529 = vpack.c.b16 %v511, %v509
        %v530 = vpack.c.b16 %v514, %v512
        %v531 = vpack.c.b16 %v515, %v513
        %548 = vmatprep.subr.bf16.mxu0 %v517
        %549 = vmatpush1.bf16.msra.mxu0 %v516
        %550 = vmatprep.subr.bf16.mxu0 %v519
        %551 = vmatpush1.bf16.msra.mxu0 %v518
        %552 = vmatprep.subr.bf16.mxu0 %v521
        %553 = vmatpush1.bf16.msra.mxu0 %v520
        %554 = vmatprep.subr.bf16.mxu0 %v523
        %555 = vmatpush1.bf16.msra.mxu0 %v522
        %556 = vmatprep.subr.bf16.mxu0 %v525
        %557 = vmatpush1.bf16.msra.mxu0 %v524
        %558 = vmatprep.subr.bf16.mxu0 %v527
        %559 = vmatpush1.bf16.msra.mxu0 %v526
        %560 = vmatprep.subr.bf16.mxu0 %v529
        %561 = vmatpush1.bf16.msra.mxu0 %v528
        %562 = vmatprep.subr.bf16.mxu0 %v531
        %563 = vmatpush1.bf16.msra.mxu0 %v530
        %564 = vmatprep.subr.bf16.mxu0 0
        %565 = vmatpush1.bf16.msra.mxu0 0
        %566 = vmatprep.subr.bf16.mxu0 0
        %567 = vmatpush1.bf16.msra.mxu0 0
        %568 = vmatprep.subr.bf16.mxu0 0
        %569 = vmatpush1.bf16.msra.mxu0 0
        %570 = vmatprep.subr.bf16.mxu0 0
        %571 = vmatpush1.bf16.msra.mxu0 0
        %572 = vmatprep.subr.bf16.mxu0 0
        %573 = vmatpush1.bf16.msra.mxu0 0
        %574 = vmatprep.subr.bf16.mxu0 0
        %575 = vmatpush1.bf16.msra.mxu0 0
        %576 = vmatprep.subr.bf16.mxu0 0
        %577 = vmatpush1.bf16.msra.mxu0 0
        %578 = vmatprep.subr.bf16.mxu0 0
        %579 = vmatpush1.bf16.msra.mxu0 0
        %580 = vmatprep.mubr.bf16.mxu0 0
        %581 = vmatmul.mubr.bf16.gmra.mrb[0].mxu0 %v444
        %v582 = vpop.f32.mrb[0].mxu0
        %v583 = vadd.f32 0.0, %v582
        %v584 = vpop.f32.mrb[0].mxu0
        %v585 = vadd.f32 0.0, %v584
        %v586 = vpop.f32.mrb[0].mxu0
        %v587 = vadd.f32 0.0, %v586
        %v588 = vpop.f32.mrb[0].mxu0
        %v589 = vadd.f32 0.0, %v588
        %590 = vmatprep.mubr.bf16.mxu0 0
        %591 = vmatmul.mubr.bf16.gmra.mrb[0].mxu0 %v445
        %v592 = vpop.f32.mrb[0].mxu0
        %v593 = vadd.f32 0.0, %v592
        %v594 = vpop.f32.mrb[0].mxu0
        %v595 = vadd.f32 0.0, %v594
        %v596 = vpop.f32.mrb[0].mxu0
        %v597 = vadd.f32 0.0, %v596
        %v598 = vpop.f32.mrb[0].mxu0
        %v599 = vadd.f32 0.0, %v598
        %600 = vmatprep.mubr.bf16.mxu0 0
        %601 = vmatmul.mubr.bf16.gmra.mrb[0].mxu0 %v446
        %v602 = vpop.f32.mrb[0].mxu0
        %v603 = vadd.f32 0.0, %v602
        %v604 = vpop.f32.mrb[0].mxu0
        %v605 = vadd.f32 0.0, %v604
        %v606 = vpop.f32.mrb[0].mxu0
        %v607 = vadd.f32 0.0, %v606
        %v608 = vpop.f32.mrb[0].mxu0
        %v609 = vadd.f32 0.0, %v608
        %610 = vmatprep.mubr.bf16.mxu0 0
        %611 = vmatmul.mubr.bf16.gmra.mrb[0].mxu0 %v447
        %v612 = vpop.f32.mrb[0].mxu0
        %v613 = vadd.f32 0.0, %v612
        %v614 = vpop.f32.mrb[0].mxu0
        %v615 = vadd.f32 0.0, %v614
        %v616 = vpop.f32.mrb[0].mxu0
        %v617 = vadd.f32 0.0, %v616
        %v618 = vpop.f32.mrb[0].mxu0
        %v619 = vadd.f32 0.0, %v618
        %620 = vmatprep.mubr.bf16.mxu0 0
        %621 = vmatmul.mubr.bf16.gmra.mrb[0].mxu0 %v448
        %v622 = vpop.f32.mrb[0].mxu0
        %v623 = vadd.f32 0.0, %v622
        %v624 = vpop.f32.mrb[0].mxu0
        %v625 = vadd.f32 0.0, %v624
        %v626 = vpop.f32.mrb[0].mxu0
        %v627 = vadd.f32 0.0, %v626
        %v628 = vpop.f32.mrb[0].mxu0
        %v629 = vadd.f32 0.0, %v628
        %630 = vmatprep.mubr.bf16.mxu0 0
        %631 = vmatmul.mubr.bf16.gmra.mrb[0].mxu0 %v449
        %v632 = vpop.f32.mrb[0].mxu0
        %v633 = vadd.f32 0.0, %v632
        %v634 = vpop.f32.mrb[0].mxu0
        %v635 = vadd.f32 0.0, %v634
        %v636 = vpop.f32.mrb[0].mxu0
        %v637 = vadd.f32 0.0, %v636
        %v638 = vpop.f32.mrb[0].mxu0
        %v639 = vadd.f32 0.0, %v638
        %640 = vmatprep.mubr.bf16.mxu0 0
        %641 = vmatmul.mubr.bf16.gmra.mrb[0].mxu0 %v450
        %v642 = vpop.f32.mrb[0].mxu0
        %v643 = vadd.f32 0.0, %v642
        %v644 = vpop.f32.mrb[0].mxu0
        %v645 = vadd.f32 0.0, %v644
        %v646 = vpop.f32.mrb[0].mxu0
        %v647 = vadd.f32 0.0, %v646
        %v648 = vpop.f32.mrb[0].mxu0
        %v649 = vadd.f32 0.0, %v648
        %650 = vmatprep.mubr.bf16.mxu0 0
        %651 = vmatmul.mubr.bf16.gmra.mrb[0].mxu0 %v451
        %v652 = vpop.f32.mrb[0].mxu0
        %v653 = vadd.f32 0.0, %v652
        %v654 = vpop.f32.mrb[0].mxu0
        %v655 = vadd.f32 0.0, %v654
        %v656 = vpop.f32.mrb[0].mxu0
        %v657 = vadd.f32 0.0, %v656
        %v658 = vpop.f32.mrb[0].mxu0
        %v659 = vadd.f32 0.0, %v658
        %660 = vdwg.mxu0
        %v661 = vpack.c.bf16 %v587, %v583
        %v662 = vpack.c.bf16 %v597, %v593
        %v663 = vpack.c.bf16 %v607, %v603
        %v664 = vpack.c.bf16 %v617, %v613
        %v665 = vpack.c.bf16 %v627, %v623
        %v666 = vpack.c.bf16 %v637, %v633
        %v667 = vpack.c.bf16 %v647, %v643
        %v668 = vpack.c.bf16 %v657, %v653
        %685 = vrot.lane.b32.xlu0 %v585, 127
        %v686 = vpop.permute.xlu0 %685
        %687 = vrot.lane.b32.xlu0 %v589, 127
        %v688 = vpop.permute.xlu0 %687
        %689 = vrot.lane.b32.xlu0 %v595, 127
        %v690 = vpop.permute.xlu0 %689
        %691 = vrot.lane.b32.xlu0 %v599, 127
        %v692 = vpop.permute.xlu0 %691
        %693 = vrot.lane.b32.xlu0 %v605, 127
        %v694 = vpop.permute.xlu0 %693
        %695 = vrot.lane.b32.xlu0 %v609, 127
        %v696 = vpop.permute.xlu0 %695
        %697 = vrot.lane.b32.xlu0 %v615, 127
        %v698 = vpop.permute.xlu0 %697
        %699 = vrot.lane.b32.xlu0 %v619, 127
        %v700 = vpop.permute.xlu0 %699
        %701 = vrot.lane.b32.xlu0 %v625, 127
        %v702 = vpop.permute.xlu0 %701
        %703 = vrot.lane.b32.xlu0 %v629, 127
        %v704 = vpop.permute.xlu0 %703
        %705 = vrot.lane.b32.xlu0 %v635, 127
        %v706 = vpop.permute.xlu0 %705
        %707 = vrot.lane.b32.xlu0 %v639, 127
        %v708 = vpop.permute.xlu0 %707
        %709 = vrot.lane.b32.xlu0 %v645, 127
        %v710 = vpop.permute.xlu0 %709
        %711 = vrot.lane.b32.xlu0 %v649, 127
        %v712 = vpop.permute.xlu0 %711
        %713 = vrot.lane.b32.xlu0 %v655, 127
        %v714 = vpop.permute.xlu0 %713
        %715 = vrot.lane.b32.xlu0 %v659, 127
        %v716 = vpop.permute.xlu0 %715
        %733 = vxpose.xlu0.b32.start [1/16] %v686, 128
        %734 = vxpose.xlu0.b32.cont [2/16] %v688, 128
        %735 = vxpose.xlu0.b32.cont [3/16] %v690, 128
        %736 = vxpose.xlu0.b32.cont [4/16] %v692, 128
        %737 = vxpose.xlu0.b32.cont [5/16] %v694, 128
        %738 = vxpose.xlu0.b32.cont [6/16] %v696, 128
        %739 = vxpose.xlu0.b32.cont [7/16] %v698, 128
        %740 = vxpose.xlu0.b32.cont [8/16] %v700, 128
        %741 = vxpose.xlu0.b32.cont [9/16] %v702, 128
        %742 = vxpose.xlu0.b32.cont [10/16] %v704, 128
        %743 = vxpose.xlu0.b32.cont [11/16] %v706, 128
        %744 = vxpose.xlu0.b32.cont [12/16] %v708, 128
        %745 = vxpose.xlu0.b32.cont [13/16] %v710, 128
        %746 = vxpose.xlu0.b32.cont [14/16] %v712, 128
        %747 = vxpose.xlu0.b32.cont [15/16] %v714, 128
        %748 = vxpose.xlu0.b32.end [16/16] %v716, 128
        %v749 = vpop.trf.xlu0
        %v750 = vpop.trf.xlu0
        %v751 = vpop.trf.xlu0
        %v752 = vpop.trf.xlu0
        %v753 = vpop.trf.xlu0
        %v754 = vpop.trf.xlu0
        %v755 = vpop.trf.xlu0
        %v756 = vpop.trf.xlu0
        %v757 = vpop.trf.xlu0
        %v758 = vpop.trf.xlu0
        %v759 = vpop.trf.xlu0
        %v760 = vpop.trf.xlu0
        %v761 = vpop.trf.xlu0
        %v762 = vpop.trf.xlu0
        %v763 = vpop.trf.xlu0
        %v764 = vpop.trf.xlu0
        %765 = vset.pattern.permute.xlu0 0
        %766 = vperm.xlu0 %765, %v585
        %v767 = vpop.permute.xlu0 %766
        %769 = vset.pattern.permute.xlu0 0
        %770 = vperm.xlu0 %769, %v589
        %v771 = vpop.permute.xlu0 %770
        %773 = vset.pattern.permute.xlu0 0
        %774 = vperm.xlu0 %773, %v595
        %v775 = vpop.permute.xlu0 %774
        %777 = vset.pattern.permute.xlu0 0
        %778 = vperm.xlu0 %777, %v599
        %v779 = vpop.permute.xlu0 %778
        %781 = vset.pattern.permute.xlu0 0
        %782 = vperm.xlu0 %781, %v605
        %v783 = vpop.permute.xlu0 %782
        %785 = vset.pattern.permute.xlu0 0
        %786 = vperm.xlu0 %785, %v609
        %v787 = vpop.permute.xlu0 %786
        %789 = vset.pattern.permute.xlu0 0
        %790 = vperm.xlu0 %789, %v615
        %v791 = vpop.permute.xlu0 %790
        %793 = vset.pattern.permute.xlu0 0
        %794 = vperm.xlu0 %793, %v619
        %v795 = vpop.permute.xlu0 %794
        %797 = vset.pattern.permute.xlu0 0
        %798 = vperm.xlu0 %797, %v625
        %v799 = vpop.permute.xlu0 %798
        %801 = vset.pattern.permute.xlu0 0
        %802 = vperm.xlu0 %801, %v629
        %v803 = vpop.permute.xlu0 %802
        %805 = vset.pattern.permute.xlu0 0
        %806 = vperm.xlu0 %805, %v635
        %v807 = vpop.permute.xlu0 %806
        %809 = vset.pattern.permute.xlu0 0
        %810 = vperm.xlu0 %809, %v639
        %v811 = vpop.permute.xlu0 %810
        %813 = vset.pattern.permute.xlu0 0
        %814 = vperm.xlu0 %813, %v645
        %v815 = vpop.permute.xlu0 %814
        %817 = vset.pattern.permute.xlu0 0
        %818 = vperm.xlu0 %817, %v649
        %v819 = vpop.permute.xlu0 %818
        %821 = vset.pattern.permute.xlu0 0
        %822 = vperm.xlu0 %821, %v655
        %v823 = vpop.permute.xlu0 %822
        %825 = vset.pattern.permute.xlu0 0
        %826 = vperm.xlu0 %825, %v659
        %v827 = vpop.permute.xlu0 %826
        %v829 = vlaneseq
        %v830 = vshrl.u32 %v829, 7
        %v831 = vsub.s32 0, %v830
        %v832 = vrot.slane %v749, %v831
        %v833 = vadd.f32 %v767, %v832
        %v834 = vadd.f32 %v771, %v832
        %v835 = vadd.f32 %v775, %v832
        %v836 = vadd.f32 %v779, %v832
        %v837 = vadd.f32 %v783, %v832
        %v838 = vadd.f32 %v787, %v832
        %v839 = vadd.f32 %v791, %v832
        %v840 = vadd.f32 %v795, %v832
        %v841 = vadd.f32 %v799, %v832
        %v842 = vadd.f32 %v803, %v832
        %v843 = vadd.f32 %v807, %v832
        %v844 = vadd.f32 %v811, %v832
        %v845 = vadd.f32 %v815, %v832
        %v846 = vadd.f32 %v819, %v832
        %v847 = vadd.f32 %v823, %v832
        %v848 = vadd.f32 %v827, %v832
        %vm849 = vcmp.gt.f32.partialorder %v833, 0.0
        %vm850 = vcmp.gt.f32.partialorder %v834, 0.0
        %vm851 = vcmp.gt.f32.partialorder %v835, 0.0
        %vm852 = vcmp.gt.f32.partialorder %v836, 0.0
        %vm853 = vcmp.gt.f32.partialorder %v837, 0.0
        %vm854 = vcmp.gt.f32.partialorder %v838, 0.0
        %vm855 = vcmp.gt.f32.partialorder %v839, 0.0
        %vm856 = vcmp.gt.f32.partialorder %v840, 0.0
        %vm857 = vcmp.gt.f32.partialorder %v841, 0.0
        %vm858 = vcmp.gt.f32.partialorder %v842, 0.0
        %vm859 = vcmp.gt.f32.partialorder %v843, 0.0
        %vm860 = vcmp.gt.f32.partialorder %v844, 0.0
        %vm861 = vcmp.gt.f32.partialorder %v845, 0.0
        %vm862 = vcmp.gt.f32.partialorder %v846, 0.0
        %vm863 = vcmp.gt.f32.partialorder %v847, 0.0
        %vm864 = vcmp.gt.f32.partialorder %v848, 0.0
        %v865 = vmul.f32 %v833, 0.2
        %v866 = vmul.f32 %v834, 0.2
        %v867 = vmul.f32 %v835, 0.2
        %v868 = vmul.f32 %v836, 0.2
        %v869 = vmul.f32 %v837, 0.2
        %v870 = vmul.f32 %v838, 0.2
        %v871 = vmul.f32 %v839, 0.2
        %v872 = vmul.f32 %v840, 0.2
        %v873 = vmul.f32 %v841, 0.2
        %v874 = vmul.f32 %v842, 0.2
        %v875 = vmul.f32 %v843, 0.2
        %v876 = vmul.f32 %v844, 0.2
        %v877 = vmul.f32 %v845, 0.2
        %v878 = vmul.f32 %v846, 0.2
        %v879 = vmul.f32 %v847, 0.2
        %v880 = vmul.f32 %v848, 0.2
        %v881 = vsel %vm849, %v833, %v865
        %v882 = vsel %vm850, %v834, %v866
        %v883 = vsel %vm851, %v835, %v867
        %v884 = vsel %vm852, %v836, %v868
        %v885 = vsel %vm853, %v837, %v869
        %v886 = vsel %vm854, %v838, %v870
        %v887 = vsel %vm855, %v839, %v871
        %v888 = vsel %vm856, %v840, %v872
        %v889 = vsel %vm857, %v841, %v873
        %v890 = vsel %vm858, %v842, %v874
        %v891 = vsel %vm859, %v843, %v875
        %v892 = vsel %vm860, %v844, %v876
        %v893 = vsel %vm861, %v845, %v877
        %v894 = vsel %vm862, %v846, %v878
        %v895 = vsel %vm863, %v847, %v879
        %v896 = vsel %vm864, %v848, %v880
        %v897 = vld [vmem:[%s367] sm:$0xf]
        %v898 = vld [vmem:[%s367 + $0x4] sm:$0xf]
        %v899 = vld [vmem:[%s367 + $0x8] sm:$0xf]
        %v900 = vld [vmem:[%s367 + $0xc] sm:$0xf]
        %v901 = vld [vmem:[%s367 + $0x10] sm:$0xf]
        %v902 = vld [vmem:[%s367 + $0x14] sm:$0xf]
        %v903 = vld [vmem:[%s367 + $0x18] sm:$0xf]
        %v904 = vld [vmem:[%s367 + $0x1c] sm:$0xf]
        %v905 = vld [vmem:[%s367 + $0x20] sm:$0xf]
        %v906 = vld [vmem:[%s367 + $0x24] sm:$0xf]
        %v907 = vld [vmem:[%s367 + $0x28] sm:$0xf]
        %v908 = vld [vmem:[%s367 + $0x2c] sm:$0xf]
        %v909 = vld [vmem:[%s367 + $0x30] sm:$0xf]
        %v910 = vld [vmem:[%s367 + $0x34] sm:$0xf]
        %v911 = vld [vmem:[%s367 + $0x38] sm:$0xf]
        %v912 = vld [vmem:[%s367 + $0x3c] sm:$0xf]
        %v913 = vunpack.c.l.bf16 %v897
        %v914 = vunpack.c.l.bf16 %v898
        %v915 = vunpack.c.l.bf16 %v899
        %v916 = vunpack.c.l.bf16 %v900
        %v917 = vunpack.c.l.bf16 %v901
        %v918 = vunpack.c.l.bf16 %v902
        %v919 = vunpack.c.l.bf16 %v903
        %v920 = vunpack.c.l.bf16 %v904
        %v921 = vunpack.c.l.bf16 %v905
        %v922 = vunpack.c.l.bf16 %v906
        %v923 = vunpack.c.l.bf16 %v907
        %v924 = vunpack.c.l.bf16 %v908
        %v925 = vunpack.c.l.bf16 %v909
        %v926 = vunpack.c.l.bf16 %v910
        %v927 = vunpack.c.l.bf16 %v911
        %v928 = vunpack.c.l.bf16 %v912
        %v929 = vadd.f32 %v881, %v913
        %v930 = vadd.f32 %v882, %v914
        %v931 = vadd.f32 %v883, %v915
        %v932 = vadd.f32 %v884, %v916
        %v933 = vadd.f32 %v885, %v917
        %v934 = vadd.f32 %v886, %v918
        %v935 = vadd.f32 %v887, %v919
        %v936 = vadd.f32 %v888, %v920
        %v937 = vadd.f32 %v889, %v921
        %v938 = vadd.f32 %v890, %v922
        %v939 = vadd.f32 %v891, %v923
        %v940 = vadd.f32 %v892, %v924
        %v941 = vadd.f32 %v893, %v925
        %v942 = vadd.f32 %v894, %v926
        %v943 = vadd.f32 %v895, %v927
        %v944 = vadd.f32 %v896, %v928
        %945 = vmax.xlane.f32.xlu0 %v929
        %v946 = vpop.xlane.xlu0 %945
        %947 = vmax.xlane.f32.xlu0 %v930
        %v948 = vpop.xlane.xlu0 %947
        %949 = vmax.xlane.f32.xlu0 %v931
        %v950 = vpop.xlane.xlu0 %949
        %951 = vmax.xlane.f32.xlu0 %v932
        %v952 = vpop.xlane.xlu0 %951
        %953 = vmax.xlane.f32.xlu0 %v933
        %v954 = vpop.xlane.xlu0 %953
        %955 = vmax.xlane.f32.xlu0 %v934
        %v956 = vpop.xlane.xlu0 %955
        %957 = vmax.xlane.f32.xlu0 %v935
        %v958 = vpop.xlane.xlu0 %957
        %959 = vmax.xlane.f32.xlu0 %v936
        %v960 = vpop.xlane.xlu0 %959
        %961 = vmax.xlane.f32.xlu0 %v937
        %v962 = vpop.xlane.xlu0 %961
        %963 = vmax.xlane.f32.xlu0 %v938
        %v964 = vpop.xlane.xlu0 %963
        %965 = vmax.xlane.f32.xlu0 %v939
        %v966 = vpop.xlane.xlu0 %965
        %967 = vmax.xlane.f32.xlu0 %v940
        %v968 = vpop.xlane.xlu0 %967
        %969 = vmax.xlane.f32.xlu0 %v941
        %v970 = vpop.xlane.xlu0 %969
        %971 = vmax.xlane.f32.xlu0 %v942
        %v972 = vpop.xlane.xlu0 %971
        %973 = vmax.xlane.f32.xlu0 %v943
        %v974 = vpop.xlane.xlu0 %973
        %975 = vmax.xlane.f32.xlu0 %v944
        %v976 = vpop.xlane.xlu0 %975
        %v977 = vsub.f32 %v929, %v946
        %v978 = vsub.f32 %v930, %v948
        %v979 = vsub.f32 %v931, %v950
        %v980 = vsub.f32 %v932, %v952
        %v981 = vsub.f32 %v933, %v954
        %v982 = vsub.f32 %v934, %v956
        %v983 = vsub.f32 %v935, %v958
        %v984 = vsub.f32 %v936, %v960
        %v985 = vsub.f32 %v937, %v962
        %v986 = vsub.f32 %v938, %v964
        %v987 = vsub.f32 %v939, %v966
        %v988 = vsub.f32 %v940, %v968
        %v989 = vsub.f32 %v941, %v970
        %v990 = vsub.f32 %v942, %v972
        %v991 = vsub.f32 %v943, %v974
        %v992 = vsub.f32 %v944, %v976
        %v993 = vmul.f32 %v977, 1.442695
        %v994 = vpow.pop %v993
        %v995 = vmul.f32 %v978, 1.442695
        %v996 = vpow.pop %v995
        %v997 = vmul.f32 %v979, 1.442695
        %v998 = vpow.pop %v997
        %v999 = vmul.f32 %v980, 1.442695
        %v1000 = vpow.pop %v999
        %v1001 = vmul.f32 %v981, 1.442695
        %v1002 = vpow.pop %v1001
        %v1003 = vmul.f32 %v982, 1.442695
        %v1004 = vpow.pop %v1003
        %v1005 = vmul.f32 %v983, 1.442695
        %v1006 = vpow.pop %v1005
        %v1007 = vmul.f32 %v984, 1.442695
        %v1008 = vpow.pop %v1007
        %v1009 = vmul.f32 %v985, 1.442695
        %v1010 = vpow.pop %v1009
        %v1011 = vmul.f32 %v986, 1.442695
        %v1012 = vpow.pop %v1011
        %v1013 = vmul.f32 %v987, 1.442695
        %v1014 = vpow.pop %v1013
        %v1015 = vmul.f32 %v988, 1.442695
        %v1016 = vpow.pop %v1015
        %v1017 = vmul.f32 %v989, 1.442695
        %v1018 = vpow.pop %v1017
        %v1019 = vmul.f32 %v990, 1.442695
        %v1020 = vpow.pop %v1019
        %v1021 = vmul.f32 %v991, 1.442695
        %v1022 = vpow.pop %v1021
        %v1023 = vmul.f32 %v992, 1.442695
        %v1024 = vpow.pop %v1023
        %1025 = vadd.xlane.f32.xlu0 %v994
        %v1026 = vpop.xlane.xlu0 %1025
        %1027 = vadd.xlane.f32.xlu0 %v996
        %v1028 = vpop.xlane.xlu0 %1027
        %1029 = vadd.xlane.f32.xlu0 %v998
        %v1030 = vpop.xlane.xlu0 %1029
        %1031 = vadd.xlane.f32.xlu0 %v1000
        %v1032 = vpop.xlane.xlu0 %1031
        %1033 = vadd.xlane.f32.xlu0 %v1002
        %v1034 = vpop.xlane.xlu0 %1033
        %1035 = vadd.xlane.f32.xlu0 %v1004
        %v1036 = vpop.xlane.xlu0 %1035
        %1037 = vadd.xlane.f32.xlu0 %v1006
        %v1038 = vpop.xlane.xlu0 %1037
        %1039 = vadd.xlane.f32.xlu0 %v1008
        %v1040 = vpop.xlane.xlu0 %1039
        %1041 = vadd.xlane.f32.xlu0 %v1010
        %v1042 = vpop.xlane.xlu0 %1041
        %1043 = vadd.xlane.f32.xlu0 %v1012
        %v1044 = vpop.xlane.xlu0 %1043
        %1045 = vadd.xlane.f32.xlu0 %v1014
        %v1046 = vpop.xlane.xlu0 %1045
        %1047 = vadd.xlane.f32.xlu0 %v1016
        %v1048 = vpop.xlane.xlu0 %1047
        %1049 = vadd.xlane.f32.xlu0 %v1018
        %v1050 = vpop.xlane.xlu0 %1049
        %1051 = vadd.xlane.f32.xlu0 %v1020
        %v1052 = vpop.xlane.xlu0 %1051
        %1053 = vadd.xlane.f32.xlu0 %v1022
        %v1054 = vpop.xlane.xlu0 %1053
        %1055 = vadd.xlane.f32.xlu0 %v1024
        %v1056 = vpop.xlane.xlu0 %1055
        %v1057 = vrcp.pop %v1026
        %v1058 = vrcp.pop %v1028
        %v1059 = vrcp.pop %v1030
        %v1060 = vrcp.pop %v1032
        %v1061 = vrcp.pop %v1034
        %v1062 = vrcp.pop %v1036
        %v1063 = vrcp.pop %v1038
        %v1064 = vrcp.pop %v1040
        %v1065 = vrcp.pop %v1042
        %v1066 = vrcp.pop %v1044
        %v1067 = vrcp.pop %v1046
        %v1068 = vrcp.pop %v1048
        %v1069 = vrcp.pop %v1050
        %v1070 = vrcp.pop %v1052
        %v1071 = vrcp.pop %v1054
        %v1072 = vrcp.pop %v1056
        %v1073 = vmul.f32 %v994, %v1057
        %v1074 = vmul.f32 %v996, %v1058
        %v1075 = vmul.f32 %v998, %v1059
        %v1076 = vmul.f32 %v1000, %v1060
        %v1077 = vmul.f32 %v1002, %v1061
        %v1078 = vmul.f32 %v1004, %v1062
        %v1079 = vmul.f32 %v1006, %v1063
        %v1080 = vmul.f32 %v1008, %v1064
        %v1081 = vmul.f32 %v1010, %v1065
        %v1082 = vmul.f32 %v1012, %v1066
        %v1083 = vmul.f32 %v1014, %v1067
        %v1084 = vmul.f32 %v1016, %v1068
        %v1085 = vmul.f32 %v1018, %v1069
        %v1086 = vmul.f32 %v1020, %v1070
        %v1087 = vmul.f32 %v1022, %v1071
        %v1088 = vmul.f32 %v1024, %v1072
        %v1089 = vpack.c.bf16 %v1074, %v1073
        %v1090 = vpack.c.bf16 %v1076, %v1075
        %v1091 = vpack.c.bf16 %v1078, %v1077
        %v1092 = vpack.c.bf16 %v1080, %v1079
        %v1093 = vpack.c.bf16 %v1082, %v1081
        %v1094 = vpack.c.bf16 %v1084, %v1083
        %v1095 = vpack.c.bf16 %v1086, %v1085
        %v1096 = vpack.c.bf16 %v1088, %v1087
        %1097 = vmatprep.subr.bf16.mxu0 0
        %1098 = vmatpush1.bf16.msra.mxu0 %v661
        %1099 = vmatprep.subr.bf16.mxu0 0
        %1100 = vmatpush1.bf16.msra.mxu0 %v662
        %1101 = vmatprep.subr.bf16.mxu0 0
        %1102 = vmatpush1.bf16.msra.mxu0 %v663
        %1103 = vmatprep.subr.bf16.mxu0 0
        %1104 = vmatpush1.bf16.msra.mxu0 %v664
        %1105 = vmatprep.subr.bf16.mxu0 0
        %1106 = vmatpush1.bf16.msra.mxu0 %v665
        %1107 = vmatprep.subr.bf16.mxu0 0
        %1108 = vmatpush1.bf16.msra.mxu0 %v666
        %1109 = vmatprep.subr.bf16.mxu0 0
        %1110 = vmatpush1.bf16.msra.mxu0 %v667
        %1111 = vmatprep.subr.bf16.mxu0 0
        %1112 = vmatpush1.bf16.msra.mxu0 %v668
        %1113 = vmatprep.subr.bf16.mxu0 0
        %1114 = vmatpush1.bf16.msra.mxu0 0
        %1115 = vmatprep.subr.bf16.mxu0 0
        %1116 = vmatpush1.bf16.msra.mxu0 0
        %1117 = vmatprep.subr.bf16.mxu0 0
        %1118 = vmatpush1.bf16.msra.mxu0 0
        %1119 = vmatprep.subr.bf16.mxu0 0
        %1120 = vmatpush1.bf16.msra.mxu0 0
        %1121 = vmatprep.subr.bf16.mxu0 0
        %1122 = vmatpush1.bf16.msra.mxu0 0
        %1123 = vmatprep.subr.bf16.mxu0 0
        %1124 = vmatpush1.bf16.msra.mxu0 0
        %1125 = vmatprep.subr.bf16.mxu0 0
        %1126 = vmatpush1.bf16.msra.mxu0 0
        %1127 = vmatprep.subr.bf16.mxu0 0
        %1128 = vmatpush1.bf16.msra.mxu0 0
        %1129 = vmatprep.mubr.bf16.mxu0 0
        %1130 = vmatmul.mubr.bf16.gmra.mrb[0].mxu0 %v1089
        %v1131 = vpop.f32.mrb[0].mxu0
        %v1132 = vadd.f32 0.0, %v1131
        %v1133 = vpop.f32.mrb[0].mxu0
        %v1134 = vpop.f32.mrb[0].mxu0
        %v1135 = vadd.f32 0.0, %v1134
        %v1136 = vpop.f32.mrb[0].mxu0
        %1137 = vmatprep.mubr.bf16.mxu0 0
        %1138 = vmatmul.mubr.bf16.gmra.mrb[0].mxu0 %v1090
        %v1139 = vpop.f32.mrb[0].mxu0
        %v1140 = vadd.f32 0.0, %v1139
        %v1141 = vpop.f32.mrb[0].mxu0
        %v1142 = vpop.f32.mrb[0].mxu0
        %v1143 = vadd.f32 0.0, %v1142
        %v1144 = vpop.f32.mrb[0].mxu0
        %1145 = vmatprep.mubr.bf16.mxu0 0
        %1146 = vmatmul.mubr.bf16.gmra.mrb[0].mxu0 %v1091
        %v1147 = vpop.f32.mrb[0].mxu0
        %v1148 = vadd.f32 0.0, %v1147
        %v1149 = vpop.f32.mrb[0].mxu0
        %v1150 = vpop.f32.mrb[0].mxu0
        %v1151 = vadd.f32 0.0, %v1150
        %v1152 = vpop.f32.mrb[0].mxu0
        %1153 = vmatprep.mubr.bf16.mxu0 0
        %1154 = vmatmul.mubr.bf16.gmra.mrb[0].mxu0 %v1092
        %v1155 = vpop.f32.mrb[0].mxu0
        %v1156 = vadd.f32 0.0, %v1155
        %v1157 = vpop.f32.mrb[0].mxu0
        %v1158 = vpop.f32.mrb[0].mxu0
        %v1159 = vadd.f32 0.0, %v1158
        %v1160 = vpop.f32.mrb[0].mxu0
        %1161 = vmatprep.mubr.bf16.mxu0 0
        %1162 = vmatmul.mubr.bf16.gmra.mrb[0].mxu0 %v1093
        %v1163 = vpop.f32.mrb[0].mxu0
        %v1164 = vadd.f32 0.0, %v1163
        %v1165 = vpop.f32.mrb[0].mxu0
        %v1166 = vpop.f32.mrb[0].mxu0
        %v1167 = vadd.f32 0.0, %v1166
        %v1168 = vpop.f32.mrb[0].mxu0
        %1169 = vmatprep.mubr.bf16.mxu0 0
        %1170 = vmatmul.mubr.bf16.gmra.mrb[0].mxu0 %v1094
        %v1171 = vpop.f32.mrb[0].mxu0
        %v1172 = vadd.f32 0.0, %v1171
        %v1173 = vpop.f32.mrb[0].mxu0
        %v1174 = vpop.f32.mrb[0].mxu0
        %v1175 = vadd.f32 0.0, %v1174
        %v1176 = vpop.f32.mrb[0].mxu0
        %1177 = vmatprep.mubr.bf16.mxu0 0
        %1178 = vmatmul.mubr.bf16.gmra.mrb[0].mxu0 %v1095
        %v1179 = vpop.f32.mrb[0].mxu0
        %v1180 = vadd.f32 0.0, %v1179
        %v1181 = vpop.f32.mrb[0].mxu0
        %v1182 = vpop.f32.mrb[0].mxu0
        %v1183 = vadd.f32 0.0, %v1182
        %v1184 = vpop.f32.mrb[0].mxu0
        %1185 = vmatprep.mubr.bf16.mxu0 0
        %1186 = vmatmul.mubr.bf16.gmra.mrb[0].mxu0 %v1096
        %v1187 = vpop.f32.mrb[0].mxu0
        %v1188 = vadd.f32 0.0, %v1187
        %v1189 = vpop.f32.mrb[0].mxu0
        %v1190 = vpop.f32.mrb[0].mxu0
        %v1191 = vadd.f32 0.0, %v1190
        %v1192 = vpop.f32.mrb[0].mxu0
        %1193 = vdwg.mxu0
        %v1194 = vld [vmem:[%s4] sm:$0x1]
        %v1196 = vlaneseq
        %v1197 = vshrl.u32 %v1196, 7
        %v1198 = vsub.s32 0, %v1197
        %v1199 = vrot.slane %v1194, %v1198
        %v1201 = vmul.f32 %v1132, %v1199
        %v1202 = vmul.f32 %v1135, %v1199
        %v1203 = vmul.f32 %v1140, %v1199
        %v1204 = vmul.f32 %v1143, %v1199
        %v1205 = vmul.f32 %v1148, %v1199
        %v1206 = vmul.f32 %v1151, %v1199
        %v1207 = vmul.f32 %v1156, %v1199
        %v1208 = vmul.f32 %v1159, %v1199
        %v1209 = vmul.f32 %v1164, %v1199
        %v1210 = vmul.f32 %v1167, %v1199
        %v1211 = vmul.f32 %v1172, %v1199
        %v1212 = vmul.f32 %v1175, %v1199
        %v1213 = vmul.f32 %v1180, %v1199
        %v1214 = vmul.f32 %v1183, %v1199
        %v1215 = vmul.f32 %v1188, %v1199
        %v1216 = vmul.f32 %v1191, %v1199
        %v1217 = vld [vmem:[%s5] sm:$0x1]
        %v1219 = vlaneseq
        %v1220 = vshrl.u32 %v1219, 7
        %v1221 = vsub.s32 0, %v1220
        %v1222 = vrot.slane %v1217, %v1221
        %v1224 = vadd.f32 %v1201, %v1222
        %v1225 = vadd.f32 %v1202, %v1222
        %v1226 = vadd.f32 %v1203, %v1222
        %v1227 = vadd.f32 %v1204, %v1222
        %v1228 = vadd.f32 %v1205, %v1222
        %v1229 = vadd.f32 %v1206, %v1222
        %v1230 = vadd.f32 %v1207, %v1222
        %v1231 = vadd.f32 %v1208, %v1222
        %v1232 = vadd.f32 %v1209, %v1222
        %v1233 = vadd.f32 %v1210, %v1222
        %v1234 = vadd.f32 %v1211, %v1222
        %v1235 = vadd.f32 %v1212, %v1222
        %v1236 = vadd.f32 %v1213, %v1222
        %v1237 = vadd.f32 %v1214, %v1222
        %v1238 = vadd.f32 %v1215, %v1222
        %v1239 = vadd.f32 %v1216, %v1222
        %v1240 = vmax.f32 %v1224, 0.0
        %v1241 = vmax.f32 %v1225, 0.0
        %v1242 = vmax.f32 %v1226, 0.0
        %v1243 = vmax.f32 %v1227, 0.0
        %v1244 = vmax.f32 %v1228, 0.0
        %v1245 = vmax.f32 %v1229, 0.0
        %v1246 = vmax.f32 %v1230, 0.0
        %v1247 = vmax.f32 %v1231, 0.0
        %v1248 = vmax.f32 %v1232, 0.0
        %v1249 = vmax.f32 %v1233, 0.0
        %v1250 = vmax.f32 %v1234, 0.0
        %v1251 = vmax.f32 %v1235, 0.0
        %v1252 = vmax.f32 %v1236, 0.0
        %v1253 = vmax.f32 %v1237, 0.0
        %v1254 = vmax.f32 %v1238, 0.0
        %v1255 = vmax.f32 %v1239, 0.0
        %v1256 = vpack.c.bf16 %v1241, %v1240
        %v1257 = vpack.c.bf16 %v1243, %v1242
        %v1258 = vpack.c.bf16 %v1245, %v1244
        %v1259 = vpack.c.bf16 %v1247, %v1246
        %v1260 = vpack.c.bf16 %v1249, %v1248
        %v1261 = vpack.c.bf16 %v1251, %v1250
        %v1262 = vpack.c.bf16 %v1253, %v1252
        %v1263 = vpack.c.bf16 %v1255, %v1254
        %s1264 = scalar_lea.vmem [#allocation8], 128
        %v1265 = vld [vmem:[%s1264] sm:$0xff]
        %v1266 = vld [vmem:[%s1264 + $0x8] sm:$0xff]
        %v1267 = vld [vmem:[%s1264 + $0x10] sm:$0xff]
        %v1268 = vld [vmem:[%s1264 + $0x18] sm:$0xff]
        %v1269 = vld [vmem:[%s1264 + $0x20] sm:$0xff]
        %v1270 = vld [vmem:[%s1264 + $0x28] sm:$0xff]
        %v1271 = vld [vmem:[%s1264 + $0x30] sm:$0xff]
        %v1272 = vld [vmem:[%s1264 + $0x38] sm:$0xff]
        %v1273 = vld [vmem:[%s1264 + $0x40] sm:$0xff]
        %v1274 = vld [vmem:[%s1264 + $0x48] sm:$0xff]
        %v1275 = vld [vmem:[%s1264 + $0x50] sm:$0xff]
        %v1276 = vld [vmem:[%s1264 + $0x58] sm:$0xff]
        %v1277 = vld [vmem:[%s1264 + $0x60] sm:$0xff]
        %v1278 = vld [vmem:[%s1264 + $0x68] sm:$0xff]
        %v1279 = vld [vmem:[%s1264 + $0x70] sm:$0xff]
        %v1280 = vld [vmem:[%s1264 + $0x78] sm:$0xff]
        %v1297 = vunpack.c.l.b16 %v1265
        %v1298 = vunpack.c.h.b16 %v1265
        %v1299 = vunpack.c.l.b16 %v1266
        %v1300 = vunpack.c.h.b16 %v1266
        %v1301 = vunpack.c.l.b16 %v1267
        %v1302 = vunpack.c.h.b16 %v1267
        %v1303 = vunpack.c.l.b16 %v1268
        %v1304 = vunpack.c.h.b16 %v1268
        %v1305 = vunpack.c.l.b16 %v1269
        %v1306 = vunpack.c.h.b16 %v1269
        %v1307 = vunpack.c.l.b16 %v1270
        %v1308 = vunpack.c.h.b16 %v1270
        %v1309 = vunpack.c.l.b16 %v1271
        %v1310 = vunpack.c.h.b16 %v1271
        %v1311 = vunpack.c.l.b16 %v1272
        %v1312 = vunpack.c.h.b16 %v1272
        %v1313 = vunpack.c.l.b16 %v1273
        %v1314 = vunpack.c.h.b16 %v1273
        %v1315 = vunpack.c.l.b16 %v1274
        %v1316 = vunpack.c.h.b16 %v1274
        %v1317 = vunpack.c.l.b16 %v1275
        %v1318 = vunpack.c.h.b16 %v1275
        %v1319 = vunpack.c.l.b16 %v1276
        %v1320 = vunpack.c.h.b16 %v1276
        %v1321 = vunpack.c.l.b16 %v1277
        %v1322 = vunpack.c.h.b16 %v1277
        %v1323 = vunpack.c.l.b16 %v1278
        %v1324 = vunpack.c.h.b16 %v1278
        %v1325 = vunpack.c.l.b16 %v1279
        %v1326 = vunpack.c.h.b16 %v1279
        %v1327 = vunpack.c.l.b16 %v1280
        %v1328 = vunpack.c.h.b16 %v1280
        %v1329 = vpack.c.b16 %v1299, %v1297
        %v1330 = vpack.c.b16 %v1300, %v1298
        %v1331 = vpack.c.b16 %v1303, %v1301
        %v1332 = vpack.c.b16 %v1304, %v1302
        %v1333 = vpack.c.b16 %v1307, %v1305
        %v1334 = vpack.c.b16 %v1308, %v1306
        %v1335 = vpack.c.b16 %v1311, %v1309
        %v1336 = vpack.c.b16 %v1312, %v1310
        %v1337 = vpack.c.b16 %v1315, %v1313
        %v1338 = vpack.c.b16 %v1316, %v1314
        %v1339 = vpack.c.b16 %v1319, %v1317
        %v1340 = vpack.c.b16 %v1320, %v1318
        %v1341 = vpack.c.b16 %v1323, %v1321
        %v1342 = vpack.c.b16 %v1324, %v1322
        %v1343 = vpack.c.b16 %v1327, %v1325
        %v1344 = vpack.c.b16 %v1328, %v1326
        %1361 = vmatprep.subr.bf16.mxu0 %v1330
        %1362 = vmatpush1.bf16.msra.mxu0 %v1329
        %1363 = vmatprep.subr.bf16.mxu0 %v1332
        %1364 = vmatpush1.bf16.msra.mxu0 %v1331
        %1365 = vmatprep.subr.bf16.mxu0 %v1334
        %1366 = vmatpush1.bf16.msra.mxu0 %v1333
        %1367 = vmatprep.subr.bf16.mxu0 %v1336
        %1368 = vmatpush1.bf16.msra.mxu0 %v1335
        %1369 = vmatprep.subr.bf16.mxu0 %v1338
        %1370 = vmatpush1.bf16.msra.mxu0 %v1337
        %1371 = vmatprep.subr.bf16.mxu0 %v1340
        %1372 = vmatpush1.bf16.msra.mxu0 %v1339
        %1373 = vmatprep.subr.bf16.mxu0 %v1342
        %1374 = vmatpush1.bf16.msra.mxu0 %v1341
        %1375 = vmatprep.subr.bf16.mxu0 %v1344
        %1376 = vmatpush1.bf16.msra.mxu0 %v1343
        %1377 = vmatprep.subr.bf16.mxu0 0
        %1378 = vmatpush1.bf16.msra.mxu0 0
        %1379 = vmatprep.subr.bf16.mxu0 0
        %1380 = vmatpush1.bf16.msra.mxu0 0
        %1381 = vmatprep.subr.bf16.mxu0 0
        %1382 = vmatpush1.bf16.msra.mxu0 0
        %1383 = vmatprep.subr.bf16.mxu0 0
        %1384 = vmatpush1.bf16.msra.mxu0 0
        %1385 = vmatprep.subr.bf16.mxu0 0
        %1386 = vmatpush1.bf16.msra.mxu0 0
        %1387 = vmatprep.subr.bf16.mxu0 0
        %1388 = vmatpush1.bf16.msra.mxu0 0
        %1389 = vmatprep.subr.bf16.mxu0 0
        %1390 = vmatpush1.bf16.msra.mxu0 0
        %1391 = vmatprep.subr.bf16.mxu0 0
        %1392 = vmatpush1.bf16.msra.mxu0 0
        %1393 = vmatprep.mubr.bf16.mxu0 0
        %1394 = vmatmul.mubr.bf16.gmra.mrb[0].mxu0 %v1256
        %v1395 = vpop.f32.mrb[0].mxu0
        %v1396 = vadd.f32 0.0, %v1395
        %v1397 = vpop.f32.mrb[0].mxu0
        %v1398 = vadd.f32 0.0, %v1397
        %v1399 = vpop.f32.mrb[0].mxu0
        %v1400 = vadd.f32 0.0, %v1399
        %v1401 = vpop.f32.mrb[0].mxu0
        %v1402 = vadd.f32 0.0, %v1401
        %1403 = vmatprep.mubr.bf16.mxu0 0
        %1404 = vmatmul.mubr.bf16.gmra.mrb[0].mxu0 %v1257
        %v1405 = vpop.f32.mrb[0].mxu0
        %v1406 = vadd.f32 0.0, %v1405
        %v1407 = vpop.f32.mrb[0].mxu0
        %v1408 = vadd.f32 0.0, %v1407
        %v1409 = vpop.f32.mrb[0].mxu0
        %v1410 = vadd.f32 0.0, %v1409
        %v1411 = vpop.f32.mrb[0].mxu0
        %v1412 = vadd.f32 0.0, %v1411
        %1413 = vmatprep.mubr.bf16.mxu0 0
        %1414 = vmatmul.mubr.bf16.gmra.mrb[0].mxu0 %v1258
        %v1415 = vpop.f32.mrb[0].mxu0
        %v1416 = vadd.f32 0.0, %v1415
        %v1417 = vpop.f32.mrb[0].mxu0
        %v1418 = vadd.f32 0.0, %v1417
        %v1419 = vpop.f32.mrb[0].mxu0
        %v1420 = vadd.f32 0.0, %v1419
        %v1421 = vpop.f32.mrb[0].mxu0
        %v1422 = vadd.f32 0.0, %v1421
        %1423 = vmatprep.mubr.bf16.mxu0 0
        %1424 = vmatmul.mubr.bf16.gmra.mrb[0].mxu0 %v1259
        %v1425 = vpop.f32.mrb[0].mxu0
        %v1426 = vadd.f32 0.0, %v1425
        %v1427 = vpop.f32.mrb[0].mxu0
        %v1428 = vadd.f32 0.0, %v1427
        %v1429 = vpop.f32.mrb[0].mxu0
        %v1430 = vadd.f32 0.0, %v1429
        %v1431 = vpop.f32.mrb[0].mxu0
        %v1432 = vadd.f32 0.0, %v1431
        %1433 = vmatprep.mubr.bf16.mxu0 0
        %1434 = vmatmul.mubr.bf16.gmra.mrb[0].mxu0 %v1260
        %v1435 = vpop.f32.mrb[0].mxu0
        %v1436 = vadd.f32 0.0, %v1435
        %v1437 = vpop.f32.mrb[0].mxu0
        %v1438 = vadd.f32 0.0, %v1437
        %v1439 = vpop.f32.mrb[0].mxu0
        %v1440 = vadd.f32 0.0, %v1439
        %v1441 = vpop.f32.mrb[0].mxu0
        %v1442 = vadd.f32 0.0, %v1441
        %1443 = vmatprep.mubr.bf16.mxu0 0
        %1444 = vmatmul.mubr.bf16.gmra.mrb[0].mxu0 %v1261
        %v1445 = vpop.f32.mrb[0].mxu0
        %v1446 = vadd.f32 0.0, %v1445
        %v1447 = vpop.f32.mrb[0].mxu0
        %v1448 = vadd.f32 0.0, %v1447
        %v1449 = vpop.f32.mrb[0].mxu0
        %v1450 = vadd.f32 0.0, %v1449
        %v1451 = vpop.f32.mrb[0].mxu0
        %v1452 = vadd.f32 0.0, %v1451
        %1453 = vmatprep.mubr.bf16.mxu0 0
        %1454 = vmatmul.mubr.bf16.gmra.mrb[0].mxu0 %v1262
        %v1455 = vpop.f32.mrb[0].mxu0
        %v1456 = vadd.f32 0.0, %v1455
        %v1457 = vpop.f32.mrb[0].mxu0
        %v1458 = vadd.f32 0.0, %v1457
        %v1459 = vpop.f32.mrb[0].mxu0
        %v1460 = vadd.f32 0.0, %v1459
        %v1461 = vpop.f32.mrb[0].mxu0
        %v1462 = vadd.f32 0.0, %v1461
        %1463 = vmatprep.mubr.bf16.mxu0 0
        %1464 = vmatmul.mubr.bf16.gmra.mrb[0].mxu0 %v1263
        %v1465 = vpop.f32.mrb[0].mxu0
        %v1466 = vadd.f32 0.0, %v1465
        %v1467 = vpop.f32.mrb[0].mxu0
        %v1468 = vadd.f32 0.0, %v1467
        %v1469 = vpop.f32.mrb[0].mxu0
        %v1470 = vadd.f32 0.0, %v1469
        %v1471 = vpop.f32.mrb[0].mxu0
        %v1472 = vadd.f32 0.0, %v1471
        %1473 = vdwg.mxu0
        %v1474 = vpack.c.bf16 %v1400, %v1396
        %v1475 = vpack.c.bf16 %v1410, %v1406
        %v1476 = vpack.c.bf16 %v1420, %v1416
        %v1477 = vpack.c.bf16 %v1430, %v1426
        %v1478 = vpack.c.bf16 %v1440, %v1436
        %v1479 = vpack.c.bf16 %v1450, %v1446
        %v1480 = vpack.c.bf16 %v1460, %v1456
        %v1481 = vpack.c.bf16 %v1470, %v1466
        %1498 = vrot.lane.b32.xlu0 %v1398, 127
        %v1499 = vpop.permute.xlu0 %1498
        %1500 = vrot.lane.b32.xlu0 %v1402, 127
        %v1501 = vpop.permute.xlu0 %1500
        %1502 = vrot.lane.b32.xlu0 %v1408, 127
        %v1503 = vpop.permute.xlu0 %1502
        %1504 = vrot.lane.b32.xlu0 %v1412, 127
        %v1505 = vpop.permute.xlu0 %1504
        %1506 = vrot.lane.b32.xlu0 %v1418, 127
        %v1507 = vpop.permute.xlu0 %1506
        %1508 = vrot.lane.b32.xlu0 %v1422, 127
        %v1509 = vpop.permute.xlu0 %1508
        %1510 = vrot.lane.b32.xlu0 %v1428, 127
        %v1511 = vpop.permute.xlu0 %1510
        %1512 = vrot.lane.b32.xlu0 %v1432, 127
        %v1513 = vpop.permute.xlu0 %1512
        %1514 = vrot.lane.b32.xlu0 %v1438, 127
        %v1515 = vpop.permute.xlu0 %1514
        %1516 = vrot.lane.b32.xlu0 %v1442, 127
        %v1517 = vpop.permute.xlu0 %1516
        %1518 = vrot.lane.b32.xlu0 %v1448, 127
        %v1519 = vpop.permute.xlu0 %1518
        %1520 = vrot.lane.b32.xlu0 %v1452, 127
        %v1521 = vpop.permute.xlu0 %1520
        %1522 = vrot.lane.b32.xlu0 %v1458, 127
        %v1523 = vpop.permute.xlu0 %1522
        %1524 = vrot.lane.b32.xlu0 %v1462, 127
        %v1525 = vpop.permute.xlu0 %1524
        %1526 = vrot.lane.b32.xlu0 %v1468, 127
        %v1527 = vpop.permute.xlu0 %1526
        %1528 = vrot.lane.b32.xlu0 %v1472, 127
        %v1529 = vpop.permute.xlu0 %1528
        %1546 = vxpose.xlu0.b32.start [1/16] %v1499, 128
        %1547 = vxpose.xlu0.b32.cont [2/16] %v1501, 128
        %1548 = vxpose.xlu0.b32.cont [3/16] %v1503, 128
        %1549 = vxpose.xlu0.b32.cont [4/16] %v1505, 128
        %1550 = vxpose.xlu0.b32.cont [5/16] %v1507, 128
        %1551 = vxpose.xlu0.b32.cont [6/16] %v1509, 128
        %1552 = vxpose.xlu0.b32.cont [7/16] %v1511, 128
        %1553 = vxpose.xlu0.b32.cont [8/16] %v1513, 128
        %1554 = vxpose.xlu0.b32.cont [9/16] %v1515, 128
        %1555 = vxpose.xlu0.b32.cont [10/16] %v1517, 128
        %1556 = vxpose.xlu0.b32.cont [11/16] %v1519, 128
        %1557 = vxpose.xlu0.b32.cont [12/16] %v1521, 128
        %1558 = vxpose.xlu0.b32.cont [13/16] %v1523, 128
        %1559 = vxpose.xlu0.b32.cont [14/16] %v1525, 128
        %1560 = vxpose.xlu0.b32.cont [15/16] %v1527, 128
        %1561 = vxpose.xlu0.b32.end [16/16] %v1529, 128
        %v1562 = vpop.trf.xlu0
        %v1563 = vpop.trf.xlu0
        %v1564 = vpop.trf.xlu0
        %v1565 = vpop.trf.xlu0
        %v1566 = vpop.trf.xlu0
        %v1567 = vpop.trf.xlu0
        %v1568 = vpop.trf.xlu0
        %v1569 = vpop.trf.xlu0
        %v1570 = vpop.trf.xlu0
        %v1571 = vpop.trf.xlu0
        %v1572 = vpop.trf.xlu0
        %v1573 = vpop.trf.xlu0
        %v1574 = vpop.trf.xlu0
        %v1575 = vpop.trf.xlu0
        %v1576 = vpop.trf.xlu0
        %v1577 = vpop.trf.xlu0
        %1578 = vset.pattern.permute.xlu0 0
        %1579 = vperm.xlu0 %1578, %v1398
        %v1580 = vpop.permute.xlu0 %1579
        %1582 = vset.pattern.permute.xlu0 0
        %1583 = vperm.xlu0 %1582, %v1402
        %v1584 = vpop.permute.xlu0 %1583
        %1586 = vset.pattern.permute.xlu0 0
        %1587 = vperm.xlu0 %1586, %v1408
        %v1588 = vpop.permute.xlu0 %1587
        %1590 = vset.pattern.permute.xlu0 0
        %1591 = vperm.xlu0 %1590, %v1412
        %v1592 = vpop.permute.xlu0 %1591
        %1594 = vset.pattern.permute.xlu0 0
        %1595 = vperm.xlu0 %1594, %v1418
        %v1596 = vpop.permute.xlu0 %1595
        %1598 = vset.pattern.permute.xlu0 0
        %1599 = vperm.xlu0 %1598, %v1422
        %v1600 = vpop.permute.xlu0 %1599
        %1602 = vset.pattern.permute.xlu0 0
        %1603 = vperm.xlu0 %1602, %v1428
        %v1604 = vpop.permute.xlu0 %1603
        %1606 = vset.pattern.permute.xlu0 0
        %1607 = vperm.xlu0 %1606, %v1432
        %v1608 = vpop.permute.xlu0 %1607
        %1610 = vset.pattern.permute.xlu0 0
        %1611 = vperm.xlu0 %1610, %v1438
        %v1612 = vpop.permute.xlu0 %1611
        %1614 = vset.pattern.permute.xlu0 0
        %1615 = vperm.xlu0 %1614, %v1442
        %v1616 = vpop.permute.xlu0 %1615
        %1618 = vset.pattern.permute.xlu0 0
        %1619 = vperm.xlu0 %1618, %v1448
        %v1620 = vpop.permute.xlu0 %1619
        %1622 = vset.pattern.permute.xlu0 0
        %1623 = vperm.xlu0 %1622, %v1452
        %v1624 = vpop.permute.xlu0 %1623
        %1626 = vset.pattern.permute.xlu0 0
        %1627 = vperm.xlu0 %1626, %v1458
        %v1628 = vpop.permute.xlu0 %1627
        %1630 = vset.pattern.permute.xlu0 0
        %1631 = vperm.xlu0 %1630, %v1462
        %v1632 = vpop.permute.xlu0 %1631
        %1634 = vset.pattern.permute.xlu0 0
        %1635 = vperm.xlu0 %1634, %v1468
        %v1636 = vpop.permute.xlu0 %1635
        %1638 = vset.pattern.permute.xlu0 0
        %1639 = vperm.xlu0 %1638, %v1472
        %v1640 = vpop.permute.xlu0 %1639
        %v1642 = vlaneseq
        %v1643 = vshrl.u32 %v1642, 7
        %v1644 = vsub.s32 0, %v1643
        %v1645 = vrot.slane %v1562, %v1644
        %v1646 = vadd.f32 %v1580, %v1645
        %v1647 = vadd.f32 %v1584, %v1645
        %v1648 = vadd.f32 %v1588, %v1645
        %v1649 = vadd.f32 %v1592, %v1645
        %v1650 = vadd.f32 %v1596, %v1645
        %v1651 = vadd.f32 %v1600, %v1645
        %v1652 = vadd.f32 %v1604, %v1645
        %v1653 = vadd.f32 %v1608, %v1645
        %v1654 = vadd.f32 %v1612, %v1645
        %v1655 = vadd.f32 %v1616, %v1645
        %v1656 = vadd.f32 %v1620, %v1645
        %v1657 = vadd.f32 %v1624, %v1645
        %v1658 = vadd.f32 %v1628, %v1645
        %v1659 = vadd.f32 %v1632, %v1645
        %v1660 = vadd.f32 %v1636, %v1645
        %v1661 = vadd.f32 %v1640, %v1645
        %vm1662 = vcmp.gt.f32.partialorder %v1646, 0.0
        %vm1663 = vcmp.gt.f32.partialorder %v1647, 0.0
        %vm1664 = vcmp.gt.f32.partialorder %v1648, 0.0
        %vm1665 = vcmp.gt.f32.partialorder %v1649, 0.0
        %vm1666 = vcmp.gt.f32.partialorder %v1650, 0.0
        %vm1667 = vcmp.gt.f32.partialorder %v1651, 0.0
        %vm1668 = vcmp.gt.f32.partialorder %v1652, 0.0
        %vm1669 = vcmp.gt.f32.partialorder %v1653, 0.0
        %vm1670 = vcmp.gt.f32.partialorder %v1654, 0.0
        %vm1671 = vcmp.gt.f32.partialorder %v1655, 0.0
        %vm1672 = vcmp.gt.f32.partialorder %v1656, 0.0
        %vm1673 = vcmp.gt.f32.partialorder %v1657, 0.0
        %vm1674 = vcmp.gt.f32.partialorder %v1658, 0.0
        %vm1675 = vcmp.gt.f32.partialorder %v1659, 0.0
        %vm1676 = vcmp.gt.f32.partialorder %v1660, 0.0
        %vm1677 = vcmp.gt.f32.partialorder %v1661, 0.0
        %v1678 = vmul.f32 %v1646, 0.2
        %v1679 = vmul.f32 %v1647, 0.2
        %v1680 = vmul.f32 %v1648, 0.2
        %v1681 = vmul.f32 %v1649, 0.2
        %v1682 = vmul.f32 %v1650, 0.2
        %v1683 = vmul.f32 %v1651, 0.2
        %v1684 = vmul.f32 %v1652, 0.2
        %v1685 = vmul.f32 %v1653, 0.2
        %v1686 = vmul.f32 %v1654, 0.2
        %v1687 = vmul.f32 %v1655, 0.2
        %v1688 = vmul.f32 %v1656, 0.2
        %v1689 = vmul.f32 %v1657, 0.2
        %v1690 = vmul.f32 %v1658, 0.2
        %v1691 = vmul.f32 %v1659, 0.2
        %v1692 = vmul.f32 %v1660, 0.2
        %v1693 = vmul.f32 %v1661, 0.2
        %v1694 = vsel %vm1662, %v1646, %v1678
        %v1695 = vsel %vm1663, %v1647, %v1679
        %v1696 = vsel %vm1664, %v1648, %v1680
        %v1697 = vsel %vm1665, %v1649, %v1681
        %v1698 = vsel %vm1666, %v1650, %v1682
        %v1699 = vsel %vm1667, %v1651, %v1683
        %v1700 = vsel %vm1668, %v1652, %v1684
        %v1701 = vsel %vm1669, %v1653, %v1685
        %v1702 = vsel %vm1670, %v1654, %v1686
        %v1703 = vsel %vm1671, %v1655, %v1687
        %v1704 = vsel %vm1672, %v1656, %v1688
        %v1705 = vsel %vm1673, %v1657, %v1689
        %v1706 = vsel %vm1674, %v1658, %v1690
        %v1707 = vsel %vm1675, %v1659, %v1691
        %v1708 = vsel %vm1676, %v1660, %v1692
        %v1709 = vsel %vm1677, %v1661, %v1693
        %v1710 = vadd.f32 %v1694, %v913
        %v1711 = vadd.f32 %v1695, %v914
        %v1712 = vadd.f32 %v1696, %v915
        %v1713 = vadd.f32 %v1697, %v916
        %v1714 = vadd.f32 %v1698, %v917
        %v1715 = vadd.f32 %v1699, %v918
        %v1716 = vadd.f32 %v1700, %v919
        %v1717 = vadd.f32 %v1701, %v920
        %v1718 = vadd.f32 %v1702, %v921
        %v1719 = vadd.f32 %v1703, %v922
        %v1720 = vadd.f32 %v1704, %v923
        %v1721 = vadd.f32 %v1705, %v924
        %v1722 = vadd.f32 %v1706, %v925
        %v1723 = vadd.f32 %v1707, %v926
        %v1724 = vadd.f32 %v1708, %v927
        %v1725 = vadd.f32 %v1709, %v928
        %1726 = vmax.xlane.f32.xlu0 %v1710
        %v1727 = vpop.xlane.xlu0 %1726
        %1728 = vmax.xlane.f32.xlu0 %v1711
        %v1729 = vpop.xlane.xlu0 %1728
        %1730 = vmax.xlane.f32.xlu0 %v1712
        %v1731 = vpop.xlane.xlu0 %1730
        %1732 = vmax.xlane.f32.xlu0 %v1713
        %v1733 = vpop.xlane.xlu0 %1732
        %1734 = vmax.xlane.f32.xlu0 %v1714
        %v1735 = vpop.xlane.xlu0 %1734
        %1736 = vmax.xlane.f32.xlu0 %v1715
        %v1737 = vpop.xlane.xlu0 %1736
        %1738 = vmax.xlane.f32.xlu0 %v1716
        %v1739 = vpop.xlane.xlu0 %1738
        %1740 = vmax.xlane.f32.xlu0 %v1717
        %v1741 = vpop.xlane.xlu0 %1740
        %1742 = vmax.xlane.f32.xlu0 %v1718
        %v1743 = vpop.xlane.xlu0 %1742
        %1744 = vmax.xlane.f32.xlu0 %v1719
        %v1745 = vpop.xlane.xlu0 %1744
        %1746 = vmax.xlane.f32.xlu0 %v1720
        %v1747 = vpop.xlane.xlu0 %1746
        %1748 = vmax.xlane.f32.xlu0 %v1721
        %v1749 = vpop.xlane.xlu0 %1748
        %1750 = vmax.xlane.f32.xlu0 %v1722
        %v1751 = vpop.xlane.xlu0 %1750
        %1752 = vmax.xlane.f32.xlu0 %v1723
        %v1753 = vpop.xlane.xlu0 %1752
        %1754 = vmax.xlane.f32.xlu0 %v1724
        %v1755 = vpop.xlane.xlu0 %1754
        %1756 = vmax.xlane.f32.xlu0 %v1725
        %v1757 = vpop.xlane.xlu0 %1756
        %v1758 = vsub.f32 %v1710, %v1727
        %v1759 = vsub.f32 %v1711, %v1729
        %v1760 = vsub.f32 %v1712, %v1731
        %v1761 = vsub.f32 %v1713, %v1733
        %v1762 = vsub.f32 %v1714, %v1735
        %v1763 = vsub.f32 %v1715, %v1737
        %v1764 = vsub.f32 %v1716, %v1739
        %v1765 = vsub.f32 %v1717, %v1741
        %v1766 = vsub.f32 %v1718, %v1743
        %v1767 = vsub.f32 %v1719, %v1745
        %v1768 = vsub.f32 %v1720, %v1747
        %v1769 = vsub.f32 %v1721, %v1749
        %v1770 = vsub.f32 %v1722, %v1751
        %v1771 = vsub.f32 %v1723, %v1753
        %v1772 = vsub.f32 %v1724, %v1755
        %v1773 = vsub.f32 %v1725, %v1757
        %v1774 = vmul.f32 %v1758, 1.442695
        %v1775 = vpow.pop %v1774
        %v1776 = vmul.f32 %v1759, 1.442695
        %v1777 = vpow.pop %v1776
        %v1778 = vmul.f32 %v1760, 1.442695
        %v1779 = vpow.pop %v1778
        %v1780 = vmul.f32 %v1761, 1.442695
        %v1781 = vpow.pop %v1780
        %v1782 = vmul.f32 %v1762, 1.442695
        %v1783 = vpow.pop %v1782
        %v1784 = vmul.f32 %v1763, 1.442695
        %v1785 = vpow.pop %v1784
        %v1786 = vmul.f32 %v1764, 1.442695
        %v1787 = vpow.pop %v1786
        %v1788 = vmul.f32 %v1765, 1.442695
        %v1789 = vpow.pop %v1788
        %v1790 = vmul.f32 %v1766, 1.442695
        %v1791 = vpow.pop %v1790
        %v1792 = vmul.f32 %v1767, 1.442695
        %v1793 = vpow.pop %v1792
        %v1794 = vmul.f32 %v1768, 1.442695
        %v1795 = vpow.pop %v1794
        %v1796 = vmul.f32 %v1769, 1.442695
        %v1797 = vpow.pop %v1796
        %v1798 = vmul.f32 %v1770, 1.442695
        %v1799 = vpow.pop %v1798
        %v1800 = vmul.f32 %v1771, 1.442695
        %v1801 = vpow.pop %v1800
        %v1802 = vmul.f32 %v1772, 1.442695
        %v1803 = vpow.pop %v1802
        %v1804 = vmul.f32 %v1773, 1.442695
        %v1805 = vpow.pop %v1804
        %1806 = vadd.xlane.f32.xlu0 %v1775
        %v1807 = vpop.xlane.xlu0 %1806
        %1808 = vadd.xlane.f32.xlu0 %v1777
        %v1809 = vpop.xlane.xlu0 %1808
        %1810 = vadd.xlane.f32.xlu0 %v1779
        %v1811 = vpop.xlane.xlu0 %1810
        %1812 = vadd.xlane.f32.xlu0 %v1781
        %v1813 = vpop.xlane.xlu0 %1812
        %1814 = vadd.xlane.f32.xlu0 %v1783
        %v1815 = vpop.xlane.xlu0 %1814
        %1816 = vadd.xlane.f32.xlu0 %v1785
        %v1817 = vpop.xlane.xlu0 %1816
        %1818 = vadd.xlane.f32.xlu0 %v1787
        %v1819 = vpop.xlane.xlu0 %1818
        %1820 = vadd.xlane.f32.xlu0 %v1789
        %v1821 = vpop.xlane.xlu0 %1820
        %1822 = vadd.xlane.f32.xlu0 %v1791
        %v1823 = vpop.xlane.xlu0 %1822
        %1824 = vadd.xlane.f32.xlu0 %v1793
        %v1825 = vpop.xlane.xlu0 %1824
        %1826 = vadd.xlane.f32.xlu0 %v1795
        %v1827 = vpop.xlane.xlu0 %1826
        %1828 = vadd.xlane.f32.xlu0 %v1797
        %v1829 = vpop.xlane.xlu0 %1828
        %1830 = vadd.xlane.f32.xlu0 %v1799
        %v1831 = vpop.xlane.xlu0 %1830
        %1832 = vadd.xlane.f32.xlu0 %v1801
        %v1833 = vpop.xlane.xlu0 %1832
        %1834 = vadd.xlane.f32.xlu0 %v1803
        %v1835 = vpop.xlane.xlu0 %1834
        %1836 = vadd.xlane.f32.xlu0 %v1805
        %v1837 = vpop.xlane.xlu0 %1836
        %v1838 = vrcp.pop %v1807
        %v1839 = vrcp.pop %v1809
        %v1840 = vrcp.pop %v1811
        %v1841 = vrcp.pop %v1813
        %v1842 = vrcp.pop %v1815
        %v1843 = vrcp.pop %v1817
        %v1844 = vrcp.pop %v1819
        %v1845 = vrcp.pop %v1821
        %v1846 = vrcp.pop %v1823
        %v1847 = vrcp.pop %v1825
        %v1848 = vrcp.pop %v1827
        %v1849 = vrcp.pop %v1829
        %v1850 = vrcp.pop %v1831
        %v1851 = vrcp.pop %v1833
        %v1852 = vrcp.pop %v1835
        %v1853 = vrcp.pop %v1837
        %v1854 = vmul.f32 %v1775, %v1838
        %v1855 = vmul.f32 %v1777, %v1839
        %v1856 = vmul.f32 %v1779, %v1840
        %v1857 = vmul.f32 %v1781, %v1841
        %v1858 = vmul.f32 %v1783, %v1842
        %v1859 = vmul.f32 %v1785, %v1843
        %v1860 = vmul.f32 %v1787, %v1844
        %v1861 = vmul.f32 %v1789, %v1845
        %v1862 = vmul.f32 %v1791, %v1846
        %v1863 = vmul.f32 %v1793, %v1847
        %v1864 = vmul.f32 %v1795, %v1848
        %v1865 = vmul.f32 %v1797, %v1849
        %v1866 = vmul.f32 %v1799, %v1850
        %v1867 = vmul.f32 %v1801, %v1851
        %v1868 = vmul.f32 %v1803, %v1852
        %v1869 = vmul.f32 %v1805, %v1853
        %v1870 = vpack.c.bf16 %v1855, %v1854
        %v1871 = vpack.c.bf16 %v1857, %v1856
        %v1872 = vpack.c.bf16 %v1859, %v1858
        %v1873 = vpack.c.bf16 %v1861, %v1860
        %v1874 = vpack.c.bf16 %v1863, %v1862
        %v1875 = vpack.c.bf16 %v1865, %v1864
        %v1876 = vpack.c.bf16 %v1867, %v1866
        %v1877 = vpack.c.bf16 %v1869, %v1868
        %1878 = vmatprep.subr.bf16.mxu0 0
        %1879 = vmatpush1.bf16.msra.mxu0 %v1474
        %1880 = vmatprep.subr.bf16.mxu0 0
        %1881 = vmatpush1.bf16.msra.mxu0 %v1475
        %1882 = vmatprep.subr.bf16.mxu0 0
        %1883 = vmatpush1.bf16.msra.mxu0 %v1476
        %1884 = vmatprep.subr.bf16.mxu0 0
        %1885 = vmatpush1.bf16.msra.mxu0 %v1477
        %1886 = vmatprep.subr.bf16.mxu0 0
        %1887 = vmatpush1.bf16.msra.mxu0 %v1478
        %1888 = vmatprep.subr.bf16.mxu0 0
        %1889 = vmatpush1.bf16.msra.mxu0 %v1479
        %1890 = vmatprep.subr.bf16.mxu0 0
        %1891 = vmatpush1.bf16.msra.mxu0 %v1480
        %1892 = vmatprep.subr.bf16.mxu0 0
        %1893 = vmatpush1.bf16.msra.mxu0 %v1481
        %1894 = vmatprep.subr.bf16.mxu0 0
        %1895 = vmatpush1.bf16.msra.mxu0 0
        %1896 = vmatprep.subr.bf16.mxu0 0
        %1897 = vmatpush1.bf16.msra.mxu0 0
        %1898 = vmatprep.subr.bf16.mxu0 0
        %1899 = vmatpush1.bf16.msra.mxu0 0
        %1900 = vmatprep.subr.bf16.mxu0 0
        %1901 = vmatpush1.bf16.msra.mxu0 0
        %1902 = vmatprep.subr.bf16.mxu0 0
        %1903 = vmatpush1.bf16.msra.mxu0 0
        %1904 = vmatprep.subr.bf16.mxu0 0
        %1905 = vmatpush1.bf16.msra.mxu0 0
        %1906 = vmatprep.subr.bf16.mxu0 0
        %1907 = vmatpush1.bf16.msra.mxu0 0
        %1908 = vmatprep.subr.bf16.mxu0 0
        %1909 = vmatpush1.bf16.msra.mxu0 0
        %1910 = vmatprep.mubr.bf16.mxu0 0
        %1911 = vmatmul.mubr.bf16.gmra.mrb[0].mxu0 %v1870
        %v1912 = vpop.f32.mrb[0].mxu0
        %v1913 = vadd.f32 0.0, %v1912
        %v1914 = vpop.f32.mrb[0].mxu0
        %v1915 = vpop.f32.mrb[0].mxu0
        %v1916 = vadd.f32 0.0, %v1915
        %v1917 = vpop.f32.mrb[0].mxu0
        %1918 = vmatprep.mubr.bf16.mxu0 0
        %1919 = vmatmul.mubr.bf16.gmra.mrb[0].mxu0 %v1871
        %v1920 = vpop.f32.mrb[0].mxu0
        %v1921 = vadd.f32 0.0, %v1920
        %v1922 = vpop.f32.mrb[0].mxu0
        %v1923 = vpop.f32.mrb[0].mxu0
        %v1924 = vadd.f32 0.0, %v1923
        %v1925 = vpop.f32.mrb[0].mxu0
        %1926 = vmatprep.mubr.bf16.mxu0 0
        %1927 = vmatmul.mubr.bf16.gmra.mrb[0].mxu0 %v1872
        %v1928 = vpop.f32.mrb[0].mxu0
        %v1929 = vadd.f32 0.0, %v1928
        %v1930 = vpop.f32.mrb[0].mxu0
        %v1931 = vpop.f32.mrb[0].mxu0
        %v1932 = vadd.f32 0.0, %v1931
        %v1933 = vpop.f32.mrb[0].mxu0
        %1934 = vmatprep.mubr.bf16.mxu0 0
        %1935 = vmatmul.mubr.bf16.gmra.mrb[0].mxu0 %v1873
        %v1936 = vpop.f32.mrb[0].mxu0
        %v1937 = vadd.f32 0.0, %v1936
        %v1938 = vpop.f32.mrb[0].mxu0
        %v1939 = vpop.f32.mrb[0].mxu0
        %v1940 = vadd.f32 0.0, %v1939
        %v1941 = vpop.f32.mrb[0].mxu0
        %1942 = vmatprep.mubr.bf16.mxu0 0
        %1943 = vmatmul.mubr.bf16.gmra.mrb[0].mxu0 %v1874
        %v1944 = vpop.f32.mrb[0].mxu0
        %v1945 = vadd.f32 0.0, %v1944
        %v1946 = vpop.f32.mrb[0].mxu0
        %v1947 = vpop.f32.mrb[0].mxu0
        %v1948 = vadd.f32 0.0, %v1947
        %v1949 = vpop.f32.mrb[0].mxu0
        %1950 = vmatprep.mubr.bf16.mxu0 0
        %1951 = vmatmul.mubr.bf16.gmra.mrb[0].mxu0 %v1875
        %v1952 = vpop.f32.mrb[0].mxu0
        %v1953 = vadd.f32 0.0, %v1952
        %v1954 = vpop.f32.mrb[0].mxu0
        %v1955 = vpop.f32.mrb[0].mxu0
        %v1956 = vadd.f32 0.0, %v1955
        %v1957 = vpop.f32.mrb[0].mxu0
        %1958 = vmatprep.mubr.bf16.mxu0 0
        %1959 = vmatmul.mubr.bf16.gmra.mrb[0].mxu0 %v1876
        %v1960 = vpop.f32.mrb[0].mxu0
        %v1961 = vadd.f32 0.0, %v1960
        %v1962 = vpop.f32.mrb[0].mxu0
        %v1963 = vpop.f32.mrb[0].mxu0
        %v1964 = vadd.f32 0.0, %v1963
        %v1965 = vpop.f32.mrb[0].mxu0
        %1966 = vmatprep.mubr.bf16.mxu0 0
        %1967 = vmatmul.mubr.bf16.gmra.mrb[0].mxu0 %v1877
        %v1968 = vpop.f32.mrb[0].mxu0
        %v1969 = vadd.f32 0.0, %v1968
        %v1970 = vpop.f32.mrb[0].mxu0
        %v1971 = vpop.f32.mrb[0].mxu0
        %v1972 = vadd.f32 0.0, %v1971
        %v1973 = vpop.f32.mrb[0].mxu0
        %1974 = vdwg.mxu0
        %s1975 = scalar_lea.vmem %s4, 1
        %v1976 = vld [vmem:[%s1975] sm:$0x1]
        %v1978 = vlaneseq
        %v1979 = vshrl.u32 %v1978, 7
        %v1980 = vsub.s32 0, %v1979
        %v1981 = vrot.slane %v1976, %v1980
        %v1983 = vmul.f32 %v1913, %v1981
        %v1984 = vmul.f32 %v1916, %v1981
        %v1985 = vmul.f32 %v1921, %v1981
        %v1986 = vmul.f32 %v1924, %v1981
        %v1987 = vmul.f32 %v1929, %v1981
        %v1988 = vmul.f32 %v1932, %v1981
        %v1989 = vmul.f32 %v1937, %v1981
        %v1990 = vmul.f32 %v1940, %v1981
        %v1991 = vmul.f32 %v1945, %v1981
        %v1992 = vmul.f32 %v1948, %v1981
        %v1993 = vmul.f32 %v1953, %v1981
        %v1994 = vmul.f32 %v1956, %v1981
        %v1995 = vmul.f32 %v1961, %v1981
        %v1996 = vmul.f32 %v1964, %v1981
        %v1997 = vmul.f32 %v1969, %v1981
        %v1998 = vmul.f32 %v1972, %v1981
        %s1999 = scalar_lea.vmem %s5, 1
        %v2000 = vld [vmem:[%s1999] sm:$0x1]
        %v2002 = vlaneseq
        %v2003 = vshrl.u32 %v2002, 7
        %v2004 = vsub.s32 0, %v2003
        %v2005 = vrot.slane %v2000, %v2004
        %v2007 = vadd.f32 %v1983, %v2005
        %v2008 = vadd.f32 %v1984, %v2005
        %v2009 = vadd.f32 %v1985, %v2005
        %v2010 = vadd.f32 %v1986, %v2005
        %v2011 = vadd.f32 %v1987, %v2005
        %v2012 = vadd.f32 %v1988, %v2005
        %v2013 = vadd.f32 %v1989, %v2005
        %v2014 = vadd.f32 %v1990, %v2005
        %v2015 = vadd.f32 %v1991, %v2005
        %v2016 = vadd.f32 %v1992, %v2005
        %v2017 = vadd.f32 %v1993, %v2005
        %v2018 = vadd.f32 %v1994, %v2005
        %v2019 = vadd.f32 %v1995, %v2005
        %v2020 = vadd.f32 %v1996, %v2005
        %v2021 = vadd.f32 %v1997, %v2005
        %v2022 = vadd.f32 %v1998, %v2005
        %v2023 = vmax.f32 %v2007, 0.0
        %v2024 = vmax.f32 %v2008, 0.0
        %v2025 = vmax.f32 %v2009, 0.0
        %v2026 = vmax.f32 %v2010, 0.0
        %v2027 = vmax.f32 %v2011, 0.0
        %v2028 = vmax.f32 %v2012, 0.0
        %v2029 = vmax.f32 %v2013, 0.0
        %v2030 = vmax.f32 %v2014, 0.0
        %v2031 = vmax.f32 %v2015, 0.0
        %v2032 = vmax.f32 %v2016, 0.0
        %v2033 = vmax.f32 %v2017, 0.0
        %v2034 = vmax.f32 %v2018, 0.0
        %v2035 = vmax.f32 %v2019, 0.0
        %v2036 = vmax.f32 %v2020, 0.0
        %v2037 = vmax.f32 %v2021, 0.0
        %v2038 = vmax.f32 %v2022, 0.0
        %v2039 = vpack.c.bf16 %v2024, %v2023
        %v2040 = vpack.c.bf16 %v2026, %v2025
        %v2041 = vpack.c.bf16 %v2028, %v2027
        %v2042 = vpack.c.bf16 %v2030, %v2029
        %v2043 = vpack.c.bf16 %v2032, %v2031
        %v2044 = vpack.c.bf16 %v2034, %v2033
        %v2045 = vpack.c.bf16 %v2036, %v2035
        %v2046 = vpack.c.bf16 %v2038, %v2037
        %s2047 = scalar_lea.vmem [#allocation8], 256
        %v2048 = vld [vmem:[%s2047] sm:$0xff]
        %v2049 = vld [vmem:[%s2047 + $0x8] sm:$0xff]
        %v2050 = vld [vmem:[%s2047 + $0x10] sm:$0xff]
        %v2051 = vld [vmem:[%s2047 + $0x18] sm:$0xff]
        %v2052 = vld [vmem:[%s2047 + $0x20] sm:$0xff]
        %v2053 = vld [vmem:[%s2047 + $0x28] sm:$0xff]
        %v2054 = vld [vmem:[%s2047 + $0x30] sm:$0xff]
        %v2055 = vld [vmem:[%s2047 + $0x38] sm:$0xff]
        %v2056 = vld [vmem:[%s2047 + $0x40] sm:$0xff]
        %v2057 = vld [vmem:[%s2047 + $0x48] sm:$0xff]
        %v2058 = vld [vmem:[%s2047 + $0x50] sm:$0xff]
        %v2059 = vld [vmem:[%s2047 + $0x58] sm:$0xff]
        %v2060 = vld [vmem:[%s2047 + $0x60] sm:$0xff]
        %v2061 = vld [vmem:[%s2047 + $0x68] sm:$0xff]
        %v2062 = vld [vmem:[%s2047 + $0x70] sm:$0xff]
        %v2063 = vld [vmem:[%s2047 + $0x78] sm:$0xff]
        %v2080 = vunpack.c.l.b16 %v2048
        %v2081 = vunpack.c.h.b16 %v2048
        %v2082 = vunpack.c.l.b16 %v2049
        %v2083 = vunpack.c.h.b16 %v2049
        %v2084 = vunpack.c.l.b16 %v2050
        %v2085 = vunpack.c.h.b16 %v2050
        %v2086 = vunpack.c.l.b16 %v2051
        %v2087 = vunpack.c.h.b16 %v2051
        %v2088 = vunpack.c.l.b16 %v2052
        %v2089 = vunpack.c.h.b16 %v2052
        %v2090 = vunpack.c.l.b16 %v2053
        %v2091 = vunpack.c.h.b16 %v2053
        %v2092 = vunpack.c.l.b16 %v2054
        %v2093 = vunpack.c.h.b16 %v2054
        %v2094 = vunpack.c.l.b16 %v2055
        %v2095 = vunpack.c.h.b16 %v2055
        %v2096 = vunpack.c.l.b16 %v2056
        %v2097 = vunpack.c.h.b16 %v2056
        %v2098 = vunpack.c.l.b16 %v2057
        %v2099 = vunpack.c.h.b16 %v2057
        %v2100 = vunpack.c.l.b16 %v2058
        %v2101 = vunpack.c.h.b16 %v2058
        %v2102 = vunpack.c.l.b16 %v2059
        %v2103 = vunpack.c.h.b16 %v2059
        %v2104 = vunpack.c.l.b16 %v2060
        %v2105 = vunpack.c.h.b16 %v2060
        %v2106 = vunpack.c.l.b16 %v2061
        %v2107 = vunpack.c.h.b16 %v2061
        %v2108 = vunpack.c.l.b16 %v2062
        %v2109 = vunpack.c.h.b16 %v2062
        %v2110 = vunpack.c.l.b16 %v2063
        %v2111 = vunpack.c.h.b16 %v2063
        %v2112 = vpack.c.b16 %v2082, %v2080
        %v2113 = vpack.c.b16 %v2083, %v2081
        %v2114 = vpack.c.b16 %v2086, %v2084
        %v2115 = vpack.c.b16 %v2087, %v2085
        %v2116 = vpack.c.b16 %v2090, %v2088
        %v2117 = vpack.c.b16 %v2091, %v2089
        %v2118 = vpack.c.b16 %v2094, %v2092
        %v2119 = vpack.c.b16 %v2095, %v2093
        %v2120 = vpack.c.b16 %v2098, %v2096
        %v2121 = vpack.c.b16 %v2099, %v2097
        %v2122 = vpack.c.b16 %v2102, %v2100
        %v2123 = vpack.c.b16 %v2103, %v2101
        %v2124 = vpack.c.b16 %v2106, %v2104
        %v2125 = vpack.c.b16 %v2107, %v2105
        %v2126 = vpack.c.b16 %v2110, %v2108
        %v2127 = vpack.c.b16 %v2111, %v2109
        %2144 = vmatprep.subr.bf16.mxu0 %v2113
        %2145 = vmatpush1.bf16.msra.mxu0 %v2112
        %2146 = vmatprep.subr.bf16.mxu0 %v2115
        %2147 = vmatpush1.bf16.msra.mxu0 %v2114
        %2148 = vmatprep.subr.bf16.mxu0 %v2117
        %2149 = vmatpush1.bf16.msra.mxu0 %v2116
        %2150 = vmatprep.subr.bf16.mxu0 %v2119
        %2151 = vmatpush1.bf16.msra.mxu0 %v2118
        %2152 = vmatprep.subr.bf16.mxu0 %v2121
        %2153 = vmatpush1.bf16.msra.mxu0 %v2120
        %2154 = vmatprep.subr.bf16.mxu0 %v2123
        %2155 = vmatpush1.bf16.msra.mxu0 %v2122
        %2156 = vmatprep.subr.bf16.mxu0 %v2125
        %2157 = vmatpush1.bf16.msra.mxu0 %v2124
        %2158 = vmatprep.subr.bf16.mxu0 %v2127
        %2159 = vmatpush1.bf16.msra.mxu0 %v2126
        %2160 = vmatprep.subr.bf16.mxu0 0
        %2161 = vmatpush1.bf16.msra.mxu0 0
        %2162 = vmatprep.subr.bf16.mxu0 0
        %2163 = vmatpush1.bf16.msra.mxu0 0
        %2164 = vmatprep.subr.bf16.mxu0 0
        %2165 = vmatpush1.bf16.msra.mxu0 0
        %2166 = vmatprep.subr.bf16.mxu0 0
        %2167 = vmatpush1.bf16.msra.mxu0 0
        %2168 = vmatprep.subr.bf16.mxu0 0
        %2169 = vmatpush1.bf16.msra.mxu0 0
        %2170 = vmatprep.subr.bf16.mxu0 0
        %2171 = vmatpush1.bf16.msra.mxu0 0
        %2172 = vmatprep.subr.bf16.mxu0 0
        %2173 = vmatpush1.bf16.msra.mxu0 0
        %2174 = vmatprep.subr.bf16.mxu0 0
        %2175 = vmatpush1.bf16.msra.mxu0 0
        %2176 = vmatprep.mubr.bf16.mxu0 0
        %2177 = vmatmul.mubr.bf16.gmra.mrb[0].mxu0 %v2039
        %v2178 = vpop.f32.mrb[0].mxu0
        %v2179 = vadd.f32 0.0, %v2178
        %v2180 = vpop.f32.mrb[0].mxu0
        %v2181 = vadd.f32 0.0, %v2180
        %v2182 = vpop.f32.mrb[0].mxu0
        %v2183 = vadd.f32 0.0, %v2182
        %v2184 = vpop.f32.mrb[0].mxu0
        %v2185 = vadd.f32 0.0, %v2184
        %2186 = vmatprep.mubr.bf16.mxu0 0
        %2187 = vmatmul.mubr.bf16.gmra.mrb[0].mxu0 %v2040
        %v2188 = vpop.f32.mrb[0].mxu0
        %v2189 = vadd.f32 0.0, %v2188
        %v2190 = vpop.f32.mrb[0].mxu0
        %v2191 = vadd.f32 0.0, %v2190
        %v2192 = vpop.f32.mrb[0].mxu0
        %v2193 = vadd.f32 0.0, %v2192
        %v2194 = vpop.f32.mrb[0].mxu0
        %v2195 = vadd.f32 0.0, %v2194
        %2196 = vmatprep.mubr.bf16.mxu0 0
        %2197 = vmatmul.mubr.bf16.gmra.mrb[0].mxu0 %v2041
        %v2198 = vpop.f32.mrb[0].mxu0
        %v2199 = vadd.f32 0.0, %v2198
        %v2200 = vpop.f32.mrb[0].mxu0
        %v2201 = vadd.f32 0.0, %v2200
        %v2202 = vpop.f32.mrb[0].mxu0
        %v2203 = vadd.f32 0.0, %v2202
        %v2204 = vpop.f32.mrb[0].mxu0
        %v2205 = vadd.f32 0.0, %v2204
        %2206 = vmatprep.mubr.bf16.mxu0 0
        %2207 = vmatmul.mubr.bf16.gmra.mrb[0].mxu0 %v2042
        %v2208 = vpop.f32.mrb[0].mxu0
        %v2209 = vadd.f32 0.0, %v2208
        %v2210 = vpop.f32.mrb[0].mxu0
        %v2211 = vadd.f32 0.0, %v2210
        %v2212 = vpop.f32.mrb[0].mxu0
        %v2213 = vadd.f32 0.0, %v2212
        %v2214 = vpop.f32.mrb[0].mxu0
        %v2215 = vadd.f32 0.0, %v2214
        %2216 = vmatprep.mubr.bf16.mxu0 0
        %2217 = vmatmul.mubr.bf16.gmra.mrb[0].mxu0 %v2043
        %v2218 = vpop.f32.mrb[0].mxu0
        %v2219 = vadd.f32 0.0, %v2218
        %v2220 = vpop.f32.mrb[0].mxu0
        %v2221 = vadd.f32 0.0, %v2220
        %v2222 = vpop.f32.mrb[0].mxu0
        %v2223 = vadd.f32 0.0, %v2222
        %v2224 = vpop.f32.mrb[0].mxu0
        %v2225 = vadd.f32 0.0, %v2224
        %2226 = vmatprep.mubr.bf16.mxu0 0
        %2227 = vmatmul.mubr.bf16.gmra.mrb[0].mxu0 %v2044
        %v2228 = vpop.f32.mrb[0].mxu0
        %v2229 = vadd.f32 0.0, %v2228
        %v2230 = vpop.f32.mrb[0].mxu0
        %v2231 = vadd.f32 0.0, %v2230
        %v2232 = vpop.f32.mrb[0].mxu0
        %v2233 = vadd.f32 0.0, %v2232
        %v2234 = vpop.f32.mrb[0].mxu0
        %v2235 = vadd.f32 0.0, %v2234
        %2236 = vmatprep.mubr.bf16.mxu0 0
        %2237 = vmatmul.mubr.bf16.gmra.mrb[0].mxu0 %v2045
        %v2238 = vpop.f32.mrb[0].mxu0
        %v2239 = vadd.f32 0.0, %v2238
        %v2240 = vpop.f32.mrb[0].mxu0
        %v2241 = vadd.f32 0.0, %v2240
        %v2242 = vpop.f32.mrb[0].mxu0
        %v2243 = vadd.f32 0.0, %v2242
        %v2244 = vpop.f32.mrb[0].mxu0
        %v2245 = vadd.f32 0.0, %v2244
        %2246 = vmatprep.mubr.bf16.mxu0 0
        %2247 = vmatmul.mubr.bf16.gmra.mrb[0].mxu0 %v2046
        %v2248 = vpop.f32.mrb[0].mxu0
        %v2249 = vadd.f32 0.0, %v2248
        %v2250 = vpop.f32.mrb[0].mxu0
        %v2251 = vadd.f32 0.0, %v2250
        %v2252 = vpop.f32.mrb[0].mxu0
        %v2253 = vadd.f32 0.0, %v2252
        %v2254 = vpop.f32.mrb[0].mxu0
        %v2255 = vadd.f32 0.0, %v2254
        %2256 = vdwg.mxu0
        %v2257 = vpack.c.bf16 %v2183, %v2179
        %v2258 = vpack.c.bf16 %v2193, %v2189
        %v2259 = vpack.c.bf16 %v2203, %v2199
        %v2260 = vpack.c.bf16 %v2213, %v2209
        %v2261 = vpack.c.bf16 %v2223, %v2219
        %v2262 = vpack.c.bf16 %v2233, %v2229
        %v2263 = vpack.c.bf16 %v2243, %v2239
        %v2264 = vpack.c.bf16 %v2253, %v2249
        %2281 = vrot.lane.b32.xlu0 %v2181, 127
        %v2282 = vpop.permute.xlu0 %2281
        %2283 = vrot.lane.b32.xlu0 %v2185, 127
        %v2284 = vpop.permute.xlu0 %2283
        %2285 = vrot.lane.b32.xlu0 %v2191, 127
        %v2286 = vpop.permute.xlu0 %2285
        %2287 = vrot.lane.b32.xlu0 %v2195, 127
        %v2288 = vpop.permute.xlu0 %2287
        %2289 = vrot.lane.b32.xlu0 %v2201, 127
        %v2290 = vpop.permute.xlu0 %2289
        %2291 = vrot.lane.b32.xlu0 %v2205, 127
        %v2292 = vpop.permute.xlu0 %2291
        %2293 = vrot.lane.b32.xlu0 %v2211, 127
        %v2294 = vpop.permute.xlu0 %2293
        %2295 = vrot.lane.b32.xlu0 %v2215, 127
        %v2296 = vpop.permute.xlu0 %2295
        %2297 = vrot.lane.b32.xlu0 %v2221, 127
        %v2298 = vpop.permute.xlu0 %2297
        %2299 = vrot.lane.b32.xlu0 %v2225, 127
        %v2300 = vpop.permute.xlu0 %2299
        %2301 = vrot.lane.b32.xlu0 %v2231, 127
        %v2302 = vpop.permute.xlu0 %2301
        %2303 = vrot.lane.b32.xlu0 %v2235, 127
        %v2304 = vpop.permute.xlu0 %2303
        %2305 = vrot.lane.b32.xlu0 %v2241, 127
        %v2306 = vpop.permute.xlu0 %2305
        %2307 = vrot.lane.b32.xlu0 %v2245, 127
        %v2308 = vpop.permute.xlu0 %2307
        %2309 = vrot.lane.b32.xlu0 %v2251, 127
        %v2310 = vpop.permute.xlu0 %2309
        %2311 = vrot.lane.b32.xlu0 %v2255, 127
        %v2312 = vpop.permute.xlu0 %2311
        %2329 = vxpose.xlu0.b32.start [1/16] %v2282, 128
        %2330 = vxpose.xlu0.b32.cont [2/16] %v2284, 128
        %2331 = vxpose.xlu0.b32.cont [3/16] %v2286, 128
        %2332 = vxpose.xlu0.b32.cont [4/16] %v2288, 128
        %2333 = vxpose.xlu0.b32.cont [5/16] %v2290, 128
        %2334 = vxpose.xlu0.b32.cont [6/16] %v2292, 128
        %2335 = vxpose.xlu0.b32.cont [7/16] %v2294, 128
        %2336 = vxpose.xlu0.b32.cont [8/16] %v2296, 128
        %2337 = vxpose.xlu0.b32.cont [9/16] %v2298, 128
        %2338 = vxpose.xlu0.b32.cont [10/16] %v2300, 128
        %2339 = vxpose.xlu0.b32.cont [11/16] %v2302, 128
        %2340 = vxpose.xlu0.b32.cont [12/16] %v2304, 128
        %2341 = vxpose.xlu0.b32.cont [13/16] %v2306, 128
        %2342 = vxpose.xlu0.b32.cont [14/16] %v2308, 128
        %2343 = vxpose.xlu0.b32.cont [15/16] %v2310, 128
        %2344 = vxpose.xlu0.b32.end [16/16] %v2312, 128
        %v2345 = vpop.trf.xlu0
        %v2346 = vpop.trf.xlu0
        %v2347 = vpop.trf.xlu0
        %v2348 = vpop.trf.xlu0
        %v2349 = vpop.trf.xlu0
        %v2350 = vpop.trf.xlu0
        %v2351 = vpop.trf.xlu0
        %v2352 = vpop.trf.xlu0
        %v2353 = vpop.trf.xlu0
        %v2354 = vpop.trf.xlu0
        %v2355 = vpop.trf.xlu0
        %v2356 = vpop.trf.xlu0
        %v2357 = vpop.trf.xlu0
        %v2358 = vpop.trf.xlu0
        %v2359 = vpop.trf.xlu0
        %v2360 = vpop.trf.xlu0
        %2361 = vset.pattern.permute.xlu0 0
        %2362 = vperm.xlu0 %2361, %v2181
        %v2363 = vpop.permute.xlu0 %2362
        %2365 = vset.pattern.permute.xlu0 0
        %2366 = vperm.xlu0 %2365, %v2185
        %v2367 = vpop.permute.xlu0 %2366
        %2369 = vset.pattern.permute.xlu0 0
        %2370 = vperm.xlu0 %2369, %v2191
        %v2371 = vpop.permute.xlu0 %2370
        %2373 = vset.pattern.permute.xlu0 0
        %2374 = vperm.xlu0 %2373, %v2195
        %v2375 = vpop.permute.xlu0 %2374
        %2377 = vset.pattern.permute.xlu0 0
        %2378 = vperm.xlu0 %2377, %v2201
        %v2379 = vpop.permute.xlu0 %2378
        %2381 = vset.pattern.permute.xlu0 0
        %2382 = vperm.xlu0 %2381, %v2205
        %v2383 = vpop.permute.xlu0 %2382
        %2385 = vset.pattern.permute.xlu0 0
        %2386 = vperm.xlu0 %2385, %v2211
        %v2387 = vpop.permute.xlu0 %2386
        %2389 = vset.pattern.permute.xlu0 0
        %2390 = vperm.xlu0 %2389, %v2215
        %v2391 = vpop.permute.xlu0 %2390
        %2393 = vset.pattern.permute.xlu0 0
        %2394 = vperm.xlu0 %2393, %v2221
        %v2395 = vpop.permute.xlu0 %2394
        %2397 = vset.pattern.permute.xlu0 0
        %2398 = vperm.xlu0 %2397, %v2225
        %v2399 = vpop.permute.xlu0 %2398
        %2401 = vset.pattern.permute.xlu0 0
        %2402 = vperm.xlu0 %2401, %v2231
        %v2403 = vpop.permute.xlu0 %2402
        %2405 = vset.pattern.permute.xlu0 0
        %2406 = vperm.xlu0 %2405, %v2235
        %v2407 = vpop.permute.xlu0 %2406
        %2409 = vset.pattern.permute.xlu0 0
        %2410 = vperm.xlu0 %2409, %v2241
        %v2411 = vpop.permute.xlu0 %2410
        %2413 = vset.pattern.permute.xlu0 0
        %2414 = vperm.xlu0 %2413, %v2245
        %v2415 = vpop.permute.xlu0 %2414
        %2417 = vset.pattern.permute.xlu0 0
        %2418 = vperm.xlu0 %2417, %v2251
        %v2419 = vpop.permute.xlu0 %2418
        %2421 = vset.pattern.permute.xlu0 0
        %2422 = vperm.xlu0 %2421, %v2255
        %v2423 = vpop.permute.xlu0 %2422
        %v2425 = vlaneseq
        %v2426 = vshrl.u32 %v2425, 7
        %v2427 = vsub.s32 0, %v2426
        %v2428 = vrot.slane %v2345, %v2427
        %v2429 = vadd.f32 %v2363, %v2428
        %v2430 = vadd.f32 %v2367, %v2428
        %v2431 = vadd.f32 %v2371, %v2428
        %v2432 = vadd.f32 %v2375, %v2428
        %v2433 = vadd.f32 %v2379, %v2428
        %v2434 = vadd.f32 %v2383, %v2428
        %v2435 = vadd.f32 %v2387, %v2428
        %v2436 = vadd.f32 %v2391, %v2428
        %v2437 = vadd.f32 %v2395, %v2428
        %v2438 = vadd.f32 %v2399, %v2428
        %v2439 = vadd.f32 %v2403, %v2428
        %v2440 = vadd.f32 %v2407, %v2428
        %v2441 = vadd.f32 %v2411, %v2428
        %v2442 = vadd.f32 %v2415, %v2428
        %v2443 = vadd.f32 %v2419, %v2428
        %v2444 = vadd.f32 %v2423, %v2428
        %vm2445 = vcmp.gt.f32.partialorder %v2429, 0.0
        %vm2446 = vcmp.gt.f32.partialorder %v2430, 0.0
        %vm2447 = vcmp.gt.f32.partialorder %v2431, 0.0
        %vm2448 = vcmp.gt.f32.partialorder %v2432, 0.0
        %vm2449 = vcmp.gt.f32.partialorder %v2433, 0.0
        %vm2450 = vcmp.gt.f32.partialorder %v2434, 0.0
        %vm2451 = vcmp.gt.f32.partialorder %v2435, 0.0
        %vm2452 = vcmp.gt.f32.partialorder %v2436, 0.0
        %vm2453 = vcmp.gt.f32.partialorder %v2437, 0.0
        %vm2454 = vcmp.gt.f32.partialorder %v2438, 0.0
        %vm2455 = vcmp.gt.f32.partialorder %v2439, 0.0
        %vm2456 = vcmp.gt.f32.partialorder %v2440, 0.0
        %vm2457 = vcmp.gt.f32.partialorder %v2441, 0.0
        %vm2458 = vcmp.gt.f32.partialorder %v2442, 0.0
        %vm2459 = vcmp.gt.f32.partialorder %v2443, 0.0
        %vm2460 = vcmp.gt.f32.partialorder %v2444, 0.0
        %v2461 = vmul.f32 %v2429, 0.2
        %v2462 = vmul.f32 %v2430, 0.2
        %v2463 = vmul.f32 %v2431, 0.2
        %v2464 = vmul.f32 %v2432, 0.2
        %v2465 = vmul.f32 %v2433, 0.2
        %v2466 = vmul.f32 %v2434, 0.2
        %v2467 = vmul.f32 %v2435, 0.2
        %v2468 = vmul.f32 %v2436, 0.2
        %v2469 = vmul.f32 %v2437, 0.2
        %v2470 = vmul.f32 %v2438, 0.2
        %v2471 = vmul.f32 %v2439, 0.2
        %v2472 = vmul.f32 %v2440, 0.2
        %v2473 = vmul.f32 %v2441, 0.2
        %v2474 = vmul.f32 %v2442, 0.2
        %v2475 = vmul.f32 %v2443, 0.2
        %v2476 = vmul.f32 %v2444, 0.2
        %v2477 = vsel %vm2445, %v2429, %v2461
        %v2478 = vsel %vm2446, %v2430, %v2462
        %v2479 = vsel %vm2447, %v2431, %v2463
        %v2480 = vsel %vm2448, %v2432, %v2464
        %v2481 = vsel %vm2449, %v2433, %v2465
        %v2482 = vsel %vm2450, %v2434, %v2466
        %v2483 = vsel %vm2451, %v2435, %v2467
        %v2484 = vsel %vm2452, %v2436, %v2468
        %v2485 = vsel %vm2453, %v2437, %v2469
        %v2486 = vsel %vm2454, %v2438, %v2470
        %v2487 = vsel %vm2455, %v2439, %v2471
        %v2488 = vsel %vm2456, %v2440, %v2472
        %v2489 = vsel %vm2457, %v2441, %v2473
        %v2490 = vsel %vm2458, %v2442, %v2474
        %v2491 = vsel %vm2459, %v2443, %v2475
        %v2492 = vsel %vm2460, %v2444, %v2476
        %v2493 = vadd.f32 %v2477, %v913
        %v2494 = vadd.f32 %v2478, %v914
        %v2495 = vadd.f32 %v2479, %v915
        %v2496 = vadd.f32 %v2480, %v916
        %v2497 = vadd.f32 %v2481, %v917
        %v2498 = vadd.f32 %v2482, %v918
        %v2499 = vadd.f32 %v2483, %v919
        %v2500 = vadd.f32 %v2484, %v920
        %v2501 = vadd.f32 %v2485, %v921
        %v2502 = vadd.f32 %v2486, %v922
        %v2503 = vadd.f32 %v2487, %v923
        %v2504 = vadd.f32 %v2488, %v924
        %v2505 = vadd.f32 %v2489, %v925
        %v2506 = vadd.f32 %v2490, %v926
        %v2507 = vadd.f32 %v2491, %v927
        %v2508 = vadd.f32 %v2492, %v928
        %2509 = vmax.xlane.f32.xlu0 %v2493
        %v2510 = vpop.xlane.xlu0 %2509
        %2511 = vmax.xlane.f32.xlu0 %v2494
        %v2512 = vpop.xlane.xlu0 %2511
        %2513 = vmax.xlane.f32.xlu0 %v2495
        %v2514 = vpop.xlane.xlu0 %2513
        %2515 = vmax.xlane.f32.xlu0 %v2496
        %v2516 = vpop.xlane.xlu0 %2515
        %2517 = vmax.xlane.f32.xlu0 %v2497
        %v2518 = vpop.xlane.xlu0 %2517
        %2519 = vmax.xlane.f32.xlu0 %v2498
        %v2520 = vpop.xlane.xlu0 %2519
        %2521 = vmax.xlane.f32.xlu0 %v2499
        %v2522 = vpop.xlane.xlu0 %2521
        %2523 = vmax.xlane.f32.xlu0 %v2500
        %v2524 = vpop.xlane.xlu0 %2523
        %2525 = vmax.xlane.f32.xlu0 %v2501
        %v2526 = vpop.xlane.xlu0 %2525
        %2527 = vmax.xlane.f32.xlu0 %v2502
        %v2528 = vpop.xlane.xlu0 %2527
        %2529 = vmax.xlane.f32.xlu0 %v2503
        %v2530 = vpop.xlane.xlu0 %2529
        %2531 = vmax.xlane.f32.xlu0 %v2504
        %v2532 = vpop.xlane.xlu0 %2531
        %2533 = vmax.xlane.f32.xlu0 %v2505
        %v2534 = vpop.xlane.xlu0 %2533
        %2535 = vmax.xlane.f32.xlu0 %v2506
        %v2536 = vpop.xlane.xlu0 %2535
        %2537 = vmax.xlane.f32.xlu0 %v2507
        %v2538 = vpop.xlane.xlu0 %2537
        %2539 = vmax.xlane.f32.xlu0 %v2508
        %v2540 = vpop.xlane.xlu0 %2539
        %v2541 = vsub.f32 %v2493, %v2510
        %v2542 = vsub.f32 %v2494, %v2512
        %v2543 = vsub.f32 %v2495, %v2514
        %v2544 = vsub.f32 %v2496, %v2516
        %v2545 = vsub.f32 %v2497, %v2518
        %v2546 = vsub.f32 %v2498, %v2520
        %v2547 = vsub.f32 %v2499, %v2522
        %v2548 = vsub.f32 %v2500, %v2524
        %v2549 = vsub.f32 %v2501, %v2526
        %v2550 = vsub.f32 %v2502, %v2528
        %v2551 = vsub.f32 %v2503, %v2530
        %v2552 = vsub.f32 %v2504, %v2532
        %v2553 = vsub.f32 %v2505, %v2534
        %v2554 = vsub.f32 %v2506, %v2536
        %v2555 = vsub.f32 %v2507, %v2538
        %v2556 = vsub.f32 %v2508, %v2540
        %v2557 = vmul.f32 %v2541, 1.442695
        %v2558 = vpow.pop %v2557
        %v2559 = vmul.f32 %v2542, 1.442695
        %v2560 = vpow.pop %v2559
        %v2561 = vmul.f32 %v2543, 1.442695
        %v2562 = vpow.pop %v2561
        %v2563 = vmul.f32 %v2544, 1.442695
        %v2564 = vpow.pop %v2563
        %v2565 = vmul.f32 %v2545, 1.442695
        %v2566 = vpow.pop %v2565
        %v2567 = vmul.f32 %v2546, 1.442695
        %v2568 = vpow.pop %v2567
        %v2569 = vmul.f32 %v2547, 1.442695
        %v2570 = vpow.pop %v2569
        %v2571 = vmul.f32 %v2548, 1.442695
        %v2572 = vpow.pop %v2571
        %v2573 = vmul.f32 %v2549, 1.442695
        %v2574 = vpow.pop %v2573
        %v2575 = vmul.f32 %v2550, 1.442695
        %v2576 = vpow.pop %v2575
        %v2577 = vmul.f32 %v2551, 1.442695
        %v2578 = vpow.pop %v2577
        %v2579 = vmul.f32 %v2552, 1.442695
        %v2580 = vpow.pop %v2579
        %v2581 = vmul.f32 %v2553, 1.442695
        %v2582 = vpow.pop %v2581
        %v2583 = vmul.f32 %v2554, 1.442695
        %v2584 = vpow.pop %v2583
        %v2585 = vmul.f32 %v2555, 1.442695
        %v2586 = vpow.pop %v2585
        %v2587 = vmul.f32 %v2556, 1.442695
        %v2588 = vpow.pop %v2587
        %2589 = vadd.xlane.f32.xlu0 %v2558
        %v2590 = vpop.xlane.xlu0 %2589
        %2591 = vadd.xlane.f32.xlu0 %v2560
        %v2592 = vpop.xlane.xlu0 %2591
        %2593 = vadd.xlane.f32.xlu0 %v2562
        %v2594 = vpop.xlane.xlu0 %2593
        %2595 = vadd.xlane.f32.xlu0 %v2564
        %v2596 = vpop.xlane.xlu0 %2595
        %2597 = vadd.xlane.f32.xlu0 %v2566
        %v2598 = vpop.xlane.xlu0 %2597
        %2599 = vadd.xlane.f32.xlu0 %v2568
        %v2600 = vpop.xlane.xlu0 %2599
        %2601 = vadd.xlane.f32.xlu0 %v2570
        %v2602 = vpop.xlane.xlu0 %2601
        %2603 = vadd.xlane.f32.xlu0 %v2572
        %v2604 = vpop.xlane.xlu0 %2603
        %2605 = vadd.xlane.f32.xlu0 %v2574
        %v2606 = vpop.xlane.xlu0 %2605
        %2607 = vadd.xlane.f32.xlu0 %v2576
        %v2608 = vpop.xlane.xlu0 %2607
        %2609 = vadd.xlane.f32.xlu0 %v2578
        %v2610 = vpop.xlane.xlu0 %2609
        %2611 = vadd.xlane.f32.xlu0 %v2580
        %v2612 = vpop.xlane.xlu0 %2611
        %2613 = vadd.xlane.f32.xlu0 %v2582
        %v2614 = vpop.xlane.xlu0 %2613
        %2615 = vadd.xlane.f32.xlu0 %v2584
        %v2616 = vpop.xlane.xlu0 %2615
        %2617 = vadd.xlane.f32.xlu0 %v2586
        %v2618 = vpop.xlane.xlu0 %2617
        %2619 = vadd.xlane.f32.xlu0 %v2588
        %v2620 = vpop.xlane.xlu0 %2619
        %v2621 = vrcp.pop %v2590
        %v2622 = vrcp.pop %v2592
        %v2623 = vrcp.pop %v2594
        %v2624 = vrcp.pop %v2596
        %v2625 = vrcp.pop %v2598
        %v2626 = vrcp.pop %v2600
        %v2627 = vrcp.pop %v2602
        %v2628 = vrcp.pop %v2604
        %v2629 = vrcp.pop %v2606
        %v2630 = vrcp.pop %v2608
        %v2631 = vrcp.pop %v2610
        %v2632 = vrcp.pop %v2612
        %v2633 = vrcp.pop %v2614
        %v2634 = vrcp.pop %v2616
        %v2635 = vrcp.pop %v2618
        %v2636 = vrcp.pop %v2620
        %v2637 = vmul.f32 %v2558, %v2621
        %v2638 = vmul.f32 %v2560, %v2622
        %v2639 = vmul.f32 %v2562, %v2623
        %v2640 = vmul.f32 %v2564, %v2624
        %v2641 = vmul.f32 %v2566, %v2625
        %v2642 = vmul.f32 %v2568, %v2626
        %v2643 = vmul.f32 %v2570, %v2627
        %v2644 = vmul.f32 %v2572, %v2628
        %v2645 = vmul.f32 %v2574, %v2629
        %v2646 = vmul.f32 %v2576, %v2630
        %v2647 = vmul.f32 %v2578, %v2631
        %v2648 = vmul.f32 %v2580, %v2632
        %v2649 = vmul.f32 %v2582, %v2633
        %v2650 = vmul.f32 %v2584, %v2634
        %v2651 = vmul.f32 %v2586, %v2635
        %v2652 = vmul.f32 %v2588, %v2636
        %v2653 = vpack.c.bf16 %v2638, %v2637
        %v2654 = vpack.c.bf16 %v2640, %v2639
        %v2655 = vpack.c.bf16 %v2642, %v2641
        %v2656 = vpack.c.bf16 %v2644, %v2643
        %v2657 = vpack.c.bf16 %v2646, %v2645
        %v2658 = vpack.c.bf16 %v2648, %v2647
        %v2659 = vpack.c.bf16 %v2650, %v2649
        %v2660 = vpack.c.bf16 %v2652, %v2651
        %2661 = vmatprep.subr.bf16.mxu0 0
        %2662 = vmatpush1.bf16.msra.mxu0 %v2257
        %2663 = vmatprep.subr.bf16.mxu0 0
        %2664 = vmatpush1.bf16.msra.mxu0 %v2258
        %2665 = vmatprep.subr.bf16.mxu0 0
        %2666 = vmatpush1.bf16.msra.mxu0 %v2259
        %2667 = vmatprep.subr.bf16.mxu0 0
        %2668 = vmatpush1.bf16.msra.mxu0 %v2260
        %2669 = vmatprep.subr.bf16.mxu0 0
        %2670 = vmatpush1.bf16.msra.mxu0 %v2261
        %2671 = vmatprep.subr.bf16.mxu0 0
        %2672 = vmatpush1.bf16.msra.mxu0 %v2262
        %2673 = vmatprep.subr.bf16.mxu0 0
        %2674 = vmatpush1.bf16.msra.mxu0 %v2263
        %2675 = vmatprep.subr.bf16.mxu0 0
        %2676 = vmatpush1.bf16.msra.mxu0 %v2264
        %2677 = vmatprep.subr.bf16.mxu0 0
        %2678 = vmatpush1.bf16.msra.mxu0 0
        %2679 = vmatprep.subr.bf16.mxu0 0
        %2680 = vmatpush1.bf16.msra.mxu0 0
        %2681 = vmatprep.subr.bf16.mxu0 0
        %2682 = vmatpush1.bf16.msra.mxu0 0
        %2683 = vmatprep.subr.bf16.mxu0 0
        %2684 = vmatpush1.bf16.msra.mxu0 0
        %2685 = vmatprep.subr.bf16.mxu0 0
        %2686 = vmatpush1.bf16.msra.mxu0 0
        %2687 = vmatprep.subr.bf16.mxu0 0
        %2688 = vmatpush1.bf16.msra.mxu0 0
        %2689 = vmatprep.subr.bf16.mxu0 0
        %2690 = vmatpush1.bf16.msra.mxu0 0
        %2691 = vmatprep.subr.bf16.mxu0 0
        %2692 = vmatpush1.bf16.msra.mxu0 0
        %2693 = vmatprep.mubr.bf16.mxu0 0
        %2694 = vmatmul.mubr.bf16.gmra.mrb[0].mxu0 %v2653
        %v2695 = vpop.f32.mrb[0].mxu0
        %v2696 = vadd.f32 0.0, %v2695
        %v2697 = vpop.f32.mrb[0].mxu0
        %v2698 = vpop.f32.mrb[0].mxu0
        %v2699 = vadd.f32 0.0, %v2698
        %v2700 = vpop.f32.mrb[0].mxu0
        %2701 = vmatprep.mubr.bf16.mxu0 0
        %2702 = vmatmul.mubr.bf16.gmra.mrb[0].mxu0 %v2654
        %v2703 = vpop.f32.mrb[0].mxu0
        %v2704 = vadd.f32 0.0, %v2703
        %v2705 = vpop.f32.mrb[0].mxu0
        %v2706 = vpop.f32.mrb[0].mxu0
        %v2707 = vadd.f32 0.0, %v2706
        %v2708 = vpop.f32.mrb[0].mxu0
        %2709 = vmatprep.mubr.bf16.mxu0 0
        %2710 = vmatmul.mubr.bf16.gmra.mrb[0].mxu0 %v2655
        %v2711 = vpop.f32.mrb[0].mxu0
        %v2712 = vadd.f32 0.0, %v2711
        %v2713 = vpop.f32.mrb[0].mxu0
        %v2714 = vpop.f32.mrb[0].mxu0
        %v2715 = vadd.f32 0.0, %v2714
        %v2716 = vpop.f32.mrb[0].mxu0
        %2717 = vmatprep.mubr.bf16.mxu0 0
        %2718 = vmatmul.mubr.bf16.gmra.mrb[0].mxu0 %v2656
        %v2719 = vpop.f32.mrb[0].mxu0
        %v2720 = vadd.f32 0.0, %v2719
        %v2721 = vpop.f32.mrb[0].mxu0
        %v2722 = vpop.f32.mrb[0].mxu0
        %v2723 = vadd.f32 0.0, %v2722
        %v2724 = vpop.f32.mrb[0].mxu0
        %2725 = vmatprep.mubr.bf16.mxu0 0
        %2726 = vmatmul.mubr.bf16.gmra.mrb[0].mxu0 %v2657
        %v2727 = vpop.f32.mrb[0].mxu0
        %v2728 = vadd.f32 0.0, %v2727
        %v2729 = vpop.f32.mrb[0].mxu0
        %v2730 = vpop.f32.mrb[0].mxu0
        %v2731 = vadd.f32 0.0, %v2730
        %v2732 = vpop.f32.mrb[0].mxu0
        %2733 = vmatprep.mubr.bf16.mxu0 0
        %2734 = vmatmul.mubr.bf16.gmra.mrb[0].mxu0 %v2658
        %v2735 = vpop.f32.mrb[0].mxu0
        %v2736 = vadd.f32 0.0, %v2735
        %v2737 = vpop.f32.mrb[0].mxu0
        %v2738 = vpop.f32.mrb[0].mxu0
        %v2739 = vadd.f32 0.0, %v2738
        %v2740 = vpop.f32.mrb[0].mxu0
        %2741 = vmatprep.mubr.bf16.mxu0 0
        %2742 = vmatmul.mubr.bf16.gmra.mrb[0].mxu0 %v2659
        %v2743 = vpop.f32.mrb[0].mxu0
        %v2744 = vadd.f32 0.0, %v2743
        %v2745 = vpop.f32.mrb[0].mxu0
        %v2746 = vpop.f32.mrb[0].mxu0
        %v2747 = vadd.f32 0.0, %v2746
        %v2748 = vpop.f32.mrb[0].mxu0
        %2749 = vmatprep.mubr.bf16.mxu0 0
        %2750 = vmatmul.mubr.bf16.gmra.mrb[0].mxu0 %v2660
        %v2751 = vpop.f32.mrb[0].mxu0
        %v2752 = vadd.f32 0.0, %v2751
        %v2753 = vpop.f32.mrb[0].mxu0
        %v2754 = vpop.f32.mrb[0].mxu0
        %v2755 = vadd.f32 0.0, %v2754
        %v2756 = vpop.f32.mrb[0].mxu0
        %2757 = vdwg.mxu0
        %s2758 = scalar_lea.vmem %s4, 2
        %v2759 = vld [vmem:[%s2758] sm:$0x1]
        %v2761 = vlaneseq
        %v2762 = vshrl.u32 %v2761, 7
        %v2763 = vsub.s32 0, %v2762
        %v2764 = vrot.slane %v2759, %v2763
        %v2766 = vmul.f32 %v2696, %v2764
        %v2767 = vmul.f32 %v2699, %v2764
        %v2768 = vmul.f32 %v2704, %v2764
        %v2769 = vmul.f32 %v2707, %v2764
        %v2770 = vmul.f32 %v2712, %v2764
        %v2771 = vmul.f32 %v2715, %v2764
        %v2772 = vmul.f32 %v2720, %v2764
        %v2773 = vmul.f32 %v2723, %v2764
        %v2774 = vmul.f32 %v2728, %v2764
        %v2775 = vmul.f32 %v2731, %v2764
        %v2776 = vmul.f32 %v2736, %v2764
        %v2777 = vmul.f32 %v2739, %v2764
        %v2778 = vmul.f32 %v2744, %v2764
        %v2779 = vmul.f32 %v2747, %v2764
        %v2780 = vmul.f32 %v2752, %v2764
        %v2781 = vmul.f32 %v2755, %v2764
        %s2782 = scalar_lea.vmem %s5, 2
        %v2783 = vld [vmem:[%s2782] sm:$0x1]
        %v2785 = vlaneseq
        %v2786 = vshrl.u32 %v2785, 7
        %v2787 = vsub.s32 0, %v2786
        %v2788 = vrot.slane %v2783, %v2787
        %v2790 = vadd.f32 %v2766, %v2788
        %v2791 = vadd.f32 %v2767, %v2788
        %v2792 = vadd.f32 %v2768, %v2788
        %v2793 = vadd.f32 %v2769, %v2788
        %v2794 = vadd.f32 %v2770, %v2788
        %v2795 = vadd.f32 %v2771, %v2788
        %v2796 = vadd.f32 %v2772, %v2788
        %v2797 = vadd.f32 %v2773, %v2788
        %v2798 = vadd.f32 %v2774, %v2788
        %v2799 = vadd.f32 %v2775, %v2788
        %v2800 = vadd.f32 %v2776, %v2788
        %v2801 = vadd.f32 %v2777, %v2788
        %v2802 = vadd.f32 %v2778, %v2788
        %v2803 = vadd.f32 %v2779, %v2788
        %v2804 = vadd.f32 %v2780, %v2788
        %v2805 = vadd.f32 %v2781, %v2788
        %v2806 = vmax.f32 %v2790, 0.0
        %v2807 = vmax.f32 %v2791, 0.0
        %v2808 = vmax.f32 %v2792, 0.0
        %v2809 = vmax.f32 %v2793, 0.0
        %v2810 = vmax.f32 %v2794, 0.0
        %v2811 = vmax.f32 %v2795, 0.0
        %v2812 = vmax.f32 %v2796, 0.0
        %v2813 = vmax.f32 %v2797, 0.0
        %v2814 = vmax.f32 %v2798, 0.0
        %v2815 = vmax.f32 %v2799, 0.0
        %v2816 = vmax.f32 %v2800, 0.0
        %v2817 = vmax.f32 %v2801, 0.0
        %v2818 = vmax.f32 %v2802, 0.0
        %v2819 = vmax.f32 %v2803, 0.0
        %v2820 = vmax.f32 %v2804, 0.0
        %v2821 = vmax.f32 %v2805, 0.0
        %v2822 = vld [vmem:[%s376] sm:$0xf]
        %v2823 = vpack.c.bf16 %v2807, %v2806
        %v2824 = vpack.c.bf16 %v2809, %v2808
        %v2825 = vpack.c.bf16 %v2811, %v2810
        %v2826 = vpack.c.bf16 %v2813, %v2812
        %v2827 = vpack.c.bf16 %v2815, %v2814
        %v2828 = vpack.c.bf16 %v2817, %v2816
        %v2829 = vpack.c.bf16 %v2819, %v2818
        %v2830 = vpack.c.bf16 %v2821, %v2820
        %2831 = vmatprep.subr.bf16.mxu0 0
        %2832 = vmatpush1.bf16.msra.mxu0 %v2823
        %2833 = vmatprep.subr.bf16.mxu0 0
        %2834 = vmatpush1.bf16.msra.mxu0 %v2824
        %2835 = vmatprep.subr.bf16.mxu0 0
        %2836 = vmatpush1.bf16.msra.mxu0 %v2825
        %2837 = vmatprep.subr.bf16.mxu0 0
        %2838 = vmatpush1.bf16.msra.mxu0 %v2826
        %2839 = vmatprep.subr.bf16.mxu0 0
        %2840 = vmatpush1.bf16.msra.mxu0 %v2827
        %2841 = vmatprep.subr.bf16.mxu0 0
        %2842 = vmatpush1.bf16.msra.mxu0 %v2828
        %2843 = vmatprep.subr.bf16.mxu0 0
        %2844 = vmatpush1.bf16.msra.mxu0 %v2829
        %2845 = vmatprep.subr.bf16.mxu0 0
        %2846 = vmatpush1.bf16.msra.mxu0 %v2830
        %2847 = vmatprep.subr.bf16.mxu0 0
        %2848 = vmatpush1.bf16.msra.mxu0 0
        %2849 = vmatprep.subr.bf16.mxu0 0
        %2850 = vmatpush1.bf16.msra.mxu0 0
        %2851 = vmatprep.subr.bf16.mxu0 0
        %2852 = vmatpush1.bf16.msra.mxu0 0
        %2853 = vmatprep.subr.bf16.mxu0 0
        %2854 = vmatpush1.bf16.msra.mxu0 0
        %2855 = vmatprep.subr.bf16.mxu0 0
        %2856 = vmatpush1.bf16.msra.mxu0 0
        %2857 = vmatprep.subr.bf16.mxu0 0
        %2858 = vmatpush1.bf16.msra.mxu0 0
        %2859 = vmatprep.subr.bf16.mxu0 0
        %2860 = vmatpush1.bf16.msra.mxu0 0
        %2861 = vmatprep.subr.bf16.mxu0 0
        %2862 = vmatpush1.bf16.msra.mxu0 0
        %2863 = vmatprep.mubr.bf16.mxu0 0
        %2864 = vmatmul.mubr.bf16.gmra.mrb[0].mxu0 %v2822
        %v2865 = vpop.f32.mrb[0].mxu0
        %v2866 = vadd.f32 0.0, %v2865
        %v2867 = vpop.f32.mrb[0].mxu0
        %v2868 = vpop.f32.mrb[0].mxu0
        %v2869 = vpop.f32.mrb[0].mxu0
        %2870 = vdwg.mxu0
        %v2871 = vpack.c.bf16 %v2866, %v2866
        %v2872 = vld [vmem:[#allocation10] sm:$0xf]
        %v2873 = vld [vmem:[#allocation10 + $0x4] sm:$0xf]
        %v2874 = vld [vmem:[#allocation10 + $0x8] sm:$0xf]
        %v2875 = vld [vmem:[#allocation10 + $0xc] sm:$0xf]
        %v2876 = vld [vmem:[#allocation10 + $0x10] sm:$0xf]
        %v2877 = vld [vmem:[#allocation10 + $0x14] sm:$0xf]
        %v2878 = vld [vmem:[#allocation10 + $0x18] sm:$0xf]
        %v2879 = vld [vmem:[#allocation10 + $0x1c] sm:$0xf]
        %v2880 = vld [vmem:[#allocation10 + $0x20] sm:$0xf]
        %v2881 = vld [vmem:[#allocation10 + $0x24] sm:$0xf]
        %v2882 = vld [vmem:[#allocation10 + $0x28] sm:$0xf]
        %v2883 = vld [vmem:[#allocation10 + $0x2c] sm:$0xf]
        %v2884 = vld [vmem:[#allocation10 + $0x30] sm:$0xf]
        %v2885 = vld [vmem:[#allocation10 + $0x34] sm:$0xf]
        %v2886 = vld [vmem:[#allocation10 + $0x38] sm:$0xf]
        %v2887 = vld [vmem:[#allocation10 + $0x3c] sm:$0xf]
        %v2888 = vld [vmem:[%s7] sm:$0x1]
        %v2890 = vlaneseq
        %v2891 = vshrl.u32 %v2890, 7
        %v2892 = vsub.s32 0, %v2891
        %v2893 = vrot.slane %v2888, %v2892
        %v2911 = vunpack.c.l.b16 %v2872
        %v2912 = vunpack.c.l.b16 %v2873
        %v2913 = vunpack.c.l.b16 %v2874
        %v2914 = vunpack.c.l.b16 %v2875
        %v2915 = vunpack.c.l.b16 %v2876
        %v2916 = vunpack.c.l.b16 %v2877
        %v2917 = vunpack.c.l.b16 %v2878
        %v2918 = vunpack.c.l.b16 %v2879
        %v2919 = vunpack.c.l.b16 %v2880
        %v2920 = vunpack.c.l.b16 %v2881
        %v2921 = vunpack.c.l.b16 %v2882
        %v2922 = vunpack.c.l.b16 %v2883
        %v2923 = vunpack.c.l.b16 %v2884
        %v2924 = vunpack.c.l.b16 %v2885
        %v2925 = vunpack.c.l.b16 %v2886
        %v2926 = vunpack.c.l.b16 %v2887
        %v2927 = vpack.c.b16 %v2912, %v2911
        %v2928 = vpack.c.b16 %v2914, %v2913
        %v2929 = vpack.c.b16 %v2916, %v2915
        %v2930 = vpack.c.b16 %v2918, %v2917
        %v2931 = vpack.c.b16 %v2920, %v2919
        %v2932 = vpack.c.b16 %v2922, %v2921
        %v2933 = vpack.c.b16 %v2924, %v2923
        %v2934 = vpack.c.b16 %v2926, %v2925
        %2943 = vmatprep.subr.bf16.mxu0 0
        %2944 = vmatpush1.bf16.msra.mxu0 %v2927
        %2945 = vmatprep.subr.bf16.mxu0 0
        %2946 = vmatpush1.bf16.msra.mxu0 %v2928
        %2947 = vmatprep.subr.bf16.mxu0 0
        %2948 = vmatpush1.bf16.msra.mxu0 %v2929
        %2949 = vmatprep.subr.bf16.mxu0 0
        %2950 = vmatpush1.bf16.msra.mxu0 %v2930
        %2951 = vmatprep.subr.bf16.mxu0 0
        %2952 = vmatpush1.bf16.msra.mxu0 %v2931
        %2953 = vmatprep.subr.bf16.mxu0 0
        %2954 = vmatpush1.bf16.msra.mxu0 %v2932
        %2955 = vmatprep.subr.bf16.mxu0 0
        %2956 = vmatpush1.bf16.msra.mxu0 %v2933
        %2957 = vmatprep.subr.bf16.mxu0 0
        %2958 = vmatpush1.bf16.msra.mxu0 %v2934
        %2959 = vmatprep.subr.bf16.mxu0 0
        %2960 = vmatpush1.bf16.msra.mxu0 0
        %2961 = vmatprep.subr.bf16.mxu0 0
        %2962 = vmatpush1.bf16.msra.mxu0 0
        %2963 = vmatprep.subr.bf16.mxu0 0
        %2964 = vmatpush1.bf16.msra.mxu0 0
        %2965 = vmatprep.subr.bf16.mxu0 0
        %2966 = vmatpush1.bf16.msra.mxu0 0
        %2967 = vmatprep.subr.bf16.mxu0 0
        %2968 = vmatpush1.bf16.msra.mxu0 0
        %2969 = vmatprep.subr.bf16.mxu0 0
        %2970 = vmatpush1.bf16.msra.mxu0 0
        %2971 = vmatprep.subr.bf16.mxu0 0
        %2972 = vmatpush1.bf16.msra.mxu0 0
        %2973 = vmatprep.subr.bf16.mxu0 0
        %2974 = vmatpush1.bf16.msra.mxu0 0
        %2975 = vmatprep.mubr.bf16.mxu0 0
        %2976 = vmatmul.mubr.bf16.gmra.mrb[0].mxu0 %v2871
        %v2977 = vpop.f32.mrb[0].mxu0
        %v2978 = vadd.f32 %v2893, %v2977
        %v2979 = vpop.f32.mrb[0].mxu0
        %v2980 = vpop.f32.mrb[0].mxu0
        %v2981 = vpop.f32.mrb[0].mxu0
        %2982 = vdwg.mxu0
        %2983 = vst [vmem:[%s426] sm:$0xff] %v2978
        %s2984 = sand.u32 %s220, 1
        %s2985 = scalar_lea.sflag [#allocation4], %s2984
        %s2986 = sand.u32 %s220, 1
        %s2987 = smul.addr %s2986, 8
        %s2988 = scalar_lea.vmem [#allocation11], %s2987
        // Predicated region
        $region73: #{tpu_custom_call.1} parent=51 // pred_check
          %p2989 = pneg %p230
        $region74: #{tpu_custom_call.1} parent=51 // pred_check_branch
          %2991 = sbr.rel (%p2989) target = $region76
        $region75: #{tpu_custom_call.1} parent=51 // pred_region
          %s2993 = ssub.s32 128, 128
          %2994 = vsyncadd %s2985, %s2993
          %s2995 = smul.addr %s29, 128
          %s2996 = scalar_lea.hbm %s8, %s2995
          %s2998 = sshll.u32 %s2988, 4
          %s2999 = int_to_ptr.vmem [resolvable:$true] %s2998
          %3001 = dma.vmem_to_hbm [thread:$0]  %s2999, 128, %s2996, %s2985
        $region76: #{tpu_custom_call.1} parent=51 // pred_fallthru
          _
      $region52: #{tpu_custom_call.1} parent=5 // pred_fallthru
        _
      %p3002 = scmp.le.s32.totalorder 2, %s24
      // Predicated region
      $region77: #{tpu_custom_call.1} parent=5 // pred_check
        %p3003 = pneg %p3002
      $region78: #{tpu_custom_call.1} parent=5 // pred_check_branch
        %3005 = sbr.rel (%p3003) target = $region80
      $region79: #{tpu_custom_call.1} parent=5 // pred_region
        %s3006 = ssub.s32 %s24, 2
        // Predicated region
        $region81: #{tpu_custom_call.1} parent=79 // pred_check
          %p3007 = pneg %p236
        $region82: #{tpu_custom_call.1} parent=79 // pred_check_branch
          %3009 = sbr.rel (%p3007) target = $region84
        $region83: #{tpu_custom_call.1} parent=79 // pred_region
          %s3010 = sand.u32 %s221, 1
          %s3011 = scalar_lea.sflag [#allocation4], %s3010
          %s3012 = sand.u32 %s221, 1
          %s3013 = smul.addr %s3012, 8
          %s3014 = scalar_lea.vmem [#allocation11], %s3013
          %3015 = dma.done %s3011, 128
        $region84: #{tpu_custom_call.1} parent=79 // pred_fallthru
          _
      $region80: #{tpu_custom_call.1} parent=5 // pred_fallthru
        _
    $region6: #{tpu_custom_call.1} parent=1 // loop_footer
      %s28 = sadd.s32 1, %s24
    $region7: #{tpu_custom_call.1} parent=1 // loop_footer_branch
      %23 = sbr.rel target = $region3
    $region8: #{tpu_custom_call.1} parent=1 // loop_exit
      _
    %3016 = vsyncpa [#allocation3], 1
    %s3017 = scalar_lea.sflag [#allocation3], 1
    %3018 = vsyncpa %s3017, 1
    %3019 = vsyncpa [#allocation6], 1
    %s3020 = scalar_lea.sflag [#allocation6], 1
    %3021 = vsyncpa %s3020, 1
    %3022 = vsyncpa [#allocation9], 1
    %3023 = vsyncpa [#allocation4], 1
    %s3024 = scalar_lea.sflag [#allocation4], 1
    %3025 = vsyncpa %s3024, 1

</llo_original>
